<compile_context>
chip_gen: v5e
topology: v5e:2x2
jax: 0.10.0
libtpu: 0.0.40
codegen_flags: <defaults>
</compile_context>

<pallas_src>
import functools

import jax
import jax.numpy as jnp
from jax.experimental import pallas as pl
from jax.experimental.pallas import tpu as pltpu

_VMEM_LIMIT = 32 * 1024 * 1024


def _round_up(n, m):
    return ((n + m - 1) // m) * m


# ----------------------------------------------------------------------------
# Kernel 1: hoisted input projection  gates_x = x @ W_proj + bias.
# (BatchNorm, when present, is folded into W_proj / bias by the wrapper.)
# ----------------------------------------------------------------------------
def _proj_kernel(x_ref, w_ref, b_ref, o_ref):
    tt_block, bp, fin = x_ref.shape
    gdim = w_ref.shape[1]
    x2 = x_ref[...].reshape(tt_block * bp, fin)
    g = jnp.dot(x2, w_ref[...], preferred_element_type=jnp.float32)
    g = g + b_ref[...]
    o_ref[...] = g.reshape(tt_block, bp, gdim).astype(o_ref.dtype)


def input_projection(x_tbf, w_proj, bias, t_block):
    tp, bp, fin = x_tbf.shape
    gdim = w_proj.shape[1]
    return pl.pallas_call(
        _proj_kernel,
        out_shape=jax.ShapeDtypeStruct((tp, bp, gdim), jnp.float32),
        grid=(tp // t_block,),
        in_specs=[
            pl.BlockSpec((t_block, bp, fin), lambda t: (t, 0, 0)),
            pl.BlockSpec((fin, gdim), lambda t: (0, 0)),
            pl.BlockSpec((1, gdim), lambda t: (0, 0)),
        ],
        out_specs=pl.BlockSpec((t_block, bp, gdim), lambda t: (t, 0, 0)),
        compiler_params=pltpu.CompilerParams(
            dimension_semantics=("parallel",),
            vmem_limit_bytes=_VMEM_LIMIT),
    )(x_tbf, w_proj, bias)


# ----------------------------------------------------------------------------
# Kernel 2: LSTM recurrence (bias=False) + fused BatchNorm-statistics output.
# Only h @ W_hh + gate elementwise per step; TT timesteps per grid step;
# PyTorch gate order i, f, g, o. Outputs past each sequence's length are zeroed
# (pack/pad_packed semantics), so plain sums of the stored h equal masked sums
# -> per-feature sum / sum-sq are accumulated for the NEXT layer's BatchNorm
# without a separate pass over the activations.
# ----------------------------------------------------------------------------
def _recurrent_kernel(gx_ref, whh_ref, len_ref, o_ref, stat_ref, h_sc, c_sc):
    tb = pl.program_id(0)

    @pl.when(tb == 0)
    def _():
        h_sc[...] = jnp.zeros_like(h_sc)
        c_sc[...] = jnp.zeros_like(c_sc)
        stat_ref[...] = jnp.zeros_like(stat_ref)

    tt_block = gx_ref.shape[0]
    hidden = h_sc.shape[-1]
    lens = len_ref[...]                       # (Bp, 1) int32, loaded once

    def step(tt, carry):
        h, c, s1, s2 = carry
        gates = gx_ref[tt].astype(jnp.float32) + jnp.dot(
            h, whh_ref[...], preferred_element_type=jnp.float32)
        i = jax.nn.sigmoid(gates[:, 0 * hidden:1 * hidden])
        f = jax.nn.sigmoid(gates[:, 1 * hidden:2 * hidden])
        g = jnp.tanh(gates[:, 2 * hidden:3 * hidden])
        o = jax.nn.sigmoid(gates[:, 3 * hidden:4 * hidden])
        c = f * c + i * g
        h = o * jnp.tanh(c)
        t_global = tb * tt_block + tt
        valid = t_global < lens               # (Bp, 1) bool
        hm = jnp.where(valid, h, 0.0)
        o_ref[tt] = hm.astype(o_ref.dtype)
        s1 = s1 + jnp.sum(hm, axis=0, keepdims=True)
        s2 = s2 + jnp.sum(hm * hm, axis=0, keepdims=True)
        return h, c, s1, s2

    carry0 = (h_sc[...], c_sc[...],
              jnp.zeros((1, hidden), jnp.float32),
              jnp.zeros((1, hidden), jnp.float32))
    h, c, s1, s2 = jax.lax.fori_loop(0, tt_block, step, carry0, unroll=True)
    h_sc[...] = h
    c_sc[...] = c
    stat_ref[0:1, :] += s1
    stat_ref[1:2, :] += s2


def lstm_recurrence(gates_x, w_hh_p, lengths_p, t_block, hidden_p):
    tp, bp, gdim = gates_x.shape
    return pl.pallas_call(
        _recurrent_kernel,
        out_shape=(jax.ShapeDtypeStruct((tp, bp, hidden_p), jnp.float32),
                   jax.ShapeDtypeStruct((2, hidden_p), jnp.float32)),
        grid=(tp // t_block,),
        in_specs=[
            pl.BlockSpec((t_block, bp, gdim), lambda t: (t, 0, 0)),
            pl.BlockSpec((hidden_p, gdim), lambda t: (0, 0)),
            pl.BlockSpec((bp, 1), lambda t: (0, 0)),
        ],
        out_specs=(
            pl.BlockSpec((t_block, bp, hidden_p), lambda t: (t, 0, 0)),
            pl.BlockSpec((2, hidden_p), lambda t: (0, 0)),
        ),
        scratch_shapes=[pltpu.VMEM((bp, hidden_p), jnp.float32),
                        pltpu.VMEM((bp, hidden_p), jnp.float32)],
        compiler_params=pltpu.CompilerParams(
            dimension_semantics=("arbitrary",),
            vmem_limit_bytes=_VMEM_LIMIT),
    )(gates_x, w_hh_p, lengths_p)


# ----------------------------------------------------------------------------
# Weight padding: (in_dim, 4H) -> (in_dim_p, 4Hp) with per-gate zero padding so
# gate slices stay lane-aligned. Padded hidden units stay exactly zero.
# ----------------------------------------------------------------------------
def _pad_gate_weights(w_t, in_dim_p, hidden, hidden_p):
    in_dim = w_t.shape[0]
    out = jnp.zeros((in_dim_p, 4 * hidden_p), w_t.dtype)
    for k in range(4):
        out = out.at[:in_dim, k * hidden_p:k * hidden_p + hidden].set(
            w_t[:, k * hidden:(k + 1) * hidden])
    return out


# ----------------------------------------------------------------------------
# DeepBatchRNN forward (batch_first input; right-padded sequences assumed, as
# required by pack_padded_sequence; total_length padding preserved).
# ----------------------------------------------------------------------------
def deep_batch_rnn_forward(x_btf, lengths, layer_params, *, t_block=16,
                           param_dtype=None):
    B, T, F = x_btf.shape
    H = layer_params[0][1].shape[0]
    Bp = _round_up(B, 8)
    Fp = _round_up(F, 128)
    Hp = _round_up(H, 128)
    Tp = _round_up(T, t_block)

    x = jnp.transpose(x_btf, (1, 0, 2))                        # (T, B, F)
    x = jnp.pad(x, ((0, Tp - T), (0, Bp - B), (0, Fp - F)))
    lengths_p = jnp.pad(lengths.astype(jnp.int32), (0, Bp - B)).reshape(Bp, 1)
    count = jnp.maximum(jnp.sum(lengths).astype(jnp.float32), 1.0)

    prev_stats = None
    for li, (w_ih_t, w_hh_t) in enumerate(layer_params):
        in_dim_p = Fp if li == 0 else Hp
        w_ih_p = _pad_gate_weights(w_ih_t, in_dim_p, H, Hp)
        w_hh_p = _pad_gate_weights(w_hh_t, Hp, H, Hp)
        if param_dtype is not None:          # e.g. jnp.bfloat16 at large H
            w_ih_p = w_ih_p.astype(param_dtype)
            w_hh_p = w_hh_p.astype(param_dtype)

        if li > 0:
            # First BatchRNN layer is built with batch_norm=False. Later layers
            # BN-normalize their input using stats of the previous layer's
            # output, produced (fused) by the previous recurrence kernel.
            mean = prev_stats[0] / count
            var = jnp.maximum(prev_stats[1] / count - mean * mean, 0.0)
            rstd = jax.lax.rsqrt(var + 1e-5)
            # Fold BN (train-mode stats, gamma=1, beta=0) into the projection:
            # ((x - mean) * rstd) @ W = x @ (rstd[:, None] * W) - (mean*rstd) @ W
            w_proj = (w_ih_p.astype(jnp.float32) * rstd[:, None]).astype(w_ih_p.dtype)
            bias = -(mean * rstd)[None, :] @ w_ih_p.astype(jnp.float32)
        else:
            w_proj = w_ih_p
            bias = jnp.zeros((1, 4 * Hp), jnp.float32)

        gates_x = input_projection(x, w_proj, bias, t_block)    # (Tp, Bp, 4Hp)
        x, prev_stats = lstm_recurrence(gates_x, w_hh_p, lengths_p, t_block, Hp)

    out = x[:T, :B, :H]
    return jnp.transpose(out, (1, 0, 2))                        # (B, T, H)


# ----------------------------------------------------------------------------
# Pure-JAX reference (lax.scan, unfused BN) to validate the kernels.
# ----------------------------------------------------------------------------
def _ref_lstm(x_tbf, mask_tb1, w_ih_t, w_hh_t):
    H = w_hh_t.shape[0]
    B = x_tbf.shape[1]

    def step(carry, inp):
        h, c = carry
        x_t, m_t = inp
        gates = x_t @ w_ih_t + h @ w_hh_t
        i = jax.nn.sigmoid(gates[:, :H])
        f = jax.nn.sigmoid(gates[:, H:2 * H])
        g = jnp.tanh(gates[:, 2 * H:3 * H])
        o = jax.nn.sigmoid(gates[:, 3 * H:])
        c = f * c + i * g
        h = o * jnp.tanh(c)
        return (h, c), h * m_t

    init = (jnp.zeros((B, H), jnp.float32), jnp.zeros((B, H), jnp.float32))
    _, ys = jax.lax.scan(step, init, (x_tbf, mask_tb1))
    return ys


def _ref_bn(x_tbf, mask_tb1):
    count = jnp.sum(mask_tb1)
    mean = jnp.sum(x_tbf * mask_tb1, axis=(0, 1), keepdims=True) / count
    diff = (x_tbf - mean) * mask_tb1
    var = jnp.sum(diff * diff, axis=(0, 1), keepdims=True) / count
    return (x_tbf - mean) * jax.lax.rsqrt(var + 1e-5) * mask_tb1


def _ref_forward(x_btf, lengths, layer_params):
    T = x_btf.shape[1]
    x = jnp.transpose(x_btf, (1, 0, 2))
    mask = (jnp.arange(T)[:, None] < lengths[None, :]).astype(x.dtype)[:, :, None]
    for li, (w_ih_t, w_hh_t) in enumerate(layer_params):
        if li > 0:
            x = _ref_bn(x, mask)
        x = _ref_lstm(x, mask, w_ih_t, w_hh_t)
    return jnp.transpose(x, (1, 0, 2))


if __name__ == "__main__":
    # Small shapes consistent with the module's forward:
    # x: (batch=2, seq=10, input_size=16), lengths sorted descending.
    B, T, F, H = 2, 10, 16, 32
    NUM_LAYERS = 3

    key = jax.random.PRNGKey(0)
    kx, kp = jax.random.split(key)
    x = jax.random.normal(kx, (B, T, F), dtype=jnp.float32)
    lengths = jnp.array([10, 6], dtype=jnp.int32)

    # Deterministic parameter init mimicking nn.LSTM: U(-1/sqrt(H), 1/sqrt(H)).
    bound = 1.0 / (H ** 0.5)
    layer_params = []
    in_size = F
    for _ in range(NUM_LAYERS):
        kp, k1, k2 = jax.random.split(kp, 3)
        w_ih = jax.random.uniform(k1, (4 * H, in_size), jnp.float32, -bound, bound)
        w_hh = jax.random.uniform(k2, (4 * H, H), jnp.float32, -bound, bound)
        # store transposed for x @ W layout inside the kernels
        layer_params.append((w_ih.T, w_hh.T))
        in_size = H

    fwd = jax.jit(functools.partial(deep_batch_rnn_forward, t_block=4))
    out = fwd(x, lengths, layer_params)
    out = jax.block_until_ready(out)

    ref = jax.block_until_ready(_ref_forward(x, lengths, layer_params))
    assert out.shape == (B, T, H), out.shape
    err = float(jnp.max(jnp.abs(out - ref)))
    assert err < 1e-4, err

    print("KERNEL_OK")
</pallas_src>

<mosaic_0001>
module attributes {stable_mosaic.version = 11 : i64} {
  func.func @_proj_kernel(%arg0: i32, %arg1: memref<4x8x128xf32, #tpu.memory_space<vmem>>, %arg2: memref<128x512xf32, #tpu.memory_space<vmem>>, %arg3: memref<1x512xf32, #tpu.memory_space<vmem>>, %arg4: memref<4x8x512xf32, #tpu.memory_space<vmem>>) attributes {dimension_semantics = [#tpu.dimension_semantics<parallel>], iteration_bounds = array<i64: 3>, scalar_prefetch = 0 : i64, scratch_operands = 0 : i64, tpu.core_type = #tpu.core_type<tc>, window_params = [{transform_indices = @transform_0, window_bounds = array<i64: 4, 8, 128>}, {pipeline_mode = #tpu.pipeline_mode<synchronous>, transform_indices = @transform_1, window_bounds = array<i64: 128, 512>}, {pipeline_mode = #tpu.pipeline_mode<synchronous>, transform_indices = @transform_2, window_bounds = array<i64: 1, 512>}, {transform_indices = @transform_3, window_bounds = array<i64: 4, 8, 512>}]} {
    %c0 = arith.constant 0 : index
    %c0_0 = arith.constant 0 : index
    %c0_1 = arith.constant 0 : index
    %0 = vector.load %arg1[%c0, %c0_0, %c0_1] : memref<4x8x128xf32, #tpu.memory_space<vmem>>, vector<4x8x128xf32>
    %1 = vector.shape_cast %0 : vector<4x8x128xf32> to vector<32x128xf32>
    %c0_2 = arith.constant 0 : index
    %c0_3 = arith.constant 0 : index
    %2 = vector.load %arg2[%c0_2, %c0_3] : memref<128x512xf32, #tpu.memory_space<vmem>>, vector<128x512xf32>
    %cst = arith.constant dense<0.000000e+00> : vector<32x512xf32>
    %3 = tpu.matmul %1, %2, %cst {dimension_numbers = #tpu.dot_dimension_numbers<[1], [0], [0], [1], [0, 0, 1, 1], [], []>} : vector<32x128xf32>, vector<128x512xf32>, vector<32x512xf32> -> vector<32x512xf32>
    %c0_4 = arith.constant 0 : index
    %c0_5 = arith.constant 0 : index
    %4 = vector.load %arg3[%c0_4, %c0_5] : memref<1x512xf32, #tpu.memory_space<vmem>>, vector<1x512xf32>
    %5 = vector.broadcast %4 : vector<1x512xf32> to vector<32x512xf32>
    %6 = arith.addf %3, %5 : vector<32x512xf32>
    %7 = vector.shape_cast %6 : vector<32x512xf32> to vector<4x8x512xf32>
    %c0_6 = arith.constant 0 : index
    %c0_7 = arith.constant 0 : index
    %c0_8 = arith.constant 0 : index
    %8 = vector.load %arg4[%c0_6, %c0_7, %c0_8] : memref<4x8x512xf32, #tpu.memory_space<vmem>>, vector<4x8x512xf32>
    tpu.vector_store %arg4[%c0_6, %c0_7, %c0_8], %7 {strides = array<i32>} : memref<4x8x512xf32, #tpu.memory_space<vmem>>, vector<4x8x512xf32>,
    return
  }
  func.func @transform_0(%arg0: i32) -> (i32, i32, i32) {
    %c0_i32 = arith.constant 0 : i32
    %c0_i32_0 = arith.constant 0 : i32
    %c0_i32_1 = arith.constant 0 : i32
    return %arg0, %c0_i32, %c0_i32_0 : i32, i32, i32
  }
  func.func @transform_1(%arg0: i32) -> (i32, i32) {
    %c0_i32 = arith.constant 0 : i32
    %c0_i32_0 = arith.constant 0 : i32
    %c0_i32_1 = arith.constant 0 : i32
    return %c0_i32, %c0_i32_0 : i32, i32
  }
  func.func @transform_2(%arg0: i32) -> (i32, i32) {
    %c0_i32 = arith.constant 0 : i32
    %c0_i32_0 = arith.constant 0 : i32
    %c0_i32_1 = arith.constant 0 : i32
    return %c0_i32, %c0_i32_0 : i32, i32
  }
  func.func @transform_3(%arg0: i32) -> (i32, i32, i32) {
    %c0_i32 = arith.constant 0 : i32
    %c0_i32_0 = arith.constant 0 : i32
    %c0_i32_1 = arith.constant 0 : i32
    return %arg0, %c0_i32, %c0_i32_0 : i32, i32, i32
  }
}

module attributes {stable_mosaic.version = 11 : i64} {
  func.func @_recurrent_kernel(%arg0: i32, %arg1: memref<4x8x512xf32, #tpu.memory_space<vmem>>, %arg2: memref<128x512xf32, #tpu.memory_space<vmem>>, %arg3: memref<8x1xi32, #tpu.memory_space<vmem>>, %arg4: memref<4x8x128xf32, #tpu.memory_space<vmem>>, %arg5: memref<2x128xf32, #tpu.memory_space<vmem>>, %arg6: memref<8x128xf32, #tpu.memory_space<vmem>>, %arg7: memref<8x128xf32, #tpu.memory_space<vmem>>) attributes {dimension_semantics = [#tpu.dimension_semantics<arbitrary>], iteration_bounds = array<i64: 3>, scalar_prefetch = 0 : i64, scratch_operands = 2 : i64, tpu.core_type = #tpu.core_type<tc>, window_params = [{transform_indices = @transform_0, window_bounds = array<i64: 4, 8, 512>}, {pipeline_mode = #tpu.pipeline_mode<synchronous>, transform_indices = @transform_1, window_bounds = array<i64: 128, 512>}, {pipeline_mode = #tpu.pipeline_mode<synchronous>, transform_indices = @transform_2, window_bounds = array<i64: 8, 1>}, {transform_indices = @transform_3, window_bounds = array<i64: 4, 8, 128>}, {pipeline_mode = #tpu.pipeline_mode<synchronous>, transform_indices = @transform_4, window_bounds = array<i64: 2, 128>}]} {
    %c0_i32 = arith.constant 0 : i32
    %0 = arith.cmpi eq, %arg0, %c0_i32 : i32
    %1 = arith.extui %0 : i1 to i32
    %c0_i32_0 = arith.constant 0 : i32
    %2 = arith.cmpi ne, %1, %c0_i32_0 : i32
    scf.if %2 {
      %cst_75 = arith.constant 0.000000e+00 : f32
      %216 = vector.broadcast %cst_75 : f32 to vector<8x128xf32>
      %c0_76 = arith.constant 0 : index
      %c0_77 = arith.constant 0 : index
      %217 = vector.load %arg6[%c0_76, %c0_77] : memref<8x128xf32, #tpu.memory_space<vmem>>, vector<8x128xf32>
      tpu.vector_store %arg6[%c0_76, %c0_77], %216 {strides = array<i32>} : memref<8x128xf32, #tpu.memory_space<vmem>>, vector<8x128xf32>,
      %cst_78 = arith.constant 0.000000e+00 : f32
      %218 = vector.broadcast %cst_78 : f32 to vector<8x128xf32>
      %c0_79 = arith.constant 0 : index
      %c0_80 = arith.constant 0 : index
      %219 = vector.load %arg7[%c0_79, %c0_80] : memref<8x128xf32, #tpu.memory_space<vmem>>, vector<8x128xf32>
      tpu.vector_store %arg7[%c0_79, %c0_80], %218 {strides = array<i32>} : memref<8x128xf32, #tpu.memory_space<vmem>>, vector<8x128xf32>,
      %cst_81 = arith.constant 0.000000e+00 : f32
      %220 = vector.broadcast %cst_81 : f32 to vector<2x128xf32>
      %c0_82 = arith.constant 0 : index
      %c0_83 = arith.constant 0 : index
      %221 = vector.load %arg5[%c0_82, %c0_83] : memref<2x128xf32, #tpu.memory_space<vmem>>, vector<2x128xf32>
      tpu.vector_store %arg5[%c0_82, %c0_83], %220 {strides = array<i32>} : memref<2x128xf32, #tpu.memory_space<vmem>>, vector<2x128xf32>,
    } else {
    }
    %c0 = arith.constant 0 : index
    %c0_1 = arith.constant 0 : index
    %3 = vector.load %arg3[%c0, %c0_1] : memref<8x1xi32, #tpu.memory_space<vmem>>, vector<8x1xi32>
    %c0_2 = arith.constant 0 : index
    %c0_3 = arith.constant 0 : index
    %4 = vector.load %arg6[%c0_2, %c0_3] : memref<8x128xf32, #tpu.memory_space<vmem>>, vector<8x128xf32>
    %c0_4 = arith.constant 0 : index
    %c0_5 = arith.constant 0 : index
    %5 = vector.load %arg7[%c0_4, %c0_5] : memref<8x128xf32, #tpu.memory_space<vmem>>, vector<8x128xf32>
    %cst = arith.constant 0.000000e+00 : f32
    %6 = vector.broadcast %cst : f32 to vector<1x128xf32>
    %cst_6 = arith.constant 0.000000e+00 : f32
    %7 = vector.broadcast %cst_6 : f32 to vector<1x128xf32>
    %c0_i32_7 = arith.constant 0 : i32
    %8 = arith.index_cast %c0_i32_7 : i32 to index
    %c0_8 = arith.constant 0 : index
    %c0_9 = arith.constant 0 : index
    %9 = vector.load %arg1[%8, %c0_8, %c0_9] : memref<4x8x512xf32, #tpu.memory_space<vmem>>, vector<1x8x512xf32>
    %10 = vector.shape_cast %9 : vector<1x8x512xf32> to vector<8x512xf32>
    %c0_10 = arith.constant 0 : index
    %c0_11 = arith.constant 0 : index
    %11 = vector.load %arg2[%c0_10, %c0_11] : memref<128x512xf32, #tpu.memory_space<vmem>>, vector<128x512xf32>
    %cst_12 = arith.constant dense<0.000000e+00> : vector<8x512xf32>
    %12 = tpu.matmul %4, %11, %cst_12 {dimension_numbers = #tpu.dot_dimension_numbers<[1], [0], [0], [1], [0, 0, 1, 1], [], []>} : vector<8x128xf32>, vector<128x512xf32>, vector<8x512xf32> -> vector<8x512xf32>
    %13 = arith.addf %10, %12 : vector<8x512xf32>
    %14 = vector.extract_strided_slice %13 {offsets = [0, 0], sizes = [8, 128], strides = [1, 1]} : vector<8x512xf32> to vector<8x128xf32>
    %15 = arith.negf %14 : vector<8x128xf32>
    %16 = math.exp %15 : vector<8x128xf32>
    %cst_13 = arith.constant 1.000000e+00 : f32
    %17 = vector.broadcast %cst_13 : f32 to vector<8x128xf32>
    %18 = arith.addf %17, %16 : vector<8x128xf32>
    %19 = arith.divf %17, %18 : vector<8x128xf32>
    %20 = vector.extract_strided_slice %13 {offsets = [0, 128], sizes = [8, 128], strides = [1, 1]} : vector<8x512xf32> to vector<8x128xf32>
    %21 = arith.negf %20 : vector<8x128xf32>
    %22 = math.exp %21 : vector<8x128xf32>
    %cst_14 = arith.constant 1.000000e+00 : f32
    %23 = vector.broadcast %cst_14 : f32 to vector<8x128xf32>
    %24 = arith.addf %23, %22 : vector<8x128xf32>
    %25 = arith.divf %23, %24 : vector<8x128xf32>
    %26 = vector.extract_strided_slice %13 {offsets = [0, 256], sizes = [8, 128], strides = [1, 1]} : vector<8x512xf32> to vector<8x128xf32>
    %27 = math.tanh %26 : vector<8x128xf32>
    %28 = vector.extract_strided_slice %13 {offsets = [0, 384], sizes = [8, 128], strides = [1, 1]} : vector<8x512xf32> to vector<8x128xf32>
    %29 = arith.negf %28 : vector<8x128xf32>
    %30 = math.exp %29 : vector<8x128xf32>
    %cst_15 = arith.constant 1.000000e+00 : f32
    %31 = vector.broadcast %cst_15 : f32 to vector<8x128xf32>
    %32 = arith.addf %31, %30 : vector<8x128xf32>
    %33 = arith.divf %31, %32 : vector<8x128xf32>
    %34 = arith.mulf %25, %5 : vector<8x128xf32>
    %35 = arith.mulf %19, %27 : vector<8x128xf32>
    %36 = arith.addf %34, %35 : vector<8x128xf32>
    %37 = math.tanh %36 : vector<8x128xf32>
    %38 = arith.mulf %33, %37 : vector<8x128xf32>
    %c4_i32 = arith.constant 4 : i32
    %39 = arith.muli %arg0, %c4_i32 : i32
    %40 = arith.addi %39, %c0_i32_7 : i32
    %41 = vector.broadcast %40 : i32 to vector<8x1xi32>
    %42 = arith.cmpi slt, %41, %3 : vector<8x1xi32>
    %cst_16 = arith.constant 0.000000e+00 : f32
    %43 = vector.shape_cast %42 : vector<8x1xi1> to vector<8x1xi1>
    %44 = vector.broadcast %43 : vector<8x1xi1> to vector<8x128xi1>
    %45 = vector.broadcast %cst_16 : f32 to vector<8x128xf32>
    %46 = arith.select %44, %38, %45 : vector<8x128xi1>, vector<8x128xf32>
    %47 = arith.index_cast %c0_i32_7 : i32 to index
    %c0_17 = arith.constant 0 : index
    %c0_18 = arith.constant 0 : index
    %48 = vector.load %arg4[%47, %c0_17, %c0_18] : memref<4x8x128xf32, #tpu.memory_space<vmem>>, vector<1x8x128xf32>
    %49 = vector.shape_cast %48 : vector<1x8x128xf32> to vector<8x128xf32>
    %50 = vector.shape_cast %46 : vector<8x128xf32> to vector<1x8x128xf32>
    tpu.vector_store %arg4[%47, %c0_17, %c0_18], %50 {strides = array<i32>} : memref<4x8x128xf32, #tpu.memory_space<vmem>>, vector<1x8x128xf32>,
    %cst_19 = arith.constant dense<0.000000e+00> : vector<128xf32>
    %51 = vector.multi_reduction <add>, %46, %cst_19 [0] : vector<8x128xf32> to vector<128xf32>
    %52 = vector.shape_cast %51 : vector<128xf32> to vector<1x128xf32>
    %53 = arith.addf %6, %52 : vector<1x128xf32>
    %54 = arith.mulf %46, %46 : vector<8x128xf32>
    %cst_20 = arith.constant dense<0.000000e+00> : vector<128xf32>
    %55 = vector.multi_reduction <add>, %54, %cst_20 [0] : vector<8x128xf32> to vector<128xf32>
    %56 = vector.shape_cast %55 : vector<128xf32> to vector<1x128xf32>
    %57 = arith.addf %7, %56 : vector<1x128xf32>
    %c1_i32 = arith.constant 1 : i32
    %58 = arith.index_cast %c1_i32 : i32 to index
    %c0_21 = arith.constant 0 : index
    %c0_22 = arith.constant 0 : index
    %59 = vector.load %arg1[%58, %c0_21, %c0_22] : memref<4x8x512xf32, #tpu.memory_space<vmem>>, vector<1x8x512xf32>
    %60 = vector.shape_cast %59 : vector<1x8x512xf32> to vector<8x512xf32>
    %c0_23 = arith.constant 0 : index
    %c0_24 = arith.constant 0 : index
    %61 = vector.load %arg2[%c0_23, %c0_24] : memref<128x512xf32, #tpu.memory_space<vmem>>, vector<128x512xf32>
    %cst_25 = arith.constant dense<0.000000e+00> : vector<8x512xf32>
    %62 = tpu.matmul %38, %61, %cst_25 {dimension_numbers = #tpu.dot_dimension_numbers<[1], [0], [0], [1], [0, 0, 1, 1], [], []>} : vector<8x128xf32>, vector<128x512xf32>, vector<8x512xf32> -> vector<8x512xf32>
    %63 = arith.addf %60, %62 : vector<8x512xf32>
    %64 = vector.extract_strided_slice %63 {offsets = [0, 0], sizes = [8, 128], strides = [1, 1]} : vector<8x512xf32> to vector<8x128xf32>
    %65 = arith.negf %64 : vector<8x128xf32>
    %66 = math.exp %65 : vector<8x128xf32>
    %cst_26 = arith.constant 1.000000e+00 : f32
    %67 = vector.broadcast %cst_26 : f32 to vector<8x128xf32>
    %68 = arith.addf %67, %66 : vector<8x128xf32>
    %69 = arith.divf %67, %68 : vector<8x128xf32>
    %70 = vector.extract_strided_slice %63 {offsets = [0, 128], sizes = [8, 128], strides = [1, 1]} : vector<8x512xf32> to vector<8x128xf32>
    %71 = arith.negf %70 : vector<8x128xf32>
    %72 = math.exp %71 : vector<8x128xf32>
    %cst_27 = arith.constant 1.000000e+00 : f32
    %73 = vector.broadcast %cst_27 : f32 to vector<8x128xf32>
    %74 = arith.addf %73, %72 : vector<8x128xf32>
    %75 = arith.divf %73, %74 : vector<8x128xf32>
    %76 = vector.extract_strided_slice %63 {offsets = [0, 256], sizes = [8, 128], strides = [1, 1]} : vector<8x512xf32> to vector<8x128xf32>
    %77 = math.tanh %76 : vector<8x128xf32>
    %78 = vector.extract_strided_slice %63 {offsets = [0, 384], sizes = [8, 128], strides = [1, 1]} : vector<8x512xf32> to vector<8x128xf32>
    %79 = arith.negf %78 : vector<8x128xf32>
    %80 = math.exp %79 : vector<8x128xf32>
    %cst_28 = arith.constant 1.000000e+00 : f32
    %81 = vector.broadcast %cst_28 : f32 to vector<8x128xf32>
    %82 = arith.addf %81, %80 : vector<8x128xf32>
    %83 = arith.divf %81, %82 : vector<8x128xf32>
    %84 = arith.mulf %75, %36 : vector<8x128xf32>
    %85 = arith.mulf %69, %77 : vector<8x128xf32>
    %86 = arith.addf %84, %85 : vector<8x128xf32>
    %87 = math.tanh %86 : vector<8x128xf32>
    %88 = arith.mulf %83, %87 : vector<8x128xf32>
    %c4_i32_29 = arith.constant 4 : i32
    %89 = arith.muli %arg0, %c4_i32_29 : i32
    %90 = arith.addi %89, %c1_i32 : i32
    %91 = vector.broadcast %90 : i32 to vector<8x1xi32>
    %92 = arith.cmpi slt, %91, %3 : vector<8x1xi32>
    %cst_30 = arith.constant 0.000000e+00 : f32
    %93 = vector.shape_cast %92 : vector<8x1xi1> to vector<8x1xi1>
    %94 = vector.broadcast %93 : vector<8x1xi1> to vector<8x128xi1>
    %95 = vector.broadcast %cst_30 : f32 to vector<8x128xf32>
    %96 = arith.select %94, %88, %95 : vector<8x128xi1>, vector<8x128xf32>
    %97 = arith.index_cast %c1_i32 : i32 to index
    %c0_31 = arith.constant 0 : index
    %c0_32 = arith.constant 0 : index
    %98 = vector.load %arg4[%97, %c0_31, %c0_32] : memref<4x8x128xf32, #tpu.memory_space<vmem>>, vector<1x8x128xf32>
    %99 = vector.shape_cast %98 : vector<1x8x128xf32> to vector<8x128xf32>
    %100 = vector.shape_cast %96 : vector<8x128xf32> to vector<1x8x128xf32>
    tpu.vector_store %arg4[%97, %c0_31, %c0_32], %100 {strides = array<i32>} : memref<4x8x128xf32, #tpu.memory_space<vmem>>, vector<1x8x128xf32>,
    %cst_33 = arith.constant dense<0.000000e+00> : vector<128xf32>
    %101 = vector.multi_reduction <add>, %96, %cst_33 [0] : vector<8x128xf32> to vector<128xf32>
    %102 = vector.shape_cast %101 : vector<128xf32> to vector<1x128xf32>
    %103 = arith.addf %53, %102 : vector<1x128xf32>
    %104 = arith.mulf %96, %96 : vector<8x128xf32>
    %cst_34 = arith.constant dense<0.000000e+00> : vector<128xf32>
    %105 = vector.multi_reduction <add>, %104, %cst_34 [0] : vector<8x128xf32> to vector<128xf32>
    %106 = vector.shape_cast %105 : vector<128xf32> to vector<1x128xf32>
    %107 = arith.addf %57, %106 : vector<1x128xf32>
    %c2_i32 = arith.constant 2 : i32
    %108 = arith.index_cast %c2_i32 : i32 to index
    %c0_35 = arith.constant 0 : index
    %c0_36 = arith.constant 0 : index
    %109 = vector.load %arg1[%108, %c0_35, %c0_36] : memref<4x8x512xf32, #tpu.memory_space<vmem>>, vector<1x8x512xf32>
    %110 = vector.shape_cast %109 : vector<1x8x512xf32> to vector<8x512xf32>
    %c0_37 = arith.constant 0 : index
    %c0_38 = arith.constant 0 : index
    %111 = vector.load %arg2[%c0_37, %c0_38] : memref<128x512xf32, #tpu.memory_space<vmem>>, vector<128x512xf32>
    %cst_39 = arith.constant dense<0.000000e+00> : vector<8x512xf32>
    %112 = tpu.matmul %88, %111, %cst_39 {dimension_numbers = #tpu.dot_dimension_numbers<[1], [0], [0], [1], [0, 0, 1, 1], [], []>} : vector<8x128xf32>, vector<128x512xf32>, vector<8x512xf32> -> vector<8x512xf32>
    %113 = arith.addf %110, %112 : vector<8x512xf32>
    %114 = vector.extract_strided_slice %113 {offsets = [0, 0], sizes = [8, 128], strides = [1, 1]} : vector<8x512xf32> to vector<8x128xf32>
    %115 = arith.negf %114 : vector<8x128xf32>
    %116 = math.exp %115 : vector<8x128xf32>
    %cst_40 = arith.constant 1.000000e+00 : f32
    %117 = vector.broadcast %cst_40 : f32 to vector<8x128xf32>
    %118 = arith.addf %117, %116 : vector<8x128xf32>
    %119 = arith.divf %117, %118 : vector<8x128xf32>
    %120 = vector.extract_strided_slice %113 {offsets = [0, 128], sizes = [8, 128], strides = [1, 1]} : vector<8x512xf32> to vector<8x128xf32>
    %121 = arith.negf %120 : vector<8x128xf32>
    %122 = math.exp %121 : vector<8x128xf32>
    %cst_41 = arith.constant 1.000000e+00 : f32
    %123 = vector.broadcast %cst_41 : f32 to vector<8x128xf32>
    %124 = arith.addf %123, %122 : vector<8x128xf32>
    %125 = arith.divf %123, %124 : vector<8x128xf32>
    %126 = vector.extract_strided_slice %113 {offsets = [0, 256], sizes = [8, 128], strides = [1, 1]} : vector<8x512xf32> to vector<8x128xf32>
    %127 = math.tanh %126 : vector<8x128xf32>
    %128 = vector.extract_strided_slice %113 {offsets = [0, 384], sizes = [8, 128], strides = [1, 1]} : vector<8x512xf32> to vector<8x128xf32>
    %129 = arith.negf %128 : vector<8x128xf32>
    %130 = math.exp %129 : vector<8x128xf32>
    %cst_42 = arith.constant 1.000000e+00 : f32
    %131 = vector.broadcast %cst_42 : f32 to vector<8x128xf32>
    %132 = arith.addf %131, %130 : vector<8x128xf32>
    %133 = arith.divf %131, %132 : vector<8x128xf32>
    %134 = arith.mulf %125, %86 : vector<8x128xf32>
    %135 = arith.mulf %119, %127 : vector<8x128xf32>
    %136 = arith.addf %134, %135 : vector<8x128xf32>
    %137 = math.tanh %136 : vector<8x128xf32>
    %138 = arith.mulf %133, %137 : vector<8x128xf32>
    %c4_i32_43 = arith.constant 4 : i32
    %139 = arith.muli %arg0, %c4_i32_43 : i32
    %140 = arith.addi %139, %c2_i32 : i32
    %141 = vector.broadcast %140 : i32 to vector<8x1xi32>
    %142 = arith.cmpi slt, %141, %3 : vector<8x1xi32>
    %cst_44 = arith.constant 0.000000e+00 : f32
    %143 = vector.shape_cast %142 : vector<8x1xi1> to vector<8x1xi1>
    %144 = vector.broadcast %143 : vector<8x1xi1> to vector<8x128xi1>
    %145 = vector.broadcast %cst_44 : f32 to vector<8x128xf32>
    %146 = arith.select %144, %138, %145 : vector<8x128xi1>, vector<8x128xf32>
    %147 = arith.index_cast %c2_i32 : i32 to index
    %c0_45 = arith.constant 0 : index
    %c0_46 = arith.constant 0 : index
    %148 = vector.load %arg4[%147, %c0_45, %c0_46] : memref<4x8x128xf32, #tpu.memory_space<vmem>>, vector<1x8x128xf32>
    %149 = vector.shape_cast %148 : vector<1x8x128xf32> to vector<8x128xf32>
    %150 = vector.shape_cast %146 : vector<8x128xf32> to vector<1x8x128xf32>
    tpu.vector_store %arg4[%147, %c0_45, %c0_46], %150 {strides = array<i32>} : memref<4x8x128xf32, #tpu.memory_space<vmem>>, vector<1x8x128xf32>,
    %cst_47 = arith.constant dense<0.000000e+00> : vector<128xf32>
    %151 = vector.multi_reduction <add>, %146, %cst_47 [0] : vector<8x128xf32> to vector<128xf32>
    %152 = vector.shape_cast %151 : vector<128xf32> to vector<1x128xf32>
    %153 = arith.addf %103, %152 : vector<1x128xf32>
    %154 = arith.mulf %146, %146 : vector<8x128xf32>
    %cst_48 = arith.constant dense<0.000000e+00> : vector<128xf32>
    %155 = vector.multi_reduction <add>, %154, %cst_48 [0] : vector<8x128xf32> to vector<128xf32>
    %156 = vector.shape_cast %155 : vector<128xf32> to vector<1x128xf32>
    %157 = arith.addf %107, %156 : vector<1x128xf32>
    %c3_i32 = arith.constant 3 : i32
    %158 = arith.index_cast %c3_i32 : i32 to index
    %c0_49 = arith.constant 0 : index
    %c0_50 = arith.constant 0 : index
    %159 = vector.load %arg1[%158, %c0_49, %c0_50] : memref<4x8x512xf32, #tpu.memory_space<vmem>>, vector<1x8x512xf32>
    %160 = vector.shape_cast %159 : vector<1x8x512xf32> to vector<8x512xf32>
    %c0_51 = arith.constant 0 : index
    %c0_52 = arith.constant 0 : index
    %161 = vector.load %arg2[%c0_51, %c0_52] : memref<128x512xf32, #tpu.memory_space<vmem>>, vector<128x512xf32>
    %cst_53 = arith.constant dense<0.000000e+00> : vector<8x512xf32>
    %162 = tpu.matmul %138, %161, %cst_53 {dimension_numbers = #tpu.dot_dimension_numbers<[1], [0], [0], [1], [0, 0, 1, 1], [], []>} : vector<8x128xf32>, vector<128x512xf32>, vector<8x512xf32> -> vector<8x512xf32>
    %163 = arith.addf %160, %162 : vector<8x512xf32>
    %164 = vector.extract_strided_slice %163 {offsets = [0, 0], sizes = [8, 128], strides = [1, 1]} : vector<8x512xf32> to vector<8x128xf32>
    %165 = arith.negf %164 : vector<8x128xf32>
    %166 = math.exp %165 : vector<8x128xf32>
    %cst_54 = arith.constant 1.000000e+00 : f32
    %167 = vector.broadcast %cst_54 : f32 to vector<8x128xf32>
    %168 = arith.addf %167, %166 : vector<8x128xf32>
    %169 = arith.divf %167, %168 : vector<8x128xf32>
    %170 = vector.extract_strided_slice %163 {offsets = [0, 128], sizes = [8, 128], strides = [1, 1]} : vector<8x512xf32> to vector<8x128xf32>
    %171 = arith.negf %170 : vector<8x128xf32>
    %172 = math.exp %171 : vector<8x128xf32>
    %cst_55 = arith.constant 1.000000e+00 : f32
    %173 = vector.broadcast %cst_55 : f32 to vector<8x128xf32>
    %174 = arith.addf %173, %172 : vector<8x128xf32>
    %175 = arith.divf %173, %174 : vector<8x128xf32>
    %176 = vector.extract_strided_slice %163 {offsets = [0, 256], sizes = [8, 128], strides = [1, 1]} : vector<8x512xf32> to vector<8x128xf32>
    %177 = math.tanh %176 : vector<8x128xf32>
    %178 = vector.extract_strided_slice %163 {offsets = [0, 384], sizes = [8, 128], strides = [1, 1]} : vector<8x512xf32> to vector<8x128xf32>
    %179 = arith.negf %178 : vector<8x128xf32>
    %180 = math.exp %179 : vector<8x128xf32>
    %cst_56 = arith.constant 1.000000e+00 : f32
    %181 = vector.broadcast %cst_56 : f32 to vector<8x128xf32>
    %182 = arith.addf %181, %180 : vector<8x128xf32>
    %183 = arith.divf %181, %182 : vector<8x128xf32>
    %184 = arith.mulf %175, %136 : vector<8x128xf32>
    %185 = arith.mulf %169, %177 : vector<8x128xf32>
    %186 = arith.addf %184, %185 : vector<8x128xf32>
    %187 = math.tanh %186 : vector<8x128xf32>
    %188 = arith.mulf %183, %187 : vector<8x128xf32>
    %c4_i32_57 = arith.constant 4 : i32
    %189 = arith.muli %arg0, %c4_i32_57 : i32
    %190 = arith.addi %189, %c3_i32 : i32
    %191 = vector.broadcast %190 : i32 to vector<8x1xi32>
    %192 = arith.cmpi slt, %191, %3 : vector<8x1xi32>
    %cst_58 = arith.constant 0.000000e+00 : f32
    %193 = vector.shape_cast %192 : vector<8x1xi1> to vector<8x1xi1>
    %194 = vector.broadcast %193 : vector<8x1xi1> to vector<8x128xi1>
    %195 = vector.broadcast %cst_58 : f32 to vector<8x128xf32>
    %196 = arith.select %194, %188, %195 : vector<8x128xi1>, vector<8x128xf32>
    %197 = arith.index_cast %c3_i32 : i32 to index
    %c0_59 = arith.constant 0 : index
    %c0_60 = arith.constant 0 : index
    %198 = vector.load %arg4[%197, %c0_59, %c0_60] : memref<4x8x128xf32, #tpu.memory_space<vmem>>, vector<1x8x128xf32>
    %199 = vector.shape_cast %198 : vector<1x8x128xf32> to vector<8x128xf32>
    %200 = vector.shape_cast %196 : vector<8x128xf32> to vector<1x8x128xf32>
    tpu.vector_store %arg4[%197, %c0_59, %c0_60], %200 {strides = array<i32>} : memref<4x8x128xf32, #tpu.memory_space<vmem>>, vector<1x8x128xf32>,
    %cst_61 = arith.constant dense<0.000000e+00> : vector<128xf32>
    %201 = vector.multi_reduction <add>, %196, %cst_61 [0] : vector<8x128xf32> to vector<128xf32>
    %202 = vector.shape_cast %201 : vector<128xf32> to vector<1x128xf32>
    %203 = arith.addf %153, %202 : vector<1x128xf32>
    %204 = arith.mulf %196, %196 : vector<8x128xf32>
    %cst_62 = arith.constant dense<0.000000e+00> : vector<128xf32>
    %205 = vector.multi_reduction <add>, %204, %cst_62 [0] : vector<8x128xf32> to vector<128xf32>
    %206 = vector.shape_cast %205 : vector<128xf32> to vector<1x128xf32>
    %207 = arith.addf %157, %206 : vector<1x128xf32>
    %c4_i32_63 = arith.constant 4 : i32
    %c0_64 = arith.constant 0 : index
    %c0_65 = arith.constant 0 : index
    %208 = vector.load %arg6[%c0_64, %c0_65] : memref<8x128xf32, #tpu.memory_space<vmem>>, vector<8x128xf32>
    tpu.vector_store %arg6[%c0_64, %c0_65], %188 {strides = array<i32>} : memref<8x128xf32, #tpu.memory_space<vmem>>, vector<8x128xf32>,
    %c0_66 = arith.constant 0 : index
    %c0_67 = arith.constant 0 : index
    %209 = vector.load %arg7[%c0_66, %c0_67] : memref<8x128xf32, #tpu.memory_space<vmem>>, vector<8x128xf32>
    tpu.vector_store %arg7[%c0_66, %c0_67], %186 {strides = array<i32>} : memref<8x128xf32, #tpu.memory_space<vmem>>, vector<8x128xf32>,
    %c0_68 = arith.constant 0 : index
    %c0_69 = arith.constant 0 : index
    %210 = vector.load %arg5[%c0_68, %c0_69] : memref<2x128xf32, #tpu.memory_space<vmem>>, vector<1x128xf32>
    %211 = arith.addf %210, %203 : vector<1x128xf32>
    %c0_70 = arith.constant 0 : index
    %c0_71 = arith.constant 0 : index
    %212 = vector.load %arg5[%c0_70, %c0_71] : memref<2x128xf32, #tpu.memory_space<vmem>>, vector<1x128xf32>
    tpu.vector_store %arg5[%c0_70, %c0_71], %211 {strides = array<i32>} : memref<2x128xf32, #tpu.memory_space<vmem>>, vector<1x128xf32>,
    %c1 = arith.constant 1 : index
    %c0_72 = arith.constant 0 : index
    %213 = vector.load %arg5[%c1, %c0_72] : memref<2x128xf32, #tpu.memory_space<vmem>>, vector<1x128xf32>
    %214 = arith.addf %213, %207 : vector<1x128xf32>
    %c1_73 = arith.constant 1 : index
    %c0_74 = arith.constant 0 : index
    %215 = vector.load %arg5[%c1_73, %c0_74] : memref<2x128xf32, #tpu.memory_space<vmem>>, vector<1x128xf32>
    tpu.vector_store %arg5[%c1_73, %c0_74], %214 {strides = array<i32>} : memref<2x128xf32, #tpu.memory_space<vmem>>, vector<1x128xf32>,
    return
  }
  func.func @transform_0(%arg0: i32) -> (i32, i32, i32) {
    %c0_i32 = arith.constant 0 : i32
    %c0_i32_0 = arith.constant 0 : i32
    %c0_i32_1 = arith.constant 0 : i32
    return %arg0, %c0_i32, %c0_i32_0 : i32, i32, i32
  }
  func.func @transform_1(%arg0: i32) -> (i32, i32) {
    %c0_i32 = arith.constant 0 : i32
    %c0_i32_0 = arith.constant 0 : i32
    %c0_i32_1 = arith.constant 0 : i32
    return %c0_i32, %c0_i32_0 : i32, i32
  }
  func.func @transform_2(%arg0: i32) -> (i32, i32) {
    %c0_i32 = arith.constant 0 : i32
    %c0_i32_0 = arith.constant 0 : i32
    %c0_i32_1 = arith.constant 0 : i32
    return %c0_i32, %c0_i32_0 : i32, i32
  }
  func.func @transform_3(%arg0: i32) -> (i32, i32, i32) {
    %c0_i32 = arith.constant 0 : i32
    %c0_i32_0 = arith.constant 0 : i32
    %c0_i32_1 = arith.constant 0 : i32
    return %arg0, %c0_i32, %c0_i32_0 : i32, i32, i32
  }
  func.func @transform_4(%arg0: i32) -> (i32, i32) {
    %c0_i32 = arith.constant 0 : i32
    %c0_i32_0 = arith.constant 0 : i32
    %c0_i32_1 = arith.constant 0 : i32
    return %c0_i32, %c0_i32_0 : i32, i32
  }
}

module attributes {stable_mosaic.version = 11 : i64} {
  func.func @_recurrent_kernel(%arg0: i32, %arg1: memref<4x8x512xf32, #tpu.memory_space<vmem>>, %arg2: memref<128x512xf32, #tpu.memory_space<vmem>>, %arg3: memref<8x1xi32, #tpu.memory_space<vmem>>, %arg4: memref<4x8x128xf32, #tpu.memory_space<vmem>>, %arg5: memref<2x128xf32, #tpu.memory_space<vmem>>, %arg6: memref<8x128xf32, #tpu.memory_space<vmem>>, %arg7: memref<8x128xf32, #tpu.memory_space<vmem>>) attributes {dimension_semantics = [#tpu.dimension_semantics<arbitrary>], iteration_bounds = array<i64: 3>, scalar_prefetch = 0 : i64, scratch_operands = 2 : i64, tpu.core_type = #tpu.core_type<tc>, window_params = [{transform_indices = @transform_0, window_bounds = array<i64: 4, 8, 512>}, {pipeline_mode = #tpu.pipeline_mode<synchronous>, transform_indices = @transform_1, window_bounds = array<i64: 128, 512>}, {pipeline_mode = #tpu.pipeline_mode<synchronous>, transform_indices = @transform_2, window_bounds = array<i64: 8, 1>}, {transform_indices = @transform_3, window_bounds = array<i64: 4, 8, 128>}, {pipeline_mode = #tpu.pipeline_mode<synchronous>, transform_indices = @transform_4, window_bounds = array<i64: 2, 128>}]} {
    %c0_i32 = arith.constant 0 : i32
    %0 = arith.cmpi eq, %arg0, %c0_i32 : i32
    %1 = arith.extui %0 : i1 to i32
    %c0_i32_0 = arith.constant 0 : i32
    %2 = arith.cmpi ne, %1, %c0_i32_0 : i32
    scf.if %2 {
      %cst_75 = arith.constant 0.000000e+00 : f32
      %216 = vector.broadcast %cst_75 : f32 to vector<8x128xf32>
      %c0_76 = arith.constant 0 : index
      %c0_77 = arith.constant 0 : index
      %217 = vector.load %arg6[%c0_76, %c0_77] : memref<8x128xf32, #tpu.memory_space<vmem>>, vector<8x128xf32>
      tpu.vector_store %arg6[%c0_76, %c0_77], %216 {strides = array<i32>} : memref<8x128xf32, #tpu.memory_space<vmem>>, vector<8x128xf32>,
      %cst_78 = arith.constant 0.000000e+00 : f32
      %218 = vector.broadcast %cst_78 : f32 to vector<8x128xf32>
      %c0_79 = arith.constant 0 : index
      %c0_80 = arith.constant 0 : index
      %219 = vector.load %arg7[%c0_79, %c0_80] : memref<8x128xf32, #tpu.memory_space<vmem>>, vector<8x128xf32>
      tpu.vector_store %arg7[%c0_79, %c0_80], %218 {strides = array<i32>} : memref<8x128xf32, #tpu.memory_space<vmem>>, vector<8x128xf32>,
      %cst_81 = arith.constant 0.000000e+00 : f32
      %220 = vector.broadcast %cst_81 : f32 to vector<2x128xf32>
      %c0_82 = arith.constant 0 : index
      %c0_83 = arith.constant 0 : index
      %221 = vector.load %arg5[%c0_82, %c0_83] : memref<2x128xf32, #tpu.memory_space<vmem>>, vector<2x128xf32>
      tpu.vector_store %arg5[%c0_82, %c0_83], %220 {strides = array<i32>} : memref<2x128xf32, #tpu.memory_space<vmem>>, vector<2x128xf32>,
    } else {
    }
    %c0 = arith.constant 0 : index
    %c0_1 = arith.constant 0 : index
    %3 = vector.load %arg3[%c0, %c0_1] : memref<8x1xi32, #tpu.memory_space<vmem>>, vector<8x1xi32>
    %c0_2 = arith.constant 0 : index
    %c0_3 = arith.constant 0 : index
    %4 = vector.load %arg6[%c0_2, %c0_3] : memref<8x128xf32, #tpu.memory_space<vmem>>, vector<8x128xf32>
    %c0_4 = arith.constant 0 : index
    %c0_5 = arith.constant 0 : index
    %5 = vector.load %arg7[%c0_4, %c0_5] : memref<8x128xf32, #tpu.memory_space<vmem>>, vector<8x128xf32>
    %cst = arith.constant 0.000000e+00 : f32
    %6 = vector.broadcast %cst : f32 to vector<1x128xf32>
    %cst_6 = arith.constant 0.000000e+00 : f32
    %7 = vector.broadcast %cst_6 : f32 to vector<1x128xf32>
    %c0_i32_7 = arith.constant 0 : i32
    %8 = arith.index_cast %c0_i32_7 : i32 to index
    %c0_8 = arith.constant 0 : index
    %c0_9 = arith.constant 0 : index
    %9 = vector.load %arg1[%8, %c0_8, %c0_9] : memref<4x8x512xf32, #tpu.memory_space<vmem>>, vector<1x8x512xf32>
    %10 = vector.shape_cast %9 : vector<1x8x512xf32> to vector<8x512xf32>
    %c0_10 = arith.constant 0 : index
    %c0_11 = arith.constant 0 : index
    %11 = vector.load %arg2[%c0_10, %c0_11] : memref<128x512xf32, #tpu.memory_space<vmem>>, vector<128x512xf32>
    %cst_12 = arith.constant dense<0.000000e+00> : vector<8x512xf32>
    %12 = tpu.matmul %4, %11, %cst_12 {dimension_numbers = #tpu.dot_dimension_numbers<[1], [0], [0], [1], [0, 0, 1, 1], [], []>} : vector<8x128xf32>, vector<128x512xf32>, vector<8x512xf32> -> vector<8x512xf32>
    %13 = arith.addf %10, %12 : vector<8x512xf32>
    %14 = vector.extract_strided_slice %13 {offsets = [0, 0], sizes = [8, 128], strides = [1, 1]} : vector<8x512xf32> to vector<8x128xf32>
    %15 = arith.negf %14 : vector<8x128xf32>
    %16 = math.exp %15 : vector<8x128xf32>
    %cst_13 = arith.constant 1.000000e+00 : f32
    %17 = vector.broadcast %cst_13 : f32 to vector<8x128xf32>
    %18 = arith.addf %17, %16 : vector<8x128xf32>
    %19 = arith.divf %17, %18 : vector<8x128xf32>
    %20 = vector.extract_strided_slice %13 {offsets = [0, 128], sizes = [8, 128], strides = [1, 1]} : vector<8x512xf32> to vector<8x128xf32>
    %21 = arith.negf %20 : vector<8x128xf32>
    %22 = math.exp %21 : vector<8x128xf32>
    %cst_14 = arith.constant 1.000000e+00 : f32
    %23 = vector.broadcast %cst_14 : f32 to vector<8x128xf32>
    %24 = arith.addf %23, %22 : vector<8x128xf32>
    %25 = arith.divf %23, %24 : vector<8x128xf32>
    %26 = vector.extract_strided_slice %13 {offsets = [0, 256], sizes = [8, 128], strides = [1, 1]} : vector<8x512xf32> to vector<8x128xf32>
    %27 = math.tanh %26 : vector<8x128xf32>
    %28 = vector.extract_strided_slice %13 {offsets = [0, 384], sizes = [8, 128], strides = [1, 1]} : vector<8x512xf32> to vector<8x128xf32>
    %29 = arith.negf %28 : vector<8x128xf32>
    %30 = math.exp %29 : vector<8x128xf32>
    %cst_15 = arith.constant 1.000000e+00 : f32
    %31 = vector.broadcast %cst_15 : f32 to vector<8x128xf32>
    %32 = arith.addf %31, %30 : vector<8x128xf32>
    %33 = arith.divf %31, %32 : vector<8x128xf32>
    %34 = arith.mulf %25, %5 : vector<8x128xf32>
    %35 = arith.mulf %19, %27 : vector<8x128xf32>
    %36 = arith.addf %34, %35 : vector<8x128xf32>
    %37 = math.tanh %36 : vector<8x128xf32>
    %38 = arith.mulf %33, %37 : vector<8x128xf32>
    %c4_i32 = arith.constant 4 : i32
    %39 = arith.muli %arg0, %c4_i32 : i32
    %40 = arith.addi %39, %c0_i32_7 : i32
    %41 = vector.broadcast %40 : i32 to vector<8x1xi32>
    %42 = arith.cmpi slt, %41, %3 : vector<8x1xi32>
    %cst_16 = arith.constant 0.000000e+00 : f32
    %43 = vector.shape_cast %42 : vector<8x1xi1> to vector<8x1xi1>
    %44 = vector.broadcast %43 : vector<8x1xi1> to vector<8x128xi1>
    %45 = vector.broadcast %cst_16 : f32 to vector<8x128xf32>
    %46 = arith.select %44, %38, %45 : vector<8x128xi1>, vector<8x128xf32>
    %47 = arith.index_cast %c0_i32_7 : i32 to index
    %c0_17 = arith.constant 0 : index
    %c0_18 = arith.constant 0 : index
    %48 = vector.load %arg4[%47, %c0_17, %c0_18] : memref<4x8x128xf32, #tpu.memory_space<vmem>>, vector<1x8x128xf32>
    %49 = vector.shape_cast %48 : vector<1x8x128xf32> to vector<8x128xf32>
    %50 = vector.shape_cast %46 : vector<8x128xf32> to vector<1x8x128xf32>
    tpu.vector_store %arg4[%47, %c0_17, %c0_18], %50 {strides = array<i32>} : memref<4x8x128xf32, #tpu.memory_space<vmem>>, vector<1x8x128xf32>,
    %cst_19 = arith.constant dense<0.000000e+00> : vector<128xf32>
    %51 = vector.multi_reduction <add>, %46, %cst_19 [0] : vector<8x128xf32> to vector<128xf32>
    %52 = vector.shape_cast %51 : vector<128xf32> to vector<1x128xf32>
    %53 = arith.addf %6, %52 : vector<1x128xf32>
    %54 = arith.mulf %46, %46 : vector<8x128xf32>
    %cst_20 = arith.constant dense<0.000000e+00> : vector<128xf32>
    %55 = vector.multi_reduction <add>, %54, %cst_20 [0] : vector<8x128xf32> to vector<128xf32>
    %56 = vector.shape_cast %55 : vector<128xf32> to vector<1x128xf32>
    %57 = arith.addf %7, %56 : vector<1x128xf32>
    %c1_i32 = arith.constant 1 : i32
    %58 = arith.index_cast %c1_i32 : i32 to index
    %c0_21 = arith.constant 0 : index
    %c0_22 = arith.constant 0 : index
    %59 = vector.load %arg1[%58, %c0_21, %c0_22] : memref<4x8x512xf32, #tpu.memory_space<vmem>>, vector<1x8x512xf32>
    %60 = vector.shape_cast %59 : vector<1x8x512xf32> to vector<8x512xf32>
    %c0_23 = arith.constant 0 : index
    %c0_24 = arith.constant 0 : index
    %61 = vector.load %arg2[%c0_23, %c0_24] : memref<128x512xf32, #tpu.memory_space<vmem>>, vector<128x512xf32>
    %cst_25 = arith.constant dense<0.000000e+00> : vector<8x512xf32>
    %62 = tpu.matmul %38, %61, %cst_25 {dimension_numbers = #tpu.dot_dimension_numbers<[1], [0], [0], [1], [0, 0, 1, 1], [], []>} : vector<8x128xf32>, vector<128x512xf32>, vector<8x512xf32> -> vector<8x512xf32>
    %63 = arith.addf %60, %62 : vector<8x512xf32>
    %64 = vector.extract_strided_slice %63 {offsets = [0, 0], sizes = [8, 128], strides = [1, 1]} : vector<8x512xf32> to vector<8x128xf32>
    %65 = arith.negf %64 : vector<8x128xf32>
    %66 = math.exp %65 : vector<8x128xf32>
    %cst_26 = arith.constant 1.000000e+00 : f32
    %67 = vector.broadcast %cst_26 : f32 to vector<8x128xf32>
    %68 = arith.addf %67, %66 : vector<8x128xf32>
    %69 = arith.divf %67, %68 : vector<8x128xf32>
    %70 = vector.extract_strided_slice %63 {offsets = [0, 128], sizes = [8, 128], strides = [1, 1]} : vector<8x512xf32> to vector<8x128xf32>
    %71 = arith.negf %70 : vector<8x128xf32>
    %72 = math.exp %71 : vector<8x128xf32>
    %cst_27 = arith.constant 1.000000e+00 : f32
    %73 = vector.broadcast %cst_27 : f32 to vector<8x128xf32>
    %74 = arith.addf %73, %72 : vector<8x128xf32>
    %75 = arith.divf %73, %74 : vector<8x128xf32>
    %76 = vector.extract_strided_slice %63 {offsets = [0, 256], sizes = [8, 128], strides = [1, 1]} : vector<8x512xf32> to vector<8x128xf32>
    %77 = math.tanh %76 : vector<8x128xf32>
    %78 = vector.extract_strided_slice %63 {offsets = [0, 384], sizes = [8, 128], strides = [1, 1]} : vector<8x512xf32> to vector<8x128xf32>
    %79 = arith.negf %78 : vector<8x128xf32>
    %80 = math.exp %79 : vector<8x128xf32>
    %cst_28 = arith.constant 1.000000e+00 : f32
    %81 = vector.broadcast %cst_28 : f32 to vector<8x128xf32>
    %82 = arith.addf %81, %80 : vector<8x128xf32>
    %83 = arith.divf %81, %82 : vector<8x128xf32>
    %84 = arith.mulf %75, %36 : vector<8x128xf32>
    %85 = arith.mulf %69, %77 : vector<8x128xf32>
    %86 = arith.addf %84, %85 : vector<8x128xf32>
    %87 = math.tanh %86 : vector<8x128xf32>
    %88 = arith.mulf %83, %87 : vector<8x128xf32>
    %c4_i32_29 = arith.constant 4 : i32
    %89 = arith.muli %arg0, %c4_i32_29 : i32
    %90 = arith.addi %89, %c1_i32 : i32
    %91 = vector.broadcast %90 : i32 to vector<8x1xi32>
    %92 = arith.cmpi slt, %91, %3 : vector<8x1xi32>
    %cst_30 = arith.constant 0.000000e+00 : f32
    %93 = vector.shape_cast %92 : vector<8x1xi1> to vector<8x1xi1>
    %94 = vector.broadcast %93 : vector<8x1xi1> to vector<8x128xi1>
    %95 = vector.broadcast %cst_30 : f32 to vector<8x128xf32>
    %96 = arith.select %94, %88, %95 : vector<8x128xi1>, vector<8x128xf32>
    %97 = arith.index_cast %c1_i32 : i32 to index
    %c0_31 = arith.constant 0 : index
    %c0_32 = arith.constant 0 : index
    %98 = vector.load %arg4[%97, %c0_31, %c0_32] : memref<4x8x128xf32, #tpu.memory_space<vmem>>, vector<1x8x128xf32>
    %99 = vector.shape_cast %98 : vector<1x8x128xf32> to vector<8x128xf32>
    %100 = vector.shape_cast %96 : vector<8x128xf32> to vector<1x8x128xf32>
    tpu.vector_store %arg4[%97, %c0_31, %c0_32], %100 {strides = array<i32>} : memref<4x8x128xf32, #tpu.memory_space<vmem>>, vector<1x8x128xf32>,
    %cst_33 = arith.constant dense<0.000000e+00> : vector<128xf32>
    %101 = vector.multi_reduction <add>, %96, %cst_33 [0] : vector<8x128xf32> to vector<128xf32>
    %102 = vector.shape_cast %101 : vector<128xf32> to vector<1x128xf32>
    %103 = arith.addf %53, %102 : vector<1x128xf32>
    %104 = arith.mulf %96, %96 : vector<8x128xf32>
    %cst_34 = arith.constant dense<0.000000e+00> : vector<128xf32>
    %105 = vector.multi_reduction <add>, %104, %cst_34 [0] : vector<8x128xf32> to vector<128xf32>
    %106 = vector.shape_cast %105 : vector<128xf32> to vector<1x128xf32>
    %107 = arith.addf %57, %106 : vector<1x128xf32>
    %c2_i32 = arith.constant 2 : i32
    %108 = arith.index_cast %c2_i32 : i32 to index
    %c0_35 = arith.constant 0 : index
    %c0_36 = arith.constant 0 : index
    %109 = vector.load %arg1[%108, %c0_35, %c0_36] : memref<4x8x512xf32, #tpu.memory_space<vmem>>, vector<1x8x512xf32>
    %110 = vector.shape_cast %109 : vector<1x8x512xf32> to vector<8x512xf32>
    %c0_37 = arith.constant 0 : index
    %c0_38 = arith.constant 0 : index
    %111 = vector.load %arg2[%c0_37, %c0_38] : memref<128x512xf32, #tpu.memory_space<vmem>>, vector<128x512xf32>
    %cst_39 = arith.constant dense<0.000000e+00> : vector<8x512xf32>
    %112 = tpu.matmul %88, %111, %cst_39 {dimension_numbers = #tpu.dot_dimension_numbers<[1], [0], [0], [1], [0, 0, 1, 1], [], []>} : vector<8x128xf32>, vector<128x512xf32>, vector<8x512xf32> -> vector<8x512xf32>
    %113 = arith.addf %110, %112 : vector<8x512xf32>
    %114 = vector.extract_strided_slice %113 {offsets = [0, 0], sizes = [8, 128], strides = [1, 1]} : vector<8x512xf32> to vector<8x128xf32>
    %115 = arith.negf %114 : vector<8x128xf32>
    %116 = math.exp %115 : vector<8x128xf32>
    %cst_40 = arith.constant 1.000000e+00 : f32
    %117 = vector.broadcast %cst_40 : f32 to vector<8x128xf32>
    %118 = arith.addf %117, %116 : vector<8x128xf32>
    %119 = arith.divf %117, %118 : vector<8x128xf32>
    %120 = vector.extract_strided_slice %113 {offsets = [0, 128], sizes = [8, 128], strides = [1, 1]} : vector<8x512xf32> to vector<8x128xf32>
    %121 = arith.negf %120 : vector<8x128xf32>
    %122 = math.exp %121 : vector<8x128xf32>
    %cst_41 = arith.constant 1.000000e+00 : f32
    %123 = vector.broadcast %cst_41 : f32 to vector<8x128xf32>
    %124 = arith.addf %123, %122 : vector<8x128xf32>
    %125 = arith.divf %123, %124 : vector<8x128xf32>
    %126 = vector.extract_strided_slice %113 {offsets = [0, 256], sizes = [8, 128], strides = [1, 1]} : vector<8x512xf32> to vector<8x128xf32>
    %127 = math.tanh %126 : vector<8x128xf32>
    %128 = vector.extract_strided_slice %113 {offsets = [0, 384], sizes = [8, 128], strides = [1, 1]} : vector<8x512xf32> to vector<8x128xf32>
    %129 = arith.negf %128 : vector<8x128xf32>
    %130 = math.exp %129 : vector<8x128xf32>
    %cst_42 = arith.constant 1.000000e+00 : f32
    %131 = vector.broadcast %cst_42 : f32 to vector<8x128xf32>
    %132 = arith.addf %131, %130 : vector<8x128xf32>
    %133 = arith.divf %131, %132 : vector<8x128xf32>
    %134 = arith.mulf %125, %86 : vector<8x128xf32>
    %135 = arith.mulf %119, %127 : vector<8x128xf32>
    %136 = arith.addf %134, %135 : vector<8x128xf32>
    %137 = math.tanh %136 : vector<8x128xf32>
    %138 = arith.mulf %133, %137 : vector<8x128xf32>
    %c4_i32_43 = arith.constant 4 : i32
    %139 = arith.muli %arg0, %c4_i32_43 : i32
    %140 = arith.addi %139, %c2_i32 : i32
    %141 = vector.broadcast %140 : i32 to vector<8x1xi32>
    %142 = arith.cmpi slt, %141, %3 : vector<8x1xi32>
    %cst_44 = arith.constant 0.000000e+00 : f32
    %143 = vector.shape_cast %142 : vector<8x1xi1> to vector<8x1xi1>
    %144 = vector.broadcast %143 : vector<8x1xi1> to vector<8x128xi1>
    %145 = vector.broadcast %cst_44 : f32 to vector<8x128xf32>
    %146 = arith.select %144, %138, %145 : vector<8x128xi1>, vector<8x128xf32>
    %147 = arith.index_cast %c2_i32 : i32 to index
    %c0_45 = arith.constant 0 : index
    %c0_46 = arith.constant 0 : index
    %148 = vector.load %arg4[%147, %c0_45, %c0_46] : memref<4x8x128xf32, #tpu.memory_space<vmem>>, vector<1x8x128xf32>
    %149 = vector.shape_cast %148 : vector<1x8x128xf32> to vector<8x128xf32>
    %150 = vector.shape_cast %146 : vector<8x128xf32> to vector<1x8x128xf32>
    tpu.vector_store %arg4[%147, %c0_45, %c0_46], %150 {strides = array<i32>} : memref<4x8x128xf32, #tpu.memory_space<vmem>>, vector<1x8x128xf32>,
    %cst_47 = arith.constant dense<0.000000e+00> : vector<128xf32>
    %151 = vector.multi_reduction <add>, %146, %cst_47 [0] : vector<8x128xf32> to vector<128xf32>
    %152 = vector.shape_cast %151 : vector<128xf32> to vector<1x128xf32>
    %153 = arith.addf %103, %152 : vector<1x128xf32>
    %154 = arith.mulf %146, %146 : vector<8x128xf32>
    %cst_48 = arith.constant dense<0.000000e+00> : vector<128xf32>
    %155 = vector.multi_reduction <add>, %154, %cst_48 [0] : vector<8x128xf32> to vector<128xf32>
    %156 = vector.shape_cast %155 : vector<128xf32> to vector<1x128xf32>
    %157 = arith.addf %107, %156 : vector<1x128xf32>
    %c3_i32 = arith.constant 3 : i32
    %158 = arith.index_cast %c3_i32 : i32 to index
    %c0_49 = arith.constant 0 : index
    %c0_50 = arith.constant 0 : index
    %159 = vector.load %arg1[%158, %c0_49, %c0_50] : memref<4x8x512xf32, #tpu.memory_space<vmem>>, vector<1x8x512xf32>
    %160 = vector.shape_cast %159 : vector<1x8x512xf32> to vector<8x512xf32>
    %c0_51 = arith.constant 0 : index
    %c0_52 = arith.constant 0 : index
    %161 = vector.load %arg2[%c0_51, %c0_52] : memref<128x512xf32, #tpu.memory_space<vmem>>, vector<128x512xf32>
    %cst_53 = arith.constant dense<0.000000e+00> : vector<8x512xf32>
    %162 = tpu.matmul %138, %161, %cst_53 {dimension_numbers = #tpu.dot_dimension_numbers<[1], [0], [0], [1], [0, 0, 1, 1], [], []>} : vector<8x128xf32>, vector<128x512xf32>, vector<8x512xf32> -> vector<8x512xf32>
    %163 = arith.addf %160, %162 : vector<8x512xf32>
    %164 = vector.extract_strided_slice %163 {offsets = [0, 0], sizes = [8, 128], strides = [1, 1]} : vector<8x512xf32> to vector<8x128xf32>
    %165 = arith.negf %164 : vector<8x128xf32>
    %166 = math.exp %165 : vector<8x128xf32>
    %cst_54 = arith.constant 1.000000e+00 : f32
    %167 = vector.broadcast %cst_54 : f32 to vector<8x128xf32>
    %168 = arith.addf %167, %166 : vector<8x128xf32>
    %169 = arith.divf %167, %168 : vector<8x128xf32>
    %170 = vector.extract_strided_slice %163 {offsets = [0, 128], sizes = [8, 128], strides = [1, 1]} : vector<8x512xf32> to vector<8x128xf32>
    %171 = arith.negf %170 : vector<8x128xf32>
    %172 = math.exp %171 : vector<8x128xf32>
    %cst_55 = arith.constant 1.000000e+00 : f32
    %173 = vector.broadcast %cst_55 : f32 to vector<8x128xf32>
    %174 = arith.addf %173, %172 : vector<8x128xf32>
    %175 = arith.divf %173, %174 : vector<8x128xf32>
    %176 = vector.extract_strided_slice %163 {offsets = [0, 256], sizes = [8, 128], strides = [1, 1]} : vector<8x512xf32> to vector<8x128xf32>
    %177 = math.tanh %176 : vector<8x128xf32>
    %178 = vector.extract_strided_slice %163 {offsets = [0, 384], sizes = [8, 128], strides = [1, 1]} : vector<8x512xf32> to vector<8x128xf32>
    %179 = arith.negf %178 : vector<8x128xf32>
    %180 = math.exp %179 : vector<8x128xf32>
    %cst_56 = arith.constant 1.000000e+00 : f32
    %181 = vector.broadcast %cst_56 : f32 to vector<8x128xf32>
    %182 = arith.addf %181, %180 : vector<8x128xf32>
    %183 = arith.divf %181, %182 : vector<8x128xf32>
    %184 = arith.mulf %175, %136 : vector<8x128xf32>
    %185 = arith.mulf %169, %177 : vector<8x128xf32>
    %186 = arith.addf %184, %185 : vector<8x128xf32>
    %187 = math.tanh %186 : vector<8x128xf32>
    %188 = arith.mulf %183, %187 : vector<8x128xf32>
    %c4_i32_57 = arith.constant 4 : i32
    %189 = arith.muli %arg0, %c4_i32_57 : i32
    %190 = arith.addi %189, %c3_i32 : i32
    %191 = vector.broadcast %190 : i32 to vector<8x1xi32>
    %192 = arith.cmpi slt, %191, %3 : vector<8x1xi32>
    %cst_58 = arith.constant 0.000000e+00 : f32
    %193 = vector.shape_cast %192 : vector<8x1xi1> to vector<8x1xi1>
    %194 = vector.broadcast %193 : vector<8x1xi1> to vector<8x128xi1>
    %195 = vector.broadcast %cst_58 : f32 to vector<8x128xf32>
    %196 = arith.select %194, %188, %195 : vector<8x128xi1>, vector<8x128xf32>
    %197 = arith.index_cast %c3_i32 : i32 to index
    %c0_59 = arith.constant 0 : index
    %c0_60 = arith.constant 0 : index
    %198 = vector.load %arg4[%197, %c0_59, %c0_60] : memref<4x8x128xf32, #tpu.memory_space<vmem>>, vector<1x8x128xf32>
    %199 = vector.shape_cast %198 : vector<1x8x128xf32> to vector<8x128xf32>
    %200 = vector.shape_cast %196 : vector<8x128xf32> to vector<1x8x128xf32>
    tpu.vector_store %arg4[%197, %c0_59, %c0_60], %200 {strides = array<i32>} : memref<4x8x128xf32, #tpu.memory_space<vmem>>, vector<1x8x128xf32>,
    %cst_61 = arith.constant dense<0.000000e+00> : vector<128xf32>
    %201 = vector.multi_reduction <add>, %196, %cst_61 [0] : vector<8x128xf32> to vector<128xf32>
    %202 = vector.shape_cast %201 : vector<128xf32> to vector<1x128xf32>
    %203 = arith.addf %153, %202 : vector<1x128xf32>
    %204 = arith.mulf %196, %196 : vector<8x128xf32>
    %cst_62 = arith.constant dense<0.000000e+00> : vector<128xf32>
    %205 = vector.multi_reduction <add>, %204, %cst_62 [0] : vector<8x128xf32> to vector<128xf32>
    %206 = vector.shape_cast %205 : vector<128xf32> to vector<1x128xf32>
    %207 = arith.addf %157, %206 : vector<1x128xf32>
    %c4_i32_63 = arith.constant 4 : i32
    %c0_64 = arith.constant 0 : index
    %c0_65 = arith.constant 0 : index
    %208 = vector.load %arg6[%c0_64, %c0_65] : memref<8x128xf32, #tpu.memory_space<vmem>>, vector<8x128xf32>
    tpu.vector_store %arg6[%c0_64, %c0_65], %188 {strides = array<i32>} : memref<8x128xf32, #tpu.memory_space<vmem>>, vector<8x128xf32>,
    %c0_66 = arith.constant 0 : index
    %c0_67 = arith.constant 0 : index
    %209 = vector.load %arg7[%c0_66, %c0_67] : memref<8x128xf32, #tpu.memory_space<vmem>>, vector<8x128xf32>
    tpu.vector_store %arg7[%c0_66, %c0_67], %186 {strides = array<i32>} : memref<8x128xf32, #tpu.memory_space<vmem>>, vector<8x128xf32>,
    %c0_68 = arith.constant 0 : index
    %c0_69 = arith.constant 0 : index
    %210 = vector.load %arg5[%c0_68, %c0_69] : memref<2x128xf32, #tpu.memory_space<vmem>>, vector<1x128xf32>
    %211 = arith.addf %210, %203 : vector<1x128xf32>
    %c0_70 = arith.constant 0 : index
    %c0_71 = arith.constant 0 : index
    %212 = vector.load %arg5[%c0_70, %c0_71] : memref<2x128xf32, #tpu.memory_space<vmem>>, vector<1x128xf32>
    tpu.vector_store %arg5[%c0_70, %c0_71], %211 {strides = array<i32>} : memref<2x128xf32, #tpu.memory_space<vmem>>, vector<1x128xf32>,
    %c1 = arith.constant 1 : index
    %c0_72 = arith.constant 0 : index
    %213 = vector.load %arg5[%c1, %c0_72] : memref<2x128xf32, #tpu.memory_space<vmem>>, vector<1x128xf32>
    %214 = arith.addf %213, %207 : vector<1x128xf32>
    %c1_73 = arith.constant 1 : index
    %c0_74 = arith.constant 0 : index
    %215 = vector.load %arg5[%c1_73, %c0_74] : memref<2x128xf32, #tpu.memory_space<vmem>>, vector<1x128xf32>
    tpu.vector_store %arg5[%c1_73, %c0_74], %214 {strides = array<i32>} : memref<2x128xf32, #tpu.memory_space<vmem>>, vector<1x128xf32>,
    return
  }
  func.func @transform_0(%arg0: i32) -> (i32, i32, i32) {
    %c0_i32 = arith.constant 0 : i32
    %c0_i32_0 = arith.constant 0 : i32
    %c0_i32_1 = arith.constant 0 : i32
    return %arg0, %c0_i32, %c0_i32_0 : i32, i32, i32
  }
  func.func @transform_1(%arg0: i32) -> (i32, i32) {
    %c0_i32 = arith.constant 0 : i32
    %c0_i32_0 = arith.constant 0 : i32
    %c0_i32_1 = arith.constant 0 : i32
    return %c0_i32, %c0_i32_0 : i32, i32
  }
  func.func @transform_2(%arg0: i32) -> (i32, i32) {
    %c0_i32 = arith.constant 0 : i32
    %c0_i32_0 = arith.constant 0 : i32
    %c0_i32_1 = arith.constant 0 : i32
    return %c0_i32, %c0_i32_0 : i32, i32
  }
  func.func @transform_3(%arg0: i32) -> (i32, i32, i32) {
    %c0_i32 = arith.constant 0 : i32
    %c0_i32_0 = arith.constant 0 : i32
    %c0_i32_1 = arith.constant 0 : i32
    return %arg0, %c0_i32, %c0_i32_0 : i32, i32, i32
  }
  func.func @transform_4(%arg0: i32) -> (i32, i32) {
    %c0_i32 = arith.constant 0 : i32
    %c0_i32_0 = arith.constant 0 : i32
    %c0_i32_1 = arith.constant 0 : i32
    return %c0_i32, %c0_i32_0 : i32, i32
  }
}

</mosaic_0001>

<llo_original>
// kernel: deep_batch_rnn_forward.6
$region0: #{deep_batch_rnn_forward.6}
  #allocation0 [shape = 'u32[]', space=smem, size = 0x4, offset = 0x4, fixed_abs, tag = 'smem constant byte address 0x4 - core index']
  #allocation1 [shape = 'u32[72,128]{1,0:T(1,128)}', space=vmem, size = 0x9000, scoped, tag = 'internal scratch']
  %s0 = inlined_call_operand.vmem [shape: f32[12,8,128], index: 0, kind: input, shape index: {}]
  %s1 = inlined_call_operand.vmem [shape: f32[128,512], index: 1, kind: input, shape index: {}]
  %s2 = inlined_call_operand.vmem [shape: f32[1,512], index: 2, kind: input, shape index: {}]
  %s3 = inlined_call_operand.vmem [shape: f32[12,8,512], index: 3, kind: output, shape index: {}]
  %s4 = sld [smem:[#allocation0]]
  $region45: #{deep_batch_rnn_forward.6} parent=0
    _
  %s6 = ssub.s32 1, %s4
  %s7 = scalar_select 0, %s6, %s4
  loop: start=0, step=1, limit=5
  $region2: #{deep_batch_rnn_forward.6} parent=0 // loop_pre_header
    _
  $region3: #{deep_batch_rnn_forward.6} parent=0 // loop_header
    %s9 = sphi 0, %s13
    %p10 = scmp.ge.s32.totalorder %s9, 5
    %s19 = sphi 0, %s21
    %s22 = sphi 0, %s19
    %s23 = sphi 0, %s22
    %s39 = sphi 0, %s23
    %s43 = sphi 0, %s43
    %s45 = sphi 0, %s43
    %s46 = sphi 0, %s45
    %s60 = sphi 0, %s46
    %s64 = sphi 0, %s64
    %s66 = sphi 0, %s64
    %s67 = sphi 0, %s66
    %s81 = sphi 0, %s67
    %s87 = sphi 0, %s89
    %s90 = sphi 0, %s87
    %s91 = sphi 0, %s90
    %s107 = sphi 0, %s91
  $region4: #{deep_batch_rnn_forward.6} parent=0 // loop_header_branch
    %12 = sbr.rel (%p10) target = $region8
  $region5: #{deep_batch_rnn_forward.6} parent=0 // loop_body
    %s14 = ssub.s32 %s9, 1
    %s15 = ssub.s32 %s9, 2
    %s16 = sadd.s32 %s9, 1
    %s17 = ssub.s32 %s9, %s16
    %p18 = scmp.eq.s32.totalorder %s17, 0
    %s20 = sadd.s32 %s19, 1
    %s21 = scalar_select %p18, %s19, %s20
    %p24 = pneg %p18
    %p25 = scmp.eq.s32.totalorder %s9, 2
    %p26 = por %p24, %p25
    %p27 = scmp.ne.s32.totalorder %s19, %s22
    %p28 = scmp.eq.s32.totalorder %s9, 0
    %p29 = por %p27, %p28
    %p30 = scmp.ne.s32.totalorder %s19, %s22
    %p31 = scmp.eq.s32.totalorder %s14, 2
    %p32 = por %p30, %p31
    %p33 = scmp.ne.s32.totalorder %s22, %s23
    %p34 = scmp.eq.s32.totalorder %s14, 0
    %p35 = por %p33, %p34
    %p36 = scmp.ne.s32.totalorder %s22, %s23
    %p37 = scmp.eq.s32.totalorder %s15, 2
    %p38 = por %p36, %p37
    %p40 = scmp.ne.s32.totalorder %s23, %s39
    %p41 = scmp.eq.s32.totalorder %s15, 0
    %p42 = por %p40, %p41
    %s44 = sadd.s32 %s43, 1
    %p47 = scmp.eq.s32.totalorder %s9, 2
    %p48 = scmp.ne.s32.totalorder %s43, %s45
    %p49 = scmp.eq.s32.totalorder %s9, 0
    %p50 = por %p48, %p49
    %p51 = scmp.ne.s32.totalorder %s43, %s45
    %p52 = scmp.eq.s32.totalorder %s14, 2
    %p53 = por %p51, %p52
    %p54 = scmp.ne.s32.totalorder %s45, %s46
    %p55 = scmp.eq.s32.totalorder %s14, 0
    %p56 = por %p54, %p55
    %p57 = scmp.ne.s32.totalorder %s45, %s46
    %p58 = scmp.eq.s32.totalorder %s15, 2
    %p59 = por %p57, %p58
    %p61 = scmp.ne.s32.totalorder %s46, %s60
    %p62 = scmp.eq.s32.totalorder %s15, 0
    %p63 = por %p61, %p62
    %s65 = sadd.s32 %s64, 1
    %p68 = scmp.eq.s32.totalorder %s9, 2
    %p69 = scmp.ne.s32.totalorder %s64, %s66
    %p70 = scmp.eq.s32.totalorder %s9, 0
    %p71 = por %p69, %p70
    %p72 = scmp.ne.s32.totalorder %s64, %s66
    %p73 = scmp.eq.s32.totalorder %s14, 2
    %p74 = por %p72, %p73
    %p75 = scmp.ne.s32.totalorder %s66, %s67
    %p76 = scmp.eq.s32.totalorder %s14, 0
    %p77 = por %p75, %p76
    %p78 = scmp.ne.s32.totalorder %s66, %s67
    %p79 = scmp.eq.s32.totalorder %s15, 2
    %p80 = por %p78, %p79
    %p82 = scmp.ne.s32.totalorder %s67, %s81
    %p83 = scmp.eq.s32.totalorder %s15, 0
    %p84 = por %p82, %p83
    %s85 = ssub.s32 %s9, %s16
    %p86 = scmp.eq.s32.totalorder %s85, 0
    %s88 = sadd.s32 %s87, 1
    %s89 = scalar_select %p86, %s87, %s88
    %p92 = pneg %p86
    %p93 = scmp.eq.s32.totalorder %s9, 2
    %p94 = por %p92, %p93
    %p95 = scmp.ne.s32.totalorder %s87, %s90
    %p96 = scmp.eq.s32.totalorder %s9, 0
    %p97 = por %p95, %p96
    %p98 = scmp.ne.s32.totalorder %s87, %s90
    %p99 = scmp.eq.s32.totalorder %s14, 2
    %p100 = por %p98, %p99
    %p101 = scmp.ne.s32.totalorder %s90, %s91
    %p102 = scmp.eq.s32.totalorder %s14, 0
    %p103 = por %p101, %p102
    %p104 = scmp.ne.s32.totalorder %s90, %s91
    %p105 = scmp.eq.s32.totalorder %s15, 2
    %p106 = por %p104, %p105
    %p108 = scmp.ne.s32.totalorder %s91, %s107
    %p109 = scmp.eq.s32.totalorder %s15, 0
    %p110 = por %p108, %p109
    %p111 = scmp.le.s32.totalorder 1, %s9
    %p112 = scmp.lt.s32.totalorder %s9, 4
    %p113 = pnand %p111, %p112
    %p114 = pneg %p113
    // Predicated region
    $region9: #{deep_batch_rnn_forward.6} parent=5 // pred_check
      _
    $region10: #{deep_batch_rnn_forward.6} parent=5 // pred_check_branch
      %116 = sbr.rel (%p113) target = $region12
    $region11: #{deep_batch_rnn_forward.6} parent=5 // pred_region
      %s117 = ssub.s32 %s9, 1
      // Predicated region
      $region13: #{deep_batch_rnn_forward.6} parent=11 // pred_check
        %p118 = pneg %p56
      $region14: #{deep_batch_rnn_forward.6} parent=11 // pred_check_branch
        %120 = sbr.rel (%p118) target = $region16
      $region15: #{deep_batch_rnn_forward.6} parent=11 // pred_region
        _
      $region16: #{deep_batch_rnn_forward.6} parent=11 // pred_fallthru
        _
      // Predicated region
      $region17: #{deep_batch_rnn_forward.6} parent=11 // pred_check
        %p121 = pneg %p77
      $region18: #{deep_batch_rnn_forward.6} parent=11 // pred_check_branch
        %123 = sbr.rel (%p121) target = $region20
      $region19: #{deep_batch_rnn_forward.6} parent=11 // pred_region
        _
      $region20: #{deep_batch_rnn_forward.6} parent=11 // pred_fallthru
        _
    $region12: #{deep_batch_rnn_forward.6} parent=5 // pred_fallthru
      _
    %p124 = scmp.lt.s32.totalorder %s9, 3
    // Predicated region
    $region21: #{deep_batch_rnn_forward.6} parent=5 // pred_check
      %p125 = pneg %p124
    $region22: #{deep_batch_rnn_forward.6} parent=5 // pred_check_branch
      %127 = sbr.rel (%p125) target = $region24
    $region23: #{deep_batch_rnn_forward.6} parent=5 // pred_region
      // Predicated region
      $region25: #{deep_batch_rnn_forward.6} parent=23 // pred_check
        %p128 = pneg %p29
      $region26: #{deep_batch_rnn_forward.6} parent=23 // pred_check_branch
        %130 = sbr.rel (%p128) target = $region28
      $region27: #{deep_batch_rnn_forward.6} parent=23 // pred_region
        %s131 = smul.u32 4, %s9
        %p132 = scmp.lt.s32.totalorder %s131, 11
        %s133 = scalar_select %p132, %s131, 11
        %s134 = smul.addr %s133, 8
        %s135 = scalar_lea.vmem %s0, %s134
        %s136 = smul.u32 4, %s9
      $region28: #{deep_batch_rnn_forward.6} parent=23 // pred_fallthru
        _
    $region24: #{deep_batch_rnn_forward.6} parent=5 // pred_fallthru
      _
    %p137 = scmp.le.s32.totalorder 1, %s9
    %p138 = scmp.lt.s32.totalorder %s9, 4
    %p139 = pnand %p137, %p138
    %p140 = pneg %p139
    // Predicated region
    $region29: #{deep_batch_rnn_forward.6} parent=5 // pred_check
      _
    $region30: #{deep_batch_rnn_forward.6} parent=5 // pred_check_branch
      %142 = sbr.rel (%p139) target = $region32
    $region31: #{deep_batch_rnn_forward.6} parent=5 // pred_region
      %s143 = ssub.s32 %s9, 1
      %s144 = smul.u32 4, %s14
      %p145 = scmp.lt.s32.totalorder %s144, 11
      %s146 = scalar_select %p145, %s144, 11
      %s147 = smul.addr %s146, 8
      %s148 = scalar_lea.vmem %s0, %s147
      %p149 = pneg %p35
      %p150 = pneg %p32
      %p151 = pneg %p56
      %p152 = pneg %p53
      %p153 = pneg %p77
      %p154 = pneg %p74
      %p155 = pneg %p103
      %p156 = pneg %p100
      %s157 = smul.u32 4, %s14
      %p158 = scmp.lt.s32.totalorder %s157, 11
      %s159 = scalar_select %p158, %s157, 11
      %s160 = smul.addr %s159, 4
      %s161 = smul.addr %s160, 8
      %s162 = scalar_lea.vmem %s3, %s161
      %s163 = smul.u32 4, %s14
      %p164 = scmp.lt.s32.totalorder %s163, 11
      %s165 = scalar_select %p164, %s163, 11
      %s166 = smul.addr %s165, 8
      %s167 = scalar_lea.vmem %s0, %s166
      %s168 = smul.u32 4, %s14
      %s169 = smul.u32 4, %s14
      %p170 = scmp.lt.s32.totalorder %s169, 11
      %s171 = scalar_select %p170, %s169, 11
      %s172 = smul.addr %s171, 4
      %s173 = smul.addr %s172, 8
      %s174 = scalar_lea.vmem %s3, %s173
      %s175 = smul.u32 4, %s14
      %v176 = vld [vmem:[%s167] sm:$0xff]
      %v177 = vld [vmem:[%s167 + $0x8] sm:$0xff]
      %v178 = vld [vmem:[%s167 + $0x10] sm:$0xff]
      %v179 = vld [vmem:[%s167 + $0x18] sm:$0xff]
      %v180 = vld [vmem:[%s1] sm:$0xff]
      %v181 = vld [vmem:[%s1 + $0x8] sm:$0xff]
      %v182 = vld [vmem:[%s1 + $0x10] sm:$0xff]
      %v183 = vld [vmem:[%s1 + $0x18] sm:$0xff]
      %v184 = vld [vmem:[%s1 + $0x20] sm:$0xff]
      %v185 = vld [vmem:[%s1 + $0x28] sm:$0xff]
      %v186 = vld [vmem:[%s1 + $0x30] sm:$0xff]
      %v187 = vld [vmem:[%s1 + $0x38] sm:$0xff]
      %v188 = vld [vmem:[%s1 + $0x40] sm:$0xff]
      %v189 = vld [vmem:[%s1 + $0x48] sm:$0xff]
      %v190 = vld [vmem:[%s1 + $0x50] sm:$0xff]
      %v191 = vld [vmem:[%s1 + $0x58] sm:$0xff]
      %v192 = vld [vmem:[%s1 + $0x60] sm:$0xff]
      %v193 = vld [vmem:[%s1 + $0x68] sm:$0xff]
      %v194 = vld [vmem:[%s1 + $0x70] sm:$0xff]
      %v195 = vld [vmem:[%s1 + $0x78] sm:$0xff]
      %v196 = vld [vmem:[%s1 + $0x80] sm:$0xff]
      %v197 = vld [vmem:[%s1 + $0x88] sm:$0xff]
      %v198 = vld [vmem:[%s1 + $0x90] sm:$0xff]
      %v199 = vld [vmem:[%s1 + $0x98] sm:$0xff]
      %v200 = vld [vmem:[%s1 + $0xa0] sm:$0xff]
      %v201 = vld [vmem:[%s1 + $0xa8] sm:$0xff]
      %v202 = vld [vmem:[%s1 + $0xb0] sm:$0xff]
      %v203 = vld [vmem:[%s1 + $0xb8] sm:$0xff]
      %v204 = vld [vmem:[%s1 + $0xc0] sm:$0xff]
      %v205 = vld [vmem:[%s1 + $0xc8] sm:$0xff]
      %v206 = vld [vmem:[%s1 + $0xd0] sm:$0xff]
      %v207 = vld [vmem:[%s1 + $0xd8] sm:$0xff]
      %v208 = vld [vmem:[%s1 + $0xe0] sm:$0xff]
      %v209 = vld [vmem:[%s1 + $0xe8] sm:$0xff]
      %v210 = vld [vmem:[%s1 + $0xf0] sm:$0xff]
      %v211 = vld [vmem:[%s1 + $0xf8] sm:$0xff]
      %v212 = vld [vmem:[%s1 + $0x100] sm:$0xff]
      %v213 = vld [vmem:[%s1 + $0x108] sm:$0xff]
      %v214 = vld [vmem:[%s1 + $0x110] sm:$0xff]
      %v215 = vld [vmem:[%s1 + $0x118] sm:$0xff]
      %v216 = vld [vmem:[%s1 + $0x120] sm:$0xff]
      %v217 = vld [vmem:[%s1 + $0x128] sm:$0xff]
      %v218 = vld [vmem:[%s1 + $0x130] sm:$0xff]
      %v219 = vld [vmem:[%s1 + $0x138] sm:$0xff]
      %v220 = vld [vmem:[%s1 + $0x140] sm:$0xff]
      %v221 = vld [vmem:[%s1 + $0x148] sm:$0xff]
      %v222 = vld [vmem:[%s1 + $0x150] sm:$0xff]
      %v223 = vld [vmem:[%s1 + $0x158] sm:$0xff]
      %v224 = vld [vmem:[%s1 + $0x160] sm:$0xff]
      %v225 = vld [vmem:[%s1 + $0x168] sm:$0xff]
      %v226 = vld [vmem:[%s1 + $0x170] sm:$0xff]
      %v227 = vld [vmem:[%s1 + $0x178] sm:$0xff]
      %v228 = vld [vmem:[%s1 + $0x180] sm:$0xff]
      %v229 = vld [vmem:[%s1 + $0x188] sm:$0xff]
      %v230 = vld [vmem:[%s1 + $0x190] sm:$0xff]
      %v231 = vld [vmem:[%s1 + $0x198] sm:$0xff]
      %v232 = vld [vmem:[%s1 + $0x1a0] sm:$0xff]
      %v233 = vld [vmem:[%s1 + $0x1a8] sm:$0xff]
      %v234 = vld [vmem:[%s1 + $0x1b0] sm:$0xff]
      %v235 = vld [vmem:[%s1 + $0x1b8] sm:$0xff]
      %v236 = vld [vmem:[%s1 + $0x1c0] sm:$0xff]
      %v237 = vld [vmem:[%s1 + $0x1c8] sm:$0xff]
      %v238 = vld [vmem:[%s1 + $0x1d0] sm:$0xff]
      %v239 = vld [vmem:[%s1 + $0x1d8] sm:$0xff]
      %v240 = vld [vmem:[%s1 + $0x1e0] sm:$0xff]
      %v241 = vld [vmem:[%s1 + $0x1e8] sm:$0xff]
      %v242 = vld [vmem:[%s1 + $0x1f0] sm:$0xff]
      %v243 = vld [vmem:[%s1 + $0x1f8] sm:$0xff]
      %v244 = vld [vmem:[%s2] sm:$0xf]
      %v246 = vperm.slane %v244, 0
      %v247 = vperm.slane %v244, 1
      %v248 = vperm.slane %v244, 2
      %v249 = vperm.slane %v244, 3
      %254 = vmatpush.msra.mxu0 %v240
      %255 = vmatpush.msra.mxu0 %v236
      %256 = vmatpush.msra.mxu0 %v232
      %257 = vmatpush.msra.mxu0 %v228
      %258 = vmatpush.msra.mxu0 %v224
      %259 = vmatpush.msra.mxu0 %v220
      %260 = vmatpush.msra.mxu0 %v216
      %261 = vmatpush.msra.mxu0 %v212
      %262 = vmatpush.msra.mxu0 %v208
      %263 = vmatpush.msra.mxu0 %v204
      %264 = vmatpush.msra.mxu0 %v200
      %265 = vmatpush.msra.mxu0 %v196
      %266 = vmatpush.msra.mxu0 %v192
      %267 = vmatpush.msra.mxu0 %v188
      %268 = vmatpush.msra.mxu0 %v184
      %269 = vmatpush.msra.mxu0 %v180
      %270 = vmatmul.f32.gmra.mxu0 %v176
      %v271 = vpop.f32.mrf.mxu0
      %v272 = vadd.f32 %v246, %v271
      %273 = vmatmul.f32.gmra.mxu0 %v177
      %v274 = vpop.f32.mrf.mxu0
      %v275 = vadd.f32 %v246, %v274
      %276 = vmatmul.f32.gmra.mxu0 %v178
      %v277 = vpop.f32.mrf.mxu0
      %v278 = vadd.f32 %v246, %v277
      %279 = vmatmul.f32.gmra.mxu0 %v179
      %v280 = vpop.f32.mrf.mxu0
      %v281 = vadd.f32 %v246, %v280
      %282 = vdwg.mxu0
      %283 = vmatpush.msra.mxu0 %v241
      %284 = vmatpush.msra.mxu0 %v237
      %285 = vmatpush.msra.mxu0 %v233
      %286 = vmatpush.msra.mxu0 %v229
      %287 = vmatpush.msra.mxu0 %v225
      %288 = vmatpush.msra.mxu0 %v221
      %289 = vmatpush.msra.mxu0 %v217
      %290 = vmatpush.msra.mxu0 %v213
      %291 = vmatpush.msra.mxu0 %v209
      %292 = vmatpush.msra.mxu0 %v205
      %293 = vmatpush.msra.mxu0 %v201
      %294 = vmatpush.msra.mxu0 %v197
      %295 = vmatpush.msra.mxu0 %v193
      %296 = vmatpush.msra.mxu0 %v189
      %297 = vmatpush.msra.mxu0 %v185
      %298 = vmatpush.msra.mxu0 %v181
      %299 = vmatmul.f32.gmra.mxu0 %v176
      %v300 = vpop.f32.mrf.mxu0
      %v301 = vadd.f32 %v247, %v300
      %302 = vmatmul.f32.gmra.mxu0 %v177
      %v303 = vpop.f32.mrf.mxu0
      %v304 = vadd.f32 %v247, %v303
      %305 = vmatmul.f32.gmra.mxu0 %v178
      %v306 = vpop.f32.mrf.mxu0
      %v307 = vadd.f32 %v247, %v306
      %308 = vmatmul.f32.gmra.mxu0 %v179
      %v309 = vpop.f32.mrf.mxu0
      %v310 = vadd.f32 %v247, %v309
      %311 = vdwg.mxu0
      %312 = vmatpush.msra.mxu0 %v242
      %313 = vmatpush.msra.mxu0 %v238
      %314 = vmatpush.msra.mxu0 %v234
      %315 = vmatpush.msra.mxu0 %v230
      %316 = vmatpush.msra.mxu0 %v226
      %317 = vmatpush.msra.mxu0 %v222
      %318 = vmatpush.msra.mxu0 %v218
      %319 = vmatpush.msra.mxu0 %v214
      %320 = vmatpush.msra.mxu0 %v210
      %321 = vmatpush.msra.mxu0 %v206
      %322 = vmatpush.msra.mxu0 %v202
      %323 = vmatpush.msra.mxu0 %v198
      %324 = vmatpush.msra.mxu0 %v194
      %325 = vmatpush.msra.mxu0 %v190
      %326 = vmatpush.msra.mxu0 %v186
      %327 = vmatpush.msra.mxu0 %v182
      %328 = vmatmul.f32.gmra.mxu0 %v176
      %v329 = vpop.f32.mrf.mxu0
      %v330 = vadd.f32 %v248, %v329
      %331 = vmatmul.f32.gmra.mxu0 %v177
      %v332 = vpop.f32.mrf.mxu0
      %v333 = vadd.f32 %v248, %v332
      %334 = vmatmul.f32.gmra.mxu0 %v178
      %v335 = vpop.f32.mrf.mxu0
      %v336 = vadd.f32 %v248, %v335
      %337 = vmatmul.f32.gmra.mxu0 %v179
      %v338 = vpop.f32.mrf.mxu0
      %v339 = vadd.f32 %v248, %v338
      %340 = vdwg.mxu0
      %341 = vmatpush.msra.mxu0 %v243
      %342 = vmatpush.msra.mxu0 %v239
      %343 = vmatpush.msra.mxu0 %v235
      %344 = vmatpush.msra.mxu0 %v231
      %345 = vmatpush.msra.mxu0 %v227
      %346 = vmatpush.msra.mxu0 %v223
      %347 = vmatpush.msra.mxu0 %v219
      %348 = vmatpush.msra.mxu0 %v215
      %349 = vmatpush.msra.mxu0 %v211
      %350 = vmatpush.msra.mxu0 %v207
      %351 = vmatpush.msra.mxu0 %v203
      %352 = vmatpush.msra.mxu0 %v199
      %353 = vmatpush.msra.mxu0 %v195
      %354 = vmatpush.msra.mxu0 %v191
      %355 = vmatpush.msra.mxu0 %v187
      %356 = vmatpush.msra.mxu0 %v183
      %357 = vmatmul.f32.gmra.mxu0 %v176
      %v358 = vpop.f32.mrf.mxu0
      %v359 = vadd.f32 %v249, %v358
      %360 = vmatmul.f32.gmra.mxu0 %v177
      %v361 = vpop.f32.mrf.mxu0
      %v362 = vadd.f32 %v249, %v361
      %363 = vmatmul.f32.gmra.mxu0 %v178
      %v364 = vpop.f32.mrf.mxu0
      %v365 = vadd.f32 %v249, %v364
      %366 = vmatmul.f32.gmra.mxu0 %v179
      %v367 = vpop.f32.mrf.mxu0
      %v368 = vadd.f32 %v249, %v367
      %369 = vdwg.mxu0
      %370 = vst [vmem:[%s174] sm:$0xff] %v272
      %371 = vst [vmem:[%s174 + $0x8] sm:$0xff] %v301
      %372 = vst [vmem:[%s174 + $0x10] sm:$0xff] %v330
      %373 = vst [vmem:[%s174 + $0x18] sm:$0xff] %v359
      %374 = vst [vmem:[%s174 + $0x20] sm:$0xff] %v275
      %375 = vst [vmem:[%s174 + $0x28] sm:$0xff] %v304
      %376 = vst [vmem:[%s174 + $0x30] sm:$0xff] %v333
      %377 = vst [vmem:[%s174 + $0x38] sm:$0xff] %v362
      %378 = vst [vmem:[%s174 + $0x40] sm:$0xff] %v278
      %379 = vst [vmem:[%s174 + $0x48] sm:$0xff] %v307
      %380 = vst [vmem:[%s174 + $0x50] sm:$0xff] %v336
      %381 = vst [vmem:[%s174 + $0x58] sm:$0xff] %v365
      %382 = vst [vmem:[%s174 + $0x60] sm:$0xff] %v281
      %383 = vst [vmem:[%s174 + $0x68] sm:$0xff] %v310
      %384 = vst [vmem:[%s174 + $0x70] sm:$0xff] %v339
      %385 = vst [vmem:[%s174 + $0x78] sm:$0xff] %v368
      %s386 = smul.u32 4, %s14
      %p387 = scmp.lt.s32.totalorder %s386, 11
      %s388 = scalar_select %p387, %s386, 11
      %s389 = smul.addr %s388, 4
      %s390 = smul.addr %s389, 8
      %s391 = scalar_lea.vmem %s3, %s390
      // Predicated region
      $region33: #{deep_batch_rnn_forward.6} parent=31 // pred_check
        %p392 = pneg %p100
      $region34: #{deep_batch_rnn_forward.6} parent=31 // pred_check_branch
        %394 = sbr.rel (%p392) target = $region36
      $region35: #{deep_batch_rnn_forward.6} parent=31 // pred_region
        %s395 = smul.u32 4, %s14
      $region36: #{deep_batch_rnn_forward.6} parent=31 // pred_fallthru
        _
    $region32: #{deep_batch_rnn_forward.6} parent=5 // pred_fallthru
      _
    %p396 = scmp.le.s32.totalorder 2, %s9
    // Predicated region
    $region37: #{deep_batch_rnn_forward.6} parent=5 // pred_check
      %p397 = pneg %p396
    $region38: #{deep_batch_rnn_forward.6} parent=5 // pred_check_branch
      %399 = sbr.rel (%p397) target = $region40
    $region39: #{deep_batch_rnn_forward.6} parent=5 // pred_region
      %s400 = ssub.s32 %s9, 2
      // Predicated region
      $region41: #{deep_batch_rnn_forward.6} parent=39 // pred_check
        %p401 = pneg %p106
      $region42: #{deep_batch_rnn_forward.6} parent=39 // pred_check_branch
        %403 = sbr.rel (%p401) target = $region44
      $region43: #{deep_batch_rnn_forward.6} parent=39 // pred_region
        %s404 = smul.u32 4, %s15
        %p405 = scmp.lt.s32.totalorder %s404, 11
        %s406 = scalar_select %p405, %s404, 11
        %s407 = smul.addr %s406, 4
        %s408 = smul.addr %s407, 8
        %s409 = scalar_lea.vmem %s3, %s408
      $region44: #{deep_batch_rnn_forward.6} parent=39 // pred_fallthru
        _
    $region40: #{deep_batch_rnn_forward.6} parent=5 // pred_fallthru
      _
  $region6: #{deep_batch_rnn_forward.6} parent=0 // loop_footer
    %s13 = sadd.s32 1, %s9
  $region7: #{deep_batch_rnn_forward.6} parent=0 // loop_footer_branch
    %8 = sbr.rel target = $region3
  $region8: #{deep_batch_rnn_forward.6} parent=0 // loop_exit
    _

// kernel: deep_batch_rnn_forward.7
$region0: #{deep_batch_rnn_forward.7}
  #allocation0 [shape = 'u32[]', space=smem, size = 0x4, offset = 0x4, fixed_abs, tag = 'smem constant byte address 0x4 - core index']
  #allocation1 [shape = 'u32[72,128]{1,0:T(1,128)}', space=vmem, size = 0x9000, scoped, tag = 'internal scratch']
  #allocation2 [shape = 'f32[8,128]{1,0:T(8,128)}', space=vmem, size = 0x1000, scoped, tag = 'scratch operand']
  #allocation3 [shape = 'f32[8,128]{1,0:T(8,128)}', space=vmem, size = 0x1000, scoped, tag = 'scratch operand']
  %s0 = inlined_call_operand.vmem [shape: f32[12,8,512], index: 0, kind: input, shape index: {}]
  %s1 = inlined_call_operand.vmem [shape: f32[128,512], index: 1, kind: input, shape index: {}]
  %s2 = inlined_call_operand.vmem [shape: s32[8,1], index: 2, kind: input, shape index: {}]
  %s3 = inlined_call_operand.vmem [shape: f32[12,8,128], index: 3, kind: output, shape index: {0}]
  %s4 = inlined_call_operand.vmem [shape: f32[2,128], index: 4, kind: output, shape index: {1}]
  %5 = xla_tuple %s3, %s4
  %s6 = sld [smem:[#allocation0]]
  $region57: #{deep_batch_rnn_forward.7} parent=0
    _
  %s8 = ssub.s32 1, %s6
  %s9 = scalar_select 0, %s8, %s6
  loop: start=0, step=1, limit=5
  $region2: #{deep_batch_rnn_forward.7} parent=0 // loop_pre_header
    _
  $region3: #{deep_batch_rnn_forward.7} parent=0 // loop_header
    %s11 = sphi 0, %s15
    %p12 = scmp.ge.s32.totalorder %s11, 5
    %s21 = sphi 0, %s23
    %s24 = sphi 0, %s21
    %s25 = sphi 0, %s24
    %s41 = sphi 0, %s25
    %s45 = sphi 0, %s45
    %s47 = sphi 0, %s45
    %s48 = sphi 0, %s47
    %s62 = sphi 0, %s48
    %s66 = sphi 0, %s66
    %s68 = sphi 0, %s66
    %s69 = sphi 0, %s68
    %s83 = sphi 0, %s69
    %s89 = sphi 0, %s91
    %s92 = sphi 0, %s89
    %s93 = sphi 0, %s92
    %s109 = sphi 0, %s93
    %s113 = sphi 0, %s113
    %s115 = sphi 0, %s113
    %s116 = sphi 0, %s115
    %s130 = sphi 0, %s116
  $region4: #{deep_batch_rnn_forward.7} parent=0 // loop_header_branch
    %14 = sbr.rel (%p12) target = $region8
  $region5: #{deep_batch_rnn_forward.7} parent=0 // loop_body
    %s16 = ssub.s32 %s11, 1
    %s17 = ssub.s32 %s11, 2
    %s18 = sadd.s32 %s11, 1
    %s19 = ssub.s32 %s11, %s18
    %p20 = scmp.eq.s32.totalorder %s19, 0
    %s22 = sadd.s32 %s21, 1
    %s23 = scalar_select %p20, %s21, %s22
    %p26 = pneg %p20
    %p27 = scmp.eq.s32.totalorder %s11, 2
    %p28 = por %p26, %p27
    %p29 = scmp.ne.s32.totalorder %s21, %s24
    %p30 = scmp.eq.s32.totalorder %s11, 0
    %p31 = por %p29, %p30
    %p32 = scmp.ne.s32.totalorder %s21, %s24
    %p33 = scmp.eq.s32.totalorder %s16, 2
    %p34 = por %p32, %p33
    %p35 = scmp.ne.s32.totalorder %s24, %s25
    %p36 = scmp.eq.s32.totalorder %s16, 0
    %p37 = por %p35, %p36
    %p38 = scmp.ne.s32.totalorder %s24, %s25
    %p39 = scmp.eq.s32.totalorder %s17, 2
    %p40 = por %p38, %p39
    %p42 = scmp.ne.s32.totalorder %s25, %s41
    %p43 = scmp.eq.s32.totalorder %s17, 0
    %p44 = por %p42, %p43
    %s46 = sadd.s32 %s45, 1
    %p49 = scmp.eq.s32.totalorder %s11, 2
    %p50 = scmp.ne.s32.totalorder %s45, %s47
    %p51 = scmp.eq.s32.totalorder %s11, 0
    %p52 = por %p50, %p51
    %p53 = scmp.ne.s32.totalorder %s45, %s47
    %p54 = scmp.eq.s32.totalorder %s16, 2
    %p55 = por %p53, %p54
    %p56 = scmp.ne.s32.totalorder %s47, %s48
    %p57 = scmp.eq.s32.totalorder %s16, 0
    %p58 = por %p56, %p57
    %p59 = scmp.ne.s32.totalorder %s47, %s48
    %p60 = scmp.eq.s32.totalorder %s17, 2
    %p61 = por %p59, %p60
    %p63 = scmp.ne.s32.totalorder %s48, %s62
    %p64 = scmp.eq.s32.totalorder %s17, 0
    %p65 = por %p63, %p64
    %s67 = sadd.s32 %s66, 1
    %p70 = scmp.eq.s32.totalorder %s11, 2
    %p71 = scmp.ne.s32.totalorder %s66, %s68
    %p72 = scmp.eq.s32.totalorder %s11, 0
    %p73 = por %p71, %p72
    %p74 = scmp.ne.s32.totalorder %s66, %s68
    %p75 = scmp.eq.s32.totalorder %s16, 2
    %p76 = por %p74, %p75
    %p77 = scmp.ne.s32.totalorder %s68, %s69
    %p78 = scmp.eq.s32.totalorder %s16, 0
    %p79 = por %p77, %p78
    %p80 = scmp.ne.s32.totalorder %s68, %s69
    %p81 = scmp.eq.s32.totalorder %s17, 2
    %p82 = por %p80, %p81
    %p84 = scmp.ne.s32.totalorder %s69, %s83
    %p85 = scmp.eq.s32.totalorder %s17, 0
    %p86 = por %p84, %p85
    %s87 = ssub.s32 %s11, %s18
    %p88 = scmp.eq.s32.totalorder %s87, 0
    %s90 = sadd.s32 %s89, 1
    %s91 = scalar_select %p88, %s89, %s90
    %p94 = pneg %p88
    %p95 = scmp.eq.s32.totalorder %s11, 2
    %p96 = por %p94, %p95
    %p97 = scmp.ne.s32.totalorder %s89, %s92
    %p98 = scmp.eq.s32.totalorder %s11, 0
    %p99 = por %p97, %p98
    %p100 = scmp.ne.s32.totalorder %s89, %s92
    %p101 = scmp.eq.s32.totalorder %s16, 2
    %p102 = por %p100, %p101
    %p103 = scmp.ne.s32.totalorder %s92, %s93
    %p104 = scmp.eq.s32.totalorder %s16, 0
    %p105 = por %p103, %p104
    %p106 = scmp.ne.s32.totalorder %s92, %s93
    %p107 = scmp.eq.s32.totalorder %s17, 2
    %p108 = por %p106, %p107
    %p110 = scmp.ne.s32.totalorder %s93, %s109
    %p111 = scmp.eq.s32.totalorder %s17, 0
    %p112 = por %p110, %p111
    %s114 = sadd.s32 %s113, 1
    %p117 = scmp.eq.s32.totalorder %s11, 2
    %p118 = scmp.ne.s32.totalorder %s113, %s115
    %p119 = scmp.eq.s32.totalorder %s11, 0
    %p120 = por %p118, %p119
    %p121 = scmp.ne.s32.totalorder %s113, %s115
    %p122 = scmp.eq.s32.totalorder %s16, 2
    %p123 = por %p121, %p122
    %p124 = scmp.ne.s32.totalorder %s115, %s116
    %p125 = scmp.eq.s32.totalorder %s16, 0
    %p126 = por %p124, %p125
    %p127 = scmp.ne.s32.totalorder %s115, %s116
    %p128 = scmp.eq.s32.totalorder %s17, 2
    %p129 = por %p127, %p128
    %p131 = scmp.ne.s32.totalorder %s116, %s130
    %p132 = scmp.eq.s32.totalorder %s17, 0
    %p133 = por %p131, %p132
    %p134 = scmp.le.s32.totalorder 1, %s11
    %p135 = scmp.lt.s32.totalorder %s11, 4
    %p136 = pnand %p134, %p135
    %p137 = pneg %p136
    // Predicated region
    $region9: #{deep_batch_rnn_forward.7} parent=5 // pred_check
      _
    $region10: #{deep_batch_rnn_forward.7} parent=5 // pred_check_branch
      %139 = sbr.rel (%p136) target = $region12
    $region11: #{deep_batch_rnn_forward.7} parent=5 // pred_region
      %s140 = ssub.s32 %s11, 1
      // Predicated region
      $region13: #{deep_batch_rnn_forward.7} parent=11 // pred_check
        %p141 = pneg %p58
      $region14: #{deep_batch_rnn_forward.7} parent=11 // pred_check_branch
        %143 = sbr.rel (%p141) target = $region16
      $region15: #{deep_batch_rnn_forward.7} parent=11 // pred_region
        _
      $region16: #{deep_batch_rnn_forward.7} parent=11 // pred_fallthru
        _
      // Predicated region
      $region17: #{deep_batch_rnn_forward.7} parent=11 // pred_check
        %p144 = pneg %p79
      $region18: #{deep_batch_rnn_forward.7} parent=11 // pred_check_branch
        %146 = sbr.rel (%p144) target = $region20
      $region19: #{deep_batch_rnn_forward.7} parent=11 // pred_region
        _
      $region20: #{deep_batch_rnn_forward.7} parent=11 // pred_fallthru
        _
    $region12: #{deep_batch_rnn_forward.7} parent=5 // pred_fallthru
      _
    %p147 = scmp.lt.s32.totalorder %s11, 3
    // Predicated region
    $region21: #{deep_batch_rnn_forward.7} parent=5 // pred_check
      %p148 = pneg %p147
    $region22: #{deep_batch_rnn_forward.7} parent=5 // pred_check_branch
      %150 = sbr.rel (%p148) target = $region24
    $region23: #{deep_batch_rnn_forward.7} parent=5 // pred_region
      // Predicated region
      $region25: #{deep_batch_rnn_forward.7} parent=23 // pred_check
        %p151 = pneg %p31
      $region26: #{deep_batch_rnn_forward.7} parent=23 // pred_check_branch
        %153 = sbr.rel (%p151) target = $region28
      $region27: #{deep_batch_rnn_forward.7} parent=23 // pred_region
        %s154 = smul.u32 4, %s11
        %p155 = scmp.lt.s32.totalorder %s154, 11
        %s156 = scalar_select %p155, %s154, 11
        %s157 = smul.addr %s156, 4
        %s158 = smul.addr %s157, 8
        %s159 = scalar_lea.vmem %s0, %s158
        %s160 = smul.u32 4, %s11
      $region28: #{deep_batch_rnn_forward.7} parent=23 // pred_fallthru
        _
    $region24: #{deep_batch_rnn_forward.7} parent=5 // pred_fallthru
      _
    %p161 = scmp.le.s32.totalorder 1, %s11
    %p162 = scmp.lt.s32.totalorder %s11, 4
    %p163 = pnand %p161, %p162
    %p164 = pneg %p163
    // Predicated region
    $region29: #{deep_batch_rnn_forward.7} parent=5 // pred_check
      _
    $region30: #{deep_batch_rnn_forward.7} parent=5 // pred_check_branch
      %166 = sbr.rel (%p163) target = $region32
    $region31: #{deep_batch_rnn_forward.7} parent=5 // pred_region
      %s167 = ssub.s32 %s11, 1
      %s168 = smul.u32 4, %s16
      %p169 = scmp.lt.s32.totalorder %s168, 11
      %s170 = scalar_select %p169, %s168, 11
      %s171 = smul.addr %s170, 4
      %s172 = smul.addr %s171, 8
      %s173 = scalar_lea.vmem %s0, %s172
      %p174 = pneg %p37
      %p175 = pneg %p34
      %p176 = pneg %p58
      %p177 = pneg %p55
      %p178 = pneg %p79
      %p179 = pneg %p76
      %p180 = pneg %p105
      %p181 = pneg %p102
      %s182 = smul.u32 4, %s16
      %p183 = scmp.lt.s32.totalorder %s182, 11
      %s184 = scalar_select %p183, %s182, 11
      %s185 = smul.addr %s184, 8
      %s186 = scalar_lea.vmem %s3, %s185
      %p187 = pneg %p126
      %p188 = pneg %p123
      %s189 = smul.u32 4, %s16
      %p190 = scmp.lt.s32.totalorder %s189, 11
      %s191 = scalar_select %p190, %s189, 11
      %s192 = smul.addr %s191, 4
      %s193 = smul.addr %s192, 8
      %s194 = scalar_lea.vmem %s0, %s193
      %s195 = smul.u32 4, %s16
      %s196 = smul.u32 4, %s16
      %p197 = scmp.lt.s32.totalorder %s196, 11
      %s198 = scalar_select %p197, %s196, 11
      %s199 = smul.addr %s198, 8
      %s200 = scalar_lea.vmem %s3, %s199
      %s201 = smul.u32 4, %s16
      %p202 = scmp.eq.s32.totalorder %s16, 0
      // Predicated region
      $region33: #{deep_batch_rnn_forward.7} parent=31 // pred_check
        %p203 = pneg %p202
      $region34: #{deep_batch_rnn_forward.7} parent=31 // pred_check_branch
        %205 = sbr.rel (%p203) target = $region36
      $region35: #{deep_batch_rnn_forward.7} parent=31 // pred_region
        %206 = vst [vmem:[#allocation2] sm:$0xff] 0.0
        %207 = vst [vmem:[#allocation3] sm:$0xff] 0.0
        %208 = vst [vmem:[%s4] sm:$0x3] 0.0
      $region36: #{deep_batch_rnn_forward.7} parent=31 // pred_fallthru
        _
      %v209 = vld [vmem:[%s2] sm:$0xff]
      %v210 = vld [vmem:[#allocation2] sm:$0xff]
      %v211 = vld [vmem:[#allocation3] sm:$0xff]
      %v212 = vld [vmem:[%s194] sm:$0xff]
      %v213 = vld [vmem:[%s194 + $0x8] sm:$0xff]
      %v214 = vld [vmem:[%s194 + $0x10] sm:$0xff]
      %v215 = vld [vmem:[%s194 + $0x18] sm:$0xff]
      %v216 = vld [vmem:[%s1] sm:$0xff]
      %v217 = vld [vmem:[%s1 + $0x8] sm:$0xff]
      %v218 = vld [vmem:[%s1 + $0x10] sm:$0xff]
      %v219 = vld [vmem:[%s1 + $0x18] sm:$0xff]
      %v220 = vld [vmem:[%s1 + $0x20] sm:$0xff]
      %v221 = vld [vmem:[%s1 + $0x28] sm:$0xff]
      %v222 = vld [vmem:[%s1 + $0x30] sm:$0xff]
      %v223 = vld [vmem:[%s1 + $0x38] sm:$0xff]
      %v224 = vld [vmem:[%s1 + $0x40] sm:$0xff]
      %v225 = vld [vmem:[%s1 + $0x48] sm:$0xff]
      %v226 = vld [vmem:[%s1 + $0x50] sm:$0xff]
      %v227 = vld [vmem:[%s1 + $0x58] sm:$0xff]
      %v228 = vld [vmem:[%s1 + $0x60] sm:$0xff]
      %v229 = vld [vmem:[%s1 + $0x68] sm:$0xff]
      %v230 = vld [vmem:[%s1 + $0x70] sm:$0xff]
      %v231 = vld [vmem:[%s1 + $0x78] sm:$0xff]
      %v232 = vld [vmem:[%s1 + $0x80] sm:$0xff]
      %v233 = vld [vmem:[%s1 + $0x88] sm:$0xff]
      %v234 = vld [vmem:[%s1 + $0x90] sm:$0xff]
      %v235 = vld [vmem:[%s1 + $0x98] sm:$0xff]
      %v236 = vld [vmem:[%s1 + $0xa0] sm:$0xff]
      %v237 = vld [vmem:[%s1 + $0xa8] sm:$0xff]
      %v238 = vld [vmem:[%s1 + $0xb0] sm:$0xff]
      %v239 = vld [vmem:[%s1 + $0xb8] sm:$0xff]
      %v240 = vld [vmem:[%s1 + $0xc0] sm:$0xff]
      %v241 = vld [vmem:[%s1 + $0xc8] sm:$0xff]
      %v242 = vld [vmem:[%s1 + $0xd0] sm:$0xff]
      %v243 = vld [vmem:[%s1 + $0xd8] sm:$0xff]
      %v244 = vld [vmem:[%s1 + $0xe0] sm:$0xff]
      %v245 = vld [vmem:[%s1 + $0xe8] sm:$0xff]
      %v246 = vld [vmem:[%s1 + $0xf0] sm:$0xff]
      %v247 = vld [vmem:[%s1 + $0xf8] sm:$0xff]
      %v248 = vld [vmem:[%s1 + $0x100] sm:$0xff]
      %v249 = vld [vmem:[%s1 + $0x108] sm:$0xff]
      %v250 = vld [vmem:[%s1 + $0x110] sm:$0xff]
      %v251 = vld [vmem:[%s1 + $0x118] sm:$0xff]
      %v252 = vld [vmem:[%s1 + $0x120] sm:$0xff]
      %v253 = vld [vmem:[%s1 + $0x128] sm:$0xff]
      %v254 = vld [vmem:[%s1 + $0x130] sm:$0xff]
      %v255 = vld [vmem:[%s1 + $0x138] sm:$0xff]
      %v256 = vld [vmem:[%s1 + $0x140] sm:$0xff]
      %v257 = vld [vmem:[%s1 + $0x148] sm:$0xff]
      %v258 = vld [vmem:[%s1 + $0x150] sm:$0xff]
      %v259 = vld [vmem:[%s1 + $0x158] sm:$0xff]
      %v260 = vld [vmem:[%s1 + $0x160] sm:$0xff]
      %v261 = vld [vmem:[%s1 + $0x168] sm:$0xff]
      %v262 = vld [vmem:[%s1 + $0x170] sm:$0xff]
      %v263 = vld [vmem:[%s1 + $0x178] sm:$0xff]
      %v264 = vld [vmem:[%s1 + $0x180] sm:$0xff]
      %v265 = vld [vmem:[%s1 + $0x188] sm:$0xff]
      %v266 = vld [vmem:[%s1 + $0x190] sm:$0xff]
      %v267 = vld [vmem:[%s1 + $0x198] sm:$0xff]
      %v268 = vld [vmem:[%s1 + $0x1a0] sm:$0xff]
      %v269 = vld [vmem:[%s1 + $0x1a8] sm:$0xff]
      %v270 = vld [vmem:[%s1 + $0x1b0] sm:$0xff]
      %v271 = vld [vmem:[%s1 + $0x1b8] sm:$0xff]
      %v272 = vld [vmem:[%s1 + $0x1c0] sm:$0xff]
      %v273 = vld [vmem:[%s1 + $0x1c8] sm:$0xff]
      %v274 = vld [vmem:[%s1 + $0x1d0] sm:$0xff]
      %v275 = vld [vmem:[%s1 + $0x1d8] sm:$0xff]
      %v276 = vld [vmem:[%s1 + $0x1e0] sm:$0xff]
      %v277 = vld [vmem:[%s1 + $0x1e8] sm:$0xff]
      %v278 = vld [vmem:[%s1 + $0x1f0] sm:$0xff]
      %v279 = vld [vmem:[%s1 + $0x1f8] sm:$0xff]
      %280 = vmatpush.msra.mxu0 %v276
      %281 = vmatpush.msra.mxu0 %v272
      %282 = vmatpush.msra.mxu0 %v268
      %283 = vmatpush.msra.mxu0 %v264
      %284 = vmatpush.msra.mxu0 %v260
      %285 = vmatpush.msra.mxu0 %v256
      %286 = vmatpush.msra.mxu0 %v252
      %287 = vmatpush.msra.mxu0 %v248
      %288 = vmatpush.msra.mxu0 %v244
      %289 = vmatpush.msra.mxu0 %v240
      %290 = vmatpush.msra.mxu0 %v236
      %291 = vmatpush.msra.mxu0 %v232
      %292 = vmatpush.msra.mxu0 %v228
      %293 = vmatpush.msra.mxu0 %v224
      %294 = vmatpush.msra.mxu0 %v220
      %295 = vmatpush.msra.mxu0 %v216
      %296 = vmatmul.f32.gmra.mxu0 %v210
      %v297 = vpop.f32.mrf.mxu0
      %v298 = vadd.f32 0.0, %v297
      %299 = vdwg.mxu0
      %300 = vmatpush.msra.mxu0 %v277
      %301 = vmatpush.msra.mxu0 %v273
      %302 = vmatpush.msra.mxu0 %v269
      %303 = vmatpush.msra.mxu0 %v265
      %304 = vmatpush.msra.mxu0 %v261
      %305 = vmatpush.msra.mxu0 %v257
      %306 = vmatpush.msra.mxu0 %v253
      %307 = vmatpush.msra.mxu0 %v249
      %308 = vmatpush.msra.mxu0 %v245
      %309 = vmatpush.msra.mxu0 %v241
      %310 = vmatpush.msra.mxu0 %v237
      %311 = vmatpush.msra.mxu0 %v233
      %312 = vmatpush.msra.mxu0 %v229
      %313 = vmatpush.msra.mxu0 %v225
      %314 = vmatpush.msra.mxu0 %v221
      %315 = vmatpush.msra.mxu0 %v217
      %316 = vmatmul.f32.gmra.mxu0 %v210
      %v317 = vpop.f32.mrf.mxu0
      %v318 = vadd.f32 0.0, %v317
      %319 = vdwg.mxu0
      %320 = vmatpush.msra.mxu0 %v278
      %321 = vmatpush.msra.mxu0 %v274
      %322 = vmatpush.msra.mxu0 %v270
      %323 = vmatpush.msra.mxu0 %v266
      %324 = vmatpush.msra.mxu0 %v262
      %325 = vmatpush.msra.mxu0 %v258
      %326 = vmatpush.msra.mxu0 %v254
      %327 = vmatpush.msra.mxu0 %v250
      %328 = vmatpush.msra.mxu0 %v246
      %329 = vmatpush.msra.mxu0 %v242
      %330 = vmatpush.msra.mxu0 %v238
      %331 = vmatpush.msra.mxu0 %v234
      %332 = vmatpush.msra.mxu0 %v230
      %333 = vmatpush.msra.mxu0 %v226
      %334 = vmatpush.msra.mxu0 %v222
      %335 = vmatpush.msra.mxu0 %v218
      %336 = vmatmul.f32.gmra.mxu0 %v210
      %v337 = vpop.f32.mrf.mxu0
      %v338 = vadd.f32 0.0, %v337
      %339 = vdwg.mxu0
      %340 = vmatpush.msra.mxu0 %v279
      %341 = vmatpush.msra.mxu0 %v275
      %342 = vmatpush.msra.mxu0 %v271
      %343 = vmatpush.msra.mxu0 %v267
      %344 = vmatpush.msra.mxu0 %v263
      %345 = vmatpush.msra.mxu0 %v259
      %346 = vmatpush.msra.mxu0 %v255
      %347 = vmatpush.msra.mxu0 %v251
      %348 = vmatpush.msra.mxu0 %v247
      %349 = vmatpush.msra.mxu0 %v243
      %350 = vmatpush.msra.mxu0 %v239
      %351 = vmatpush.msra.mxu0 %v235
      %352 = vmatpush.msra.mxu0 %v231
      %353 = vmatpush.msra.mxu0 %v227
      %354 = vmatpush.msra.mxu0 %v223
      %355 = vmatpush.msra.mxu0 %v219
      %356 = vmatmul.f32.gmra.mxu0 %v210
      %v357 = vpop.f32.mrf.mxu0
      %v358 = vadd.f32 0.0, %v357
      %359 = vdwg.mxu0
      %v360 = vadd.f32 %v212, %v298
      %v361 = vadd.f32 %v213, %v318
      %v362 = vadd.f32 %v214, %v338
      %v363 = vadd.f32 %v215, %v358
      %v364 = vxor.u32 %v360, 2147483648
      %v365 = vmul.f32 %v364, 1.442695
      %v366 = vpow.pop %v365
      %v367 = vadd.f32 %v366, 1.0
      %v368 = vrcp.pop %v367
      %v369 = vmul.f32 %v367, %v368
      %v370 = vsub.f32 1.0, %v369
      %v371 = vmul.f32 %v368, %v370
      %v372 = vadd.f32 %v368, %v371
      %vm373 = vweird.f32 %v367
      %vm374 = vweird.f32 %v368
      %vm375 = vmor %vm373, %vm374
      %v376 = vsel %vm375, %v368, %v372
      %v377 = vand.u32 2147483647, %v367
      %vm378 = vcmp.eq.f32.partialorder %v377, 8.507059e+37
      %v379 = vand.u32 %v367, 2147483648
      %v380 = vor.u32 1.1754944e-38, %v379
      %v381 = vsel %vm378, %v380, %v376
      %v382 = vmul.f32 1.0, %v381
      %v383 = vxor.u32 %v361, 2147483648
      %v384 = vmul.f32 %v383, 1.442695
      %v385 = vpow.pop %v384
      %v386 = vadd.f32 %v385, 1.0
      %v387 = vrcp.pop %v386
      %v388 = vmul.f32 %v386, %v387
      %v389 = vsub.f32 1.0, %v388
      %v390 = vmul.f32 %v387, %v389
      %v391 = vadd.f32 %v387, %v390
      %vm392 = vweird.f32 %v386
      %vm393 = vweird.f32 %v387
      %vm394 = vmor %vm392, %vm393
      %v395 = vsel %vm394, %v387, %v391
      %v396 = vand.u32 2147483647, %v386
      %vm397 = vcmp.eq.f32.partialorder %v396, 8.507059e+37
      %v398 = vand.u32 %v386, 2147483648
      %v399 = vor.u32 1.1754944e-38, %v398
      %v400 = vsel %vm397, %v399, %v395
      %v401 = vmul.f32 1.0, %v400
      %v402 = vtanh.pop %v362
      %v403 = vxor.u32 %v363, 2147483648
      %v404 = vmul.f32 %v403, 1.442695
      %v405 = vpow.pop %v404
      %v406 = vadd.f32 %v405, 1.0
      %v407 = vrcp.pop %v406
      %v408 = vmul.f32 %v406, %v407
      %v409 = vsub.f32 1.0, %v408
      %v410 = vmul.f32 %v407, %v409
      %v411 = vadd.f32 %v407, %v410
      %vm412 = vweird.f32 %v406
      %vm413 = vweird.f32 %v407
      %vm414 = vmor %vm412, %vm413
      %v415 = vsel %vm414, %v407, %v411
      %v416 = vand.u32 2147483647, %v406
      %vm417 = vcmp.eq.f32.partialorder %v416, 8.507059e+37
      %v418 = vand.u32 %v406, 2147483648
      %v419 = vor.u32 1.1754944e-38, %v418
      %v420 = vsel %vm417, %v419, %v415
      %v421 = vmul.f32 1.0, %v420
      %v422 = vmul.f32 %v401, %v211
      %v423 = vmul.f32 %v382, %v402
      %v424 = vadd.f32 %v422, %v423
      %v425 = vtanh.pop %v424
      %v426 = vmul.f32 %v421, %v425
      %s427 = smul.u32 %s16, 4
      %v428 = vstv %s427
      %vm429 = vcmp.lt.s32.totalorder %v428, %v209
      %v430 = vsel %vm429, 1, 0
      %431 = vset.pattern.permute.xlu0 0
      %432 = vperm.xlu0 %431, %v430
      %v433 = vpop.permute.xlu0 %432
      %vm434 = vcmp.eq.s32.totalorder %v433, 1
      %v435 = vsel %vm434, %v426, 0.0
      %436 = vst [vmem:[%s200] sm:$0xff] %v435
      %v437 = vrot.slane %v435, 4
      %v438 = vadd.f32 %v435, %v437
      %v439 = vrot.slane %v438, 2
      %v440 = vadd.f32 %v438, %v439
      %v441 = vrot.slane %v440, 1
      %v442 = vadd.f32 %v440, %v441
      %v443 = vadd.f32 %v442, 0.0
      %v444 = vmul.f32 %v435, %v435
      %v445 = vrot.slane %v444, 4
      %v446 = vadd.f32 %v444, %v445
      %v447 = vrot.slane %v446, 2
      %v448 = vadd.f32 %v446, %v447
      %v449 = vrot.slane %v448, 1
      %v450 = vadd.f32 %v448, %v449
      %v451 = vadd.f32 %v450, 0.0
      %s452 = scalar_lea.vmem %s194, 32
      %v453 = vld [vmem:[%s452] sm:$0xff]
      %v454 = vld [vmem:[%s452 + $0x8] sm:$0xff]
      %v455 = vld [vmem:[%s452 + $0x10] sm:$0xff]
      %v456 = vld [vmem:[%s452 + $0x18] sm:$0xff]
      %v457 = vld [vmem:[%s1] sm:$0xff]
      %v458 = vld [vmem:[%s1 + $0x8] sm:$0xff]
      %v459 = vld [vmem:[%s1 + $0x10] sm:$0xff]
      %v460 = vld [vmem:[%s1 + $0x18] sm:$0xff]
      %v461 = vld [vmem:[%s1 + $0x20] sm:$0xff]
      %v462 = vld [vmem:[%s1 + $0x28] sm:$0xff]
      %v463 = vld [vmem:[%s1 + $0x30] sm:$0xff]
      %v464 = vld [vmem:[%s1 + $0x38] sm:$0xff]
      %v465 = vld [vmem:[%s1 + $0x40] sm:$0xff]
      %v466 = vld [vmem:[%s1 + $0x48] sm:$0xff]
      %v467 = vld [vmem:[%s1 + $0x50] sm:$0xff]
      %v468 = vld [vmem:[%s1 + $0x58] sm:$0xff]
      %v469 = vld [vmem:[%s1 + $0x60] sm:$0xff]
      %v470 = vld [vmem:[%s1 + $0x68] sm:$0xff]
      %v471 = vld [vmem:[%s1 + $0x70] sm:$0xff]
      %v472 = vld [vmem:[%s1 + $0x78] sm:$0xff]
      %v473 = vld [vmem:[%s1 + $0x80] sm:$0xff]
      %v474 = vld [vmem:[%s1 + $0x88] sm:$0xff]
      %v475 = vld [vmem:[%s1 + $0x90] sm:$0xff]
      %v476 = vld [vmem:[%s1 + $0x98] sm:$0xff]
      %v477 = vld [vmem:[%s1 + $0xa0] sm:$0xff]
      %v478 = vld [vmem:[%s1 + $0xa8] sm:$0xff]
      %v479 = vld [vmem:[%s1 + $0xb0] sm:$0xff]
      %v480 = vld [vmem:[%s1 + $0xb8] sm:$0xff]
      %v481 = vld [vmem:[%s1 + $0xc0] sm:$0xff]
      %v482 = vld [vmem:[%s1 + $0xc8] sm:$0xff]
      %v483 = vld [vmem:[%s1 + $0xd0] sm:$0xff]
      %v484 = vld [vmem:[%s1 + $0xd8] sm:$0xff]
      %v485 = vld [vmem:[%s1 + $0xe0] sm:$0xff]
      %v486 = vld [vmem:[%s1 + $0xe8] sm:$0xff]
      %v487 = vld [vmem:[%s1 + $0xf0] sm:$0xff]
      %v488 = vld [vmem:[%s1 + $0xf8] sm:$0xff]
      %v489 = vld [vmem:[%s1 + $0x100] sm:$0xff]
      %v490 = vld [vmem:[%s1 + $0x108] sm:$0xff]
      %v491 = vld [vmem:[%s1 + $0x110] sm:$0xff]
      %v492 = vld [vmem:[%s1 + $0x118] sm:$0xff]
      %v493 = vld [vmem:[%s1 + $0x120] sm:$0xff]
      %v494 = vld [vmem:[%s1 + $0x128] sm:$0xff]
      %v495 = vld [vmem:[%s1 + $0x130] sm:$0xff]
      %v496 = vld [vmem:[%s1 + $0x138] sm:$0xff]
      %v497 = vld [vmem:[%s1 + $0x140] sm:$0xff]
      %v498 = vld [vmem:[%s1 + $0x148] sm:$0xff]
      %v499 = vld [vmem:[%s1 + $0x150] sm:$0xff]
      %v500 = vld [vmem:[%s1 + $0x158] sm:$0xff]
      %v501 = vld [vmem:[%s1 + $0x160] sm:$0xff]
      %v502 = vld [vmem:[%s1 + $0x168] sm:$0xff]
      %v503 = vld [vmem:[%s1 + $0x170] sm:$0xff]
      %v504 = vld [vmem:[%s1 + $0x178] sm:$0xff]
      %v505 = vld [vmem:[%s1 + $0x180] sm:$0xff]
      %v506 = vld [vmem:[%s1 + $0x188] sm:$0xff]
      %v507 = vld [vmem:[%s1 + $0x190] sm:$0xff]
      %v508 = vld [vmem:[%s1 + $0x198] sm:$0xff]
      %v509 = vld [vmem:[%s1 + $0x1a0] sm:$0xff]
      %v510 = vld [vmem:[%s1 + $0x1a8] sm:$0xff]
      %v511 = vld [vmem:[%s1 + $0x1b0] sm:$0xff]
      %v512 = vld [vmem:[%s1 + $0x1b8] sm:$0xff]
      %v513 = vld [vmem:[%s1 + $0x1c0] sm:$0xff]
      %v514 = vld [vmem:[%s1 + $0x1c8] sm:$0xff]
      %v515 = vld [vmem:[%s1 + $0x1d0] sm:$0xff]
      %v516 = vld [vmem:[%s1 + $0x1d8] sm:$0xff]
      %v517 = vld [vmem:[%s1 + $0x1e0] sm:$0xff]
      %v518 = vld [vmem:[%s1 + $0x1e8] sm:$0xff]
      %v519 = vld [vmem:[%s1 + $0x1f0] sm:$0xff]
      %v520 = vld [vmem:[%s1 + $0x1f8] sm:$0xff]
      %521 = vmatpush.msra.mxu0 %v517
      %522 = vmatpush.msra.mxu0 %v513
      %523 = vmatpush.msra.mxu0 %v509
      %524 = vmatpush.msra.mxu0 %v505
      %525 = vmatpush.msra.mxu0 %v501
      %526 = vmatpush.msra.mxu0 %v497
      %527 = vmatpush.msra.mxu0 %v493
      %528 = vmatpush.msra.mxu0 %v489
      %529 = vmatpush.msra.mxu0 %v485
      %530 = vmatpush.msra.mxu0 %v481
      %531 = vmatpush.msra.mxu0 %v477
      %532 = vmatpush.msra.mxu0 %v473
      %533 = vmatpush.msra.mxu0 %v469
      %534 = vmatpush.msra.mxu0 %v465
      %535 = vmatpush.msra.mxu0 %v461
      %536 = vmatpush.msra.mxu0 %v457
      %537 = vmatmul.f32.gmra.mxu0 %v426
      %v538 = vpop.f32.mrf.mxu0
      %v539 = vadd.f32 0.0, %v538
      %540 = vdwg.mxu0
      %541 = vmatpush.msra.mxu0 %v518
      %542 = vmatpush.msra.mxu0 %v514
      %543 = vmatpush.msra.mxu0 %v510
      %544 = vmatpush.msra.mxu0 %v506
      %545 = vmatpush.msra.mxu0 %v502
      %546 = vmatpush.msra.mxu0 %v498
      %547 = vmatpush.msra.mxu0 %v494
      %548 = vmatpush.msra.mxu0 %v490
      %549 = vmatpush.msra.mxu0 %v486
      %550 = vmatpush.msra.mxu0 %v482
      %551 = vmatpush.msra.mxu0 %v478
      %552 = vmatpush.msra.mxu0 %v474
      %553 = vmatpush.msra.mxu0 %v470
      %554 = vmatpush.msra.mxu0 %v466
      %555 = vmatpush.msra.mxu0 %v462
      %556 = vmatpush.msra.mxu0 %v458
      %557 = vmatmul.f32.gmra.mxu0 %v426
      %v558 = vpop.f32.mrf.mxu0
      %v559 = vadd.f32 0.0, %v558
      %560 = vdwg.mxu0
      %561 = vmatpush.msra.mxu0 %v519
      %562 = vmatpush.msra.mxu0 %v515
      %563 = vmatpush.msra.mxu0 %v511
      %564 = vmatpush.msra.mxu0 %v507
      %565 = vmatpush.msra.mxu0 %v503
      %566 = vmatpush.msra.mxu0 %v499
      %567 = vmatpush.msra.mxu0 %v495
      %568 = vmatpush.msra.mxu0 %v491
      %569 = vmatpush.msra.mxu0 %v487
      %570 = vmatpush.msra.mxu0 %v483
      %571 = vmatpush.msra.mxu0 %v479
      %572 = vmatpush.msra.mxu0 %v475
      %573 = vmatpush.msra.mxu0 %v471
      %574 = vmatpush.msra.mxu0 %v467
      %575 = vmatpush.msra.mxu0 %v463
      %576 = vmatpush.msra.mxu0 %v459
      %577 = vmatmul.f32.gmra.mxu0 %v426
      %v578 = vpop.f32.mrf.mxu0
      %v579 = vadd.f32 0.0, %v578
      %580 = vdwg.mxu0
      %581 = vmatpush.msra.mxu0 %v520
      %582 = vmatpush.msra.mxu0 %v516
      %583 = vmatpush.msra.mxu0 %v512
      %584 = vmatpush.msra.mxu0 %v508
      %585 = vmatpush.msra.mxu0 %v504
      %586 = vmatpush.msra.mxu0 %v500
      %587 = vmatpush.msra.mxu0 %v496
      %588 = vmatpush.msra.mxu0 %v492
      %589 = vmatpush.msra.mxu0 %v488
      %590 = vmatpush.msra.mxu0 %v484
      %591 = vmatpush.msra.mxu0 %v480
      %592 = vmatpush.msra.mxu0 %v476
      %593 = vmatpush.msra.mxu0 %v472
      %594 = vmatpush.msra.mxu0 %v468
      %595 = vmatpush.msra.mxu0 %v464
      %596 = vmatpush.msra.mxu0 %v460
      %597 = vmatmul.f32.gmra.mxu0 %v426
      %v598 = vpop.f32.mrf.mxu0
      %v599 = vadd.f32 0.0, %v598
      %600 = vdwg.mxu0
      %v601 = vadd.f32 %v453, %v539
      %v602 = vadd.f32 %v454, %v559
      %v603 = vadd.f32 %v455, %v579
      %v604 = vadd.f32 %v456, %v599
      %v605 = vxor.u32 %v601, 2147483648
      %v606 = vmul.f32 %v605, 1.442695
      %v607 = vpow.pop %v606
      %v608 = vadd.f32 %v607, 1.0
      %v609 = vrcp.pop %v608
      %v610 = vmul.f32 %v608, %v609
      %v611 = vsub.f32 1.0, %v610
      %v612 = vmul.f32 %v609, %v611
      %v613 = vadd.f32 %v609, %v612
      %vm614 = vweird.f32 %v608
      %vm615 = vweird.f32 %v609
      %vm616 = vmor %vm614, %vm615
      %v617 = vsel %vm616, %v609, %v613
      %v618 = vand.u32 2147483647, %v608
      %vm619 = vcmp.eq.f32.partialorder %v618, 8.507059e+37
      %v620 = vand.u32 %v608, 2147483648
      %v621 = vor.u32 1.1754944e-38, %v620
      %v622 = vsel %vm619, %v621, %v617
      %v623 = vmul.f32 1.0, %v622
      %v624 = vxor.u32 %v602, 2147483648
      %v625 = vmul.f32 %v624, 1.442695
      %v626 = vpow.pop %v625
      %v627 = vadd.f32 %v626, 1.0
      %v628 = vrcp.pop %v627
      %v629 = vmul.f32 %v627, %v628
      %v630 = vsub.f32 1.0, %v629
      %v631 = vmul.f32 %v628, %v630
      %v632 = vadd.f32 %v628, %v631
      %vm633 = vweird.f32 %v627
      %vm634 = vweird.f32 %v628
      %vm635 = vmor %vm633, %vm634
      %v636 = vsel %vm635, %v628, %v632
      %v637 = vand.u32 2147483647, %v627
      %vm638 = vcmp.eq.f32.partialorder %v637, 8.507059e+37
      %v639 = vand.u32 %v627, 2147483648
      %v640 = vor.u32 1.1754944e-38, %v639
      %v641 = vsel %vm638, %v640, %v636
      %v642 = vmul.f32 1.0, %v641
      %v643 = vtanh.pop %v603
      %v644 = vxor.u32 %v604, 2147483648
      %v645 = vmul.f32 %v644, 1.442695
      %v646 = vpow.pop %v645
      %v647 = vadd.f32 %v646, 1.0
      %v648 = vrcp.pop %v647
      %v649 = vmul.f32 %v647, %v648
      %v650 = vsub.f32 1.0, %v649
      %v651 = vmul.f32 %v648, %v650
      %v652 = vadd.f32 %v648, %v651
      %vm653 = vweird.f32 %v647
      %vm654 = vweird.f32 %v648
      %vm655 = vmor %vm653, %vm654
      %v656 = vsel %vm655, %v648, %v652
      %v657 = vand.u32 2147483647, %v647
      %vm658 = vcmp.eq.f32.partialorder %v657, 8.507059e+37
      %v659 = vand.u32 %v647, 2147483648
      %v660 = vor.u32 1.1754944e-38, %v659
      %v661 = vsel %vm658, %v660, %v656
      %v662 = vmul.f32 1.0, %v661
      %v663 = vmul.f32 %v642, %v424
      %v664 = vmul.f32 %v623, %v643
      %v665 = vadd.f32 %v663, %v664
      %v666 = vtanh.pop %v665
      %v667 = vmul.f32 %v662, %v666
      %s668 = sadd.s32 %s427, 1
      %v669 = vstv %s668
      %vm670 = vcmp.lt.s32.totalorder %v669, %v209
      %v671 = vsel %vm670, 1, 0
      %672 = vset.pattern.permute.xlu0 0
      %673 = vperm.xlu0 %672, %v671
      %v674 = vpop.permute.xlu0 %673
      %vm675 = vcmp.eq.s32.totalorder %v674, 1
      %v676 = vsel %vm675, %v667, 0.0
      %s677 = scalar_lea.vmem %s200, 8
      %678 = vst [vmem:[%s677] sm:$0xff] %v676
      %v679 = vrot.slane %v676, 4
      %v680 = vadd.f32 %v676, %v679
      %v681 = vrot.slane %v680, 2
      %v682 = vadd.f32 %v680, %v681
      %v683 = vrot.slane %v682, 1
      %v684 = vadd.f32 %v682, %v683
      %v685 = vadd.f32 %v443, %v684
      %v686 = vmul.f32 %v676, %v676
      %v687 = vrot.slane %v686, 4
      %v688 = vadd.f32 %v686, %v687
      %v689 = vrot.slane %v688, 2
      %v690 = vadd.f32 %v688, %v689
      %v691 = vrot.slane %v690, 1
      %v692 = vadd.f32 %v690, %v691
      %v693 = vadd.f32 %v451, %v692
      %s694 = scalar_lea.vmem %s194, 64
      %v695 = vld [vmem:[%s694] sm:$0xff]
      %v696 = vld [vmem:[%s694 + $0x8] sm:$0xff]
      %v697 = vld [vmem:[%s694 + $0x10] sm:$0xff]
      %v698 = vld [vmem:[%s694 + $0x18] sm:$0xff]
      %v699 = vld [vmem:[%s1] sm:$0xff]
      %v700 = vld [vmem:[%s1 + $0x8] sm:$0xff]
      %v701 = vld [vmem:[%s1 + $0x10] sm:$0xff]
      %v702 = vld [vmem:[%s1 + $0x18] sm:$0xff]
      %v703 = vld [vmem:[%s1 + $0x20] sm:$0xff]
      %v704 = vld [vmem:[%s1 + $0x28] sm:$0xff]
      %v705 = vld [vmem:[%s1 + $0x30] sm:$0xff]
      %v706 = vld [vmem:[%s1 + $0x38] sm:$0xff]
      %v707 = vld [vmem:[%s1 + $0x40] sm:$0xff]
      %v708 = vld [vmem:[%s1 + $0x48] sm:$0xff]
      %v709 = vld [vmem:[%s1 + $0x50] sm:$0xff]
      %v710 = vld [vmem:[%s1 + $0x58] sm:$0xff]
      %v711 = vld [vmem:[%s1 + $0x60] sm:$0xff]
      %v712 = vld [vmem:[%s1 + $0x68] sm:$0xff]
      %v713 = vld [vmem:[%s1 + $0x70] sm:$0xff]
      %v714 = vld [vmem:[%s1 + $0x78] sm:$0xff]
      %v715 = vld [vmem:[%s1 + $0x80] sm:$0xff]
      %v716 = vld [vmem:[%s1 + $0x88] sm:$0xff]
      %v717 = vld [vmem:[%s1 + $0x90] sm:$0xff]
      %v718 = vld [vmem:[%s1 + $0x98] sm:$0xff]
      %v719 = vld [vmem:[%s1 + $0xa0] sm:$0xff]
      %v720 = vld [vmem:[%s1 + $0xa8] sm:$0xff]
      %v721 = vld [vmem:[%s1 + $0xb0] sm:$0xff]
      %v722 = vld [vmem:[%s1 + $0xb8] sm:$0xff]
      %v723 = vld [vmem:[%s1 + $0xc0] sm:$0xff]
      %v724 = vld [vmem:[%s1 + $0xc8] sm:$0xff]
      %v725 = vld [vmem:[%s1 + $0xd0] sm:$0xff]
      %v726 = vld [vmem:[%s1 + $0xd8] sm:$0xff]
      %v727 = vld [vmem:[%s1 + $0xe0] sm:$0xff]
      %v728 = vld [vmem:[%s1 + $0xe8] sm:$0xff]
      %v729 = vld [vmem:[%s1 + $0xf0] sm:$0xff]
      %v730 = vld [vmem:[%s1 + $0xf8] sm:$0xff]
      %v731 = vld [vmem:[%s1 + $0x100] sm:$0xff]
      %v732 = vld [vmem:[%s1 + $0x108] sm:$0xff]
      %v733 = vld [vmem:[%s1 + $0x110] sm:$0xff]
      %v734 = vld [vmem:[%s1 + $0x118] sm:$0xff]
      %v735 = vld [vmem:[%s1 + $0x120] sm:$0xff]
      %v736 = vld [vmem:[%s1 + $0x128] sm:$0xff]
      %v737 = vld [vmem:[%s1 + $0x130] sm:$0xff]
      %v738 = vld [vmem:[%s1 + $0x138] sm:$0xff]
      %v739 = vld [vmem:[%s1 + $0x140] sm:$0xff]
      %v740 = vld [vmem:[%s1 + $0x148] sm:$0xff]
      %v741 = vld [vmem:[%s1 + $0x150] sm:$0xff]
      %v742 = vld [vmem:[%s1 + $0x158] sm:$0xff]
      %v743 = vld [vmem:[%s1 + $0x160] sm:$0xff]
      %v744 = vld [vmem:[%s1 + $0x168] sm:$0xff]
      %v745 = vld [vmem:[%s1 + $0x170] sm:$0xff]
      %v746 = vld [vmem:[%s1 + $0x178] sm:$0xff]
      %v747 = vld [vmem:[%s1 + $0x180] sm:$0xff]
      %v748 = vld [vmem:[%s1 + $0x188] sm:$0xff]
      %v749 = vld [vmem:[%s1 + $0x190] sm:$0xff]
      %v750 = vld [vmem:[%s1 + $0x198] sm:$0xff]
      %v751 = vld [vmem:[%s1 + $0x1a0] sm:$0xff]
      %v752 = vld [vmem:[%s1 + $0x1a8] sm:$0xff]
      %v753 = vld [vmem:[%s1 + $0x1b0] sm:$0xff]
      %v754 = vld [vmem:[%s1 + $0x1b8] sm:$0xff]
      %v755 = vld [vmem:[%s1 + $0x1c0] sm:$0xff]
      %v756 = vld [vmem:[%s1 + $0x1c8] sm:$0xff]
      %v757 = vld [vmem:[%s1 + $0x1d0] sm:$0xff]
      %v758 = vld [vmem:[%s1 + $0x1d8] sm:$0xff]
      %v759 = vld [vmem:[%s1 + $0x1e0] sm:$0xff]
      %v760 = vld [vmem:[%s1 + $0x1e8] sm:$0xff]
      %v761 = vld [vmem:[%s1 + $0x1f0] sm:$0xff]
      %v762 = vld [vmem:[%s1 + $0x1f8] sm:$0xff]
      %763 = vmatpush.msra.mxu0 %v759
      %764 = vmatpush.msra.mxu0 %v755
      %765 = vmatpush.msra.mxu0 %v751
      %766 = vmatpush.msra.mxu0 %v747
      %767 = vmatpush.msra.mxu0 %v743
      %768 = vmatpush.msra.mxu0 %v739
      %769 = vmatpush.msra.mxu0 %v735
      %770 = vmatpush.msra.mxu0 %v731
      %771 = vmatpush.msra.mxu0 %v727
      %772 = vmatpush.msra.mxu0 %v723
      %773 = vmatpush.msra.mxu0 %v719
      %774 = vmatpush.msra.mxu0 %v715
      %775 = vmatpush.msra.mxu0 %v711
      %776 = vmatpush.msra.mxu0 %v707
      %777 = vmatpush.msra.mxu0 %v703
      %778 = vmatpush.msra.mxu0 %v699
      %779 = vmatmul.f32.gmra.mxu0 %v667
      %v780 = vpop.f32.mrf.mxu0
      %v781 = vadd.f32 0.0, %v780
      %782 = vdwg.mxu0
      %783 = vmatpush.msra.mxu0 %v760
      %784 = vmatpush.msra.mxu0 %v756
      %785 = vmatpush.msra.mxu0 %v752
      %786 = vmatpush.msra.mxu0 %v748
      %787 = vmatpush.msra.mxu0 %v744
      %788 = vmatpush.msra.mxu0 %v740
      %789 = vmatpush.msra.mxu0 %v736
      %790 = vmatpush.msra.mxu0 %v732
      %791 = vmatpush.msra.mxu0 %v728
      %792 = vmatpush.msra.mxu0 %v724
      %793 = vmatpush.msra.mxu0 %v720
      %794 = vmatpush.msra.mxu0 %v716
      %795 = vmatpush.msra.mxu0 %v712
      %796 = vmatpush.msra.mxu0 %v708
      %797 = vmatpush.msra.mxu0 %v704
      %798 = vmatpush.msra.mxu0 %v700
      %799 = vmatmul.f32.gmra.mxu0 %v667
      %v800 = vpop.f32.mrf.mxu0
      %v801 = vadd.f32 0.0, %v800
      %802 = vdwg.mxu0
      %803 = vmatpush.msra.mxu0 %v761
      %804 = vmatpush.msra.mxu0 %v757
      %805 = vmatpush.msra.mxu0 %v753
      %806 = vmatpush.msra.mxu0 %v749
      %807 = vmatpush.msra.mxu0 %v745
      %808 = vmatpush.msra.mxu0 %v741
      %809 = vmatpush.msra.mxu0 %v737
      %810 = vmatpush.msra.mxu0 %v733
      %811 = vmatpush.msra.mxu0 %v729
      %812 = vmatpush.msra.mxu0 %v725
      %813 = vmatpush.msra.mxu0 %v721
      %814 = vmatpush.msra.mxu0 %v717
      %815 = vmatpush.msra.mxu0 %v713
      %816 = vmatpush.msra.mxu0 %v709
      %817 = vmatpush.msra.mxu0 %v705
      %818 = vmatpush.msra.mxu0 %v701
      %819 = vmatmul.f32.gmra.mxu0 %v667
      %v820 = vpop.f32.mrf.mxu0
      %v821 = vadd.f32 0.0, %v820
      %822 = vdwg.mxu0
      %823 = vmatpush.msra.mxu0 %v762
      %824 = vmatpush.msra.mxu0 %v758
      %825 = vmatpush.msra.mxu0 %v754
      %826 = vmatpush.msra.mxu0 %v750
      %827 = vmatpush.msra.mxu0 %v746
      %828 = vmatpush.msra.mxu0 %v742
      %829 = vmatpush.msra.mxu0 %v738
      %830 = vmatpush.msra.mxu0 %v734
      %831 = vmatpush.msra.mxu0 %v730
      %832 = vmatpush.msra.mxu0 %v726
      %833 = vmatpush.msra.mxu0 %v722
      %834 = vmatpush.msra.mxu0 %v718
      %835 = vmatpush.msra.mxu0 %v714
      %836 = vmatpush.msra.mxu0 %v710
      %837 = vmatpush.msra.mxu0 %v706
      %838 = vmatpush.msra.mxu0 %v702
      %839 = vmatmul.f32.gmra.mxu0 %v667
      %v840 = vpop.f32.mrf.mxu0
      %v841 = vadd.f32 0.0, %v840
      %842 = vdwg.mxu0
      %v843 = vadd.f32 %v695, %v781
      %v844 = vadd.f32 %v696, %v801
      %v845 = vadd.f32 %v697, %v821
      %v846 = vadd.f32 %v698, %v841
      %v847 = vxor.u32 %v843, 2147483648
      %v848 = vmul.f32 %v847, 1.442695
      %v849 = vpow.pop %v848
      %v850 = vadd.f32 %v849, 1.0
      %v851 = vrcp.pop %v850
      %v852 = vmul.f32 %v850, %v851
      %v853 = vsub.f32 1.0, %v852
      %v854 = vmul.f32 %v851, %v853
      %v855 = vadd.f32 %v851, %v854
      %vm856 = vweird.f32 %v850
      %vm857 = vweird.f32 %v851
      %vm858 = vmor %vm856, %vm857
      %v859 = vsel %vm858, %v851, %v855
      %v860 = vand.u32 2147483647, %v850
      %vm861 = vcmp.eq.f32.partialorder %v860, 8.507059e+37
      %v862 = vand.u32 %v850, 2147483648
      %v863 = vor.u32 1.1754944e-38, %v862
      %v864 = vsel %vm861, %v863, %v859
      %v865 = vmul.f32 1.0, %v864
      %v866 = vxor.u32 %v844, 2147483648
      %v867 = vmul.f32 %v866, 1.442695
      %v868 = vpow.pop %v867
      %v869 = vadd.f32 %v868, 1.0
      %v870 = vrcp.pop %v869
      %v871 = vmul.f32 %v869, %v870
      %v872 = vsub.f32 1.0, %v871
      %v873 = vmul.f32 %v870, %v872
      %v874 = vadd.f32 %v870, %v873
      %vm875 = vweird.f32 %v869
      %vm876 = vweird.f32 %v870
      %vm877 = vmor %vm875, %vm876
      %v878 = vsel %vm877, %v870, %v874
      %v879 = vand.u32 2147483647, %v869
      %vm880 = vcmp.eq.f32.partialorder %v879, 8.507059e+37
      %v881 = vand.u32 %v869, 2147483648
      %v882 = vor.u32 1.1754944e-38, %v881
      %v883 = vsel %vm880, %v882, %v878
      %v884 = vmul.f32 1.0, %v883
      %v885 = vtanh.pop %v845
      %v886 = vxor.u32 %v846, 2147483648
      %v887 = vmul.f32 %v886, 1.442695
      %v888 = vpow.pop %v887
      %v889 = vadd.f32 %v888, 1.0
      %v890 = vrcp.pop %v889
      %v891 = vmul.f32 %v889, %v890
      %v892 = vsub.f32 1.0, %v891
      %v893 = vmul.f32 %v890, %v892
      %v894 = vadd.f32 %v890, %v893
      %vm895 = vweird.f32 %v889
      %vm896 = vweird.f32 %v890
      %vm897 = vmor %vm895, %vm896
      %v898 = vsel %vm897, %v890, %v894
      %v899 = vand.u32 2147483647, %v889
      %vm900 = vcmp.eq.f32.partialorder %v899, 8.507059e+37
      %v901 = vand.u32 %v889, 2147483648
      %v902 = vor.u32 1.1754944e-38, %v901
      %v903 = vsel %vm900, %v902, %v898
      %v904 = vmul.f32 1.0, %v903
      %v905 = vmul.f32 %v884, %v665
      %v906 = vmul.f32 %v865, %v885
      %v907 = vadd.f32 %v905, %v906
      %v908 = vtanh.pop %v907
      %v909 = vmul.f32 %v904, %v908
      %s910 = sadd.s32 %s427, 2
      %v911 = vstv %s910
      %vm912 = vcmp.lt.s32.totalorder %v911, %v209
      %v913 = vsel %vm912, 1, 0
      %914 = vset.pattern.permute.xlu0 0
      %915 = vperm.xlu0 %914, %v913
      %v916 = vpop.permute.xlu0 %915
      %vm917 = vcmp.eq.s32.totalorder %v916, 1
      %v918 = vsel %vm917, %v909, 0.0
      %s919 = scalar_lea.vmem %s200, 16
      %920 = vst [vmem:[%s919] sm:$0xff] %v918
      %v921 = vrot.slane %v918, 4
      %v922 = vadd.f32 %v918, %v921
      %v923 = vrot.slane %v922, 2
      %v924 = vadd.f32 %v922, %v923
      %v925 = vrot.slane %v924, 1
      %v926 = vadd.f32 %v924, %v925
      %v927 = vadd.f32 %v685, %v926
      %v928 = vmul.f32 %v918, %v918
      %v929 = vrot.slane %v928, 4
      %v930 = vadd.f32 %v928, %v929
      %v931 = vrot.slane %v930, 2
      %v932 = vadd.f32 %v930, %v931
      %v933 = vrot.slane %v932, 1
      %v934 = vadd.f32 %v932, %v933
      %v935 = vadd.f32 %v693, %v934
      %s936 = scalar_lea.vmem %s194, 96
      %v937 = vld [vmem:[%s936] sm:$0xff]
      %v938 = vld [vmem:[%s936 + $0x8] sm:$0xff]
      %v939 = vld [vmem:[%s936 + $0x10] sm:$0xff]
      %v940 = vld [vmem:[%s936 + $0x18] sm:$0xff]
      %v941 = vld [vmem:[%s1] sm:$0xff]
      %v942 = vld [vmem:[%s1 + $0x8] sm:$0xff]
      %v943 = vld [vmem:[%s1 + $0x10] sm:$0xff]
      %v944 = vld [vmem:[%s1 + $0x18] sm:$0xff]
      %v945 = vld [vmem:[%s1 + $0x20] sm:$0xff]
      %v946 = vld [vmem:[%s1 + $0x28] sm:$0xff]
      %v947 = vld [vmem:[%s1 + $0x30] sm:$0xff]
      %v948 = vld [vmem:[%s1 + $0x38] sm:$0xff]
      %v949 = vld [vmem:[%s1 + $0x40] sm:$0xff]
      %v950 = vld [vmem:[%s1 + $0x48] sm:$0xff]
      %v951 = vld [vmem:[%s1 + $0x50] sm:$0xff]
      %v952 = vld [vmem:[%s1 + $0x58] sm:$0xff]
      %v953 = vld [vmem:[%s1 + $0x60] sm:$0xff]
      %v954 = vld [vmem:[%s1 + $0x68] sm:$0xff]
      %v955 = vld [vmem:[%s1 + $0x70] sm:$0xff]
      %v956 = vld [vmem:[%s1 + $0x78] sm:$0xff]
      %v957 = vld [vmem:[%s1 + $0x80] sm:$0xff]
      %v958 = vld [vmem:[%s1 + $0x88] sm:$0xff]
      %v959 = vld [vmem:[%s1 + $0x90] sm:$0xff]
      %v960 = vld [vmem:[%s1 + $0x98] sm:$0xff]
      %v961 = vld [vmem:[%s1 + $0xa0] sm:$0xff]
      %v962 = vld [vmem:[%s1 + $0xa8] sm:$0xff]
      %v963 = vld [vmem:[%s1 + $0xb0] sm:$0xff]
      %v964 = vld [vmem:[%s1 + $0xb8] sm:$0xff]
      %v965 = vld [vmem:[%s1 + $0xc0] sm:$0xff]
      %v966 = vld [vmem:[%s1 + $0xc8] sm:$0xff]
      %v967 = vld [vmem:[%s1 + $0xd0] sm:$0xff]
      %v968 = vld [vmem:[%s1 + $0xd8] sm:$0xff]
      %v969 = vld [vmem:[%s1 + $0xe0] sm:$0xff]
      %v970 = vld [vmem:[%s1 + $0xe8] sm:$0xff]
      %v971 = vld [vmem:[%s1 + $0xf0] sm:$0xff]
      %v972 = vld [vmem:[%s1 + $0xf8] sm:$0xff]
      %v973 = vld [vmem:[%s1 + $0x100] sm:$0xff]
      %v974 = vld [vmem:[%s1 + $0x108] sm:$0xff]
      %v975 = vld [vmem:[%s1 + $0x110] sm:$0xff]
      %v976 = vld [vmem:[%s1 + $0x118] sm:$0xff]
      %v977 = vld [vmem:[%s1 + $0x120] sm:$0xff]
      %v978 = vld [vmem:[%s1 + $0x128] sm:$0xff]
      %v979 = vld [vmem:[%s1 + $0x130] sm:$0xff]
      %v980 = vld [vmem:[%s1 + $0x138] sm:$0xff]
      %v981 = vld [vmem:[%s1 + $0x140] sm:$0xff]
      %v982 = vld [vmem:[%s1 + $0x148] sm:$0xff]
      %v983 = vld [vmem:[%s1 + $0x150] sm:$0xff]
      %v984 = vld [vmem:[%s1 + $0x158] sm:$0xff]
      %v985 = vld [vmem:[%s1 + $0x160] sm:$0xff]
      %v986 = vld [vmem:[%s1 + $0x168] sm:$0xff]
      %v987 = vld [vmem:[%s1 + $0x170] sm:$0xff]
      %v988 = vld [vmem:[%s1 + $0x178] sm:$0xff]
      %v989 = vld [vmem:[%s1 + $0x180] sm:$0xff]
      %v990 = vld [vmem:[%s1 + $0x188] sm:$0xff]
      %v991 = vld [vmem:[%s1 + $0x190] sm:$0xff]
      %v992 = vld [vmem:[%s1 + $0x198] sm:$0xff]
      %v993 = vld [vmem:[%s1 + $0x1a0] sm:$0xff]
      %v994 = vld [vmem:[%s1 + $0x1a8] sm:$0xff]
      %v995 = vld [vmem:[%s1 + $0x1b0] sm:$0xff]
      %v996 = vld [vmem:[%s1 + $0x1b8] sm:$0xff]
      %v997 = vld [vmem:[%s1 + $0x1c0] sm:$0xff]
      %v998 = vld [vmem:[%s1 + $0x1c8] sm:$0xff]
      %v999 = vld [vmem:[%s1 + $0x1d0] sm:$0xff]
      %v1000 = vld [vmem:[%s1 + $0x1d8] sm:$0xff]
      %v1001 = vld [vmem:[%s1 + $0x1e0] sm:$0xff]
      %v1002 = vld [vmem:[%s1 + $0x1e8] sm:$0xff]
      %v1003 = vld [vmem:[%s1 + $0x1f0] sm:$0xff]
      %v1004 = vld [vmem:[%s1 + $0x1f8] sm:$0xff]
      %1005 = vmatpush.msra.mxu0 %v1001
      %1006 = vmatpush.msra.mxu0 %v997
      %1007 = vmatpush.msra.mxu0 %v993
      %1008 = vmatpush.msra.mxu0 %v989
      %1009 = vmatpush.msra.mxu0 %v985
      %1010 = vmatpush.msra.mxu0 %v981
      %1011 = vmatpush.msra.mxu0 %v977
      %1012 = vmatpush.msra.mxu0 %v973
      %1013 = vmatpush.msra.mxu0 %v969
      %1014 = vmatpush.msra.mxu0 %v965
      %1015 = vmatpush.msra.mxu0 %v961
      %1016 = vmatpush.msra.mxu0 %v957
      %1017 = vmatpush.msra.mxu0 %v953
      %1018 = vmatpush.msra.mxu0 %v949
      %1019 = vmatpush.msra.mxu0 %v945
      %1020 = vmatpush.msra.mxu0 %v941
      %1021 = vmatmul.f32.gmra.mxu0 %v909
      %v1022 = vpop.f32.mrf.mxu0
      %v1023 = vadd.f32 0.0, %v1022
      %1024 = vdwg.mxu0
      %1025 = vmatpush.msra.mxu0 %v1002
      %1026 = vmatpush.msra.mxu0 %v998
      %1027 = vmatpush.msra.mxu0 %v994
      %1028 = vmatpush.msra.mxu0 %v990
      %1029 = vmatpush.msra.mxu0 %v986
      %1030 = vmatpush.msra.mxu0 %v982
      %1031 = vmatpush.msra.mxu0 %v978
      %1032 = vmatpush.msra.mxu0 %v974
      %1033 = vmatpush.msra.mxu0 %v970
      %1034 = vmatpush.msra.mxu0 %v966
      %1035 = vmatpush.msra.mxu0 %v962
      %1036 = vmatpush.msra.mxu0 %v958
      %1037 = vmatpush.msra.mxu0 %v954
      %1038 = vmatpush.msra.mxu0 %v950
      %1039 = vmatpush.msra.mxu0 %v946
      %1040 = vmatpush.msra.mxu0 %v942
      %1041 = vmatmul.f32.gmra.mxu0 %v909
      %v1042 = vpop.f32.mrf.mxu0
      %v1043 = vadd.f32 0.0, %v1042
      %1044 = vdwg.mxu0
      %1045 = vmatpush.msra.mxu0 %v1003
      %1046 = vmatpush.msra.mxu0 %v999
      %1047 = vmatpush.msra.mxu0 %v995
      %1048 = vmatpush.msra.mxu0 %v991
      %1049 = vmatpush.msra.mxu0 %v987
      %1050 = vmatpush.msra.mxu0 %v983
      %1051 = vmatpush.msra.mxu0 %v979
      %1052 = vmatpush.msra.mxu0 %v975
      %1053 = vmatpush.msra.mxu0 %v971
      %1054 = vmatpush.msra.mxu0 %v967
      %1055 = vmatpush.msra.mxu0 %v963
      %1056 = vmatpush.msra.mxu0 %v959
      %1057 = vmatpush.msra.mxu0 %v955
      %1058 = vmatpush.msra.mxu0 %v951
      %1059 = vmatpush.msra.mxu0 %v947
      %1060 = vmatpush.msra.mxu0 %v943
      %1061 = vmatmul.f32.gmra.mxu0 %v909
      %v1062 = vpop.f32.mrf.mxu0
      %v1063 = vadd.f32 0.0, %v1062
      %1064 = vdwg.mxu0
      %1065 = vmatpush.msra.mxu0 %v1004
      %1066 = vmatpush.msra.mxu0 %v1000
      %1067 = vmatpush.msra.mxu0 %v996
      %1068 = vmatpush.msra.mxu0 %v992
      %1069 = vmatpush.msra.mxu0 %v988
      %1070 = vmatpush.msra.mxu0 %v984
      %1071 = vmatpush.msra.mxu0 %v980
      %1072 = vmatpush.msra.mxu0 %v976
      %1073 = vmatpush.msra.mxu0 %v972
      %1074 = vmatpush.msra.mxu0 %v968
      %1075 = vmatpush.msra.mxu0 %v964
      %1076 = vmatpush.msra.mxu0 %v960
      %1077 = vmatpush.msra.mxu0 %v956
      %1078 = vmatpush.msra.mxu0 %v952
      %1079 = vmatpush.msra.mxu0 %v948
      %1080 = vmatpush.msra.mxu0 %v944
      %1081 = vmatmul.f32.gmra.mxu0 %v909
      %v1082 = vpop.f32.mrf.mxu0
      %v1083 = vadd.f32 0.0, %v1082
      %1084 = vdwg.mxu0
      %v1085 = vadd.f32 %v937, %v1023
      %v1086 = vadd.f32 %v938, %v1043
      %v1087 = vadd.f32 %v939, %v1063
      %v1088 = vadd.f32 %v940, %v1083
      %v1089 = vxor.u32 %v1085, 2147483648
      %v1090 = vmul.f32 %v1089, 1.442695
      %v1091 = vpow.pop %v1090
      %v1092 = vadd.f32 %v1091, 1.0
      %v1093 = vrcp.pop %v1092
      %v1094 = vmul.f32 %v1092, %v1093
      %v1095 = vsub.f32 1.0, %v1094
      %v1096 = vmul.f32 %v1093, %v1095
      %v1097 = vadd.f32 %v1093, %v1096
      %vm1098 = vweird.f32 %v1092
      %vm1099 = vweird.f32 %v1093
      %vm1100 = vmor %vm1098, %vm1099
      %v1101 = vsel %vm1100, %v1093, %v1097
      %v1102 = vand.u32 2147483647, %v1092
      %vm1103 = vcmp.eq.f32.partialorder %v1102, 8.507059e+37
      %v1104 = vand.u32 %v1092, 2147483648
      %v1105 = vor.u32 1.1754944e-38, %v1104
      %v1106 = vsel %vm1103, %v1105, %v1101
      %v1107 = vmul.f32 1.0, %v1106
      %v1108 = vxor.u32 %v1086, 2147483648
      %v1109 = vmul.f32 %v1108, 1.442695
      %v1110 = vpow.pop %v1109
      %v1111 = vadd.f32 %v1110, 1.0
      %v1112 = vrcp.pop %v1111
      %v1113 = vmul.f32 %v1111, %v1112
      %v1114 = vsub.f32 1.0, %v1113
      %v1115 = vmul.f32 %v1112, %v1114
      %v1116 = vadd.f32 %v1112, %v1115
      %vm1117 = vweird.f32 %v1111
      %vm1118 = vweird.f32 %v1112
      %vm1119 = vmor %vm1117, %vm1118
      %v1120 = vsel %vm1119, %v1112, %v1116
      %v1121 = vand.u32 2147483647, %v1111
      %vm1122 = vcmp.eq.f32.partialorder %v1121, 8.507059e+37
      %v1123 = vand.u32 %v1111, 2147483648
      %v1124 = vor.u32 1.1754944e-38, %v1123
      %v1125 = vsel %vm1122, %v1124, %v1120
      %v1126 = vmul.f32 1.0, %v1125
      %v1127 = vtanh.pop %v1087
      %v1128 = vxor.u32 %v1088, 2147483648
      %v1129 = vmul.f32 %v1128, 1.442695
      %v1130 = vpow.pop %v1129
      %v1131 = vadd.f32 %v1130, 1.0
      %v1132 = vrcp.pop %v1131
      %v1133 = vmul.f32 %v1131, %v1132
      %v1134 = vsub.f32 1.0, %v1133
      %v1135 = vmul.f32 %v1132, %v1134
      %v1136 = vadd.f32 %v1132, %v1135
      %vm1137 = vweird.f32 %v1131
      %vm1138 = vweird.f32 %v1132
      %vm1139 = vmor %vm1137, %vm1138
      %v1140 = vsel %vm1139, %v1132, %v1136
      %v1141 = vand.u32 2147483647, %v1131
      %vm1142 = vcmp.eq.f32.partialorder %v1141, 8.507059e+37
      %v1143 = vand.u32 %v1131, 2147483648
      %v1144 = vor.u32 1.1754944e-38, %v1143
      %v1145 = vsel %vm1142, %v1144, %v1140
      %v1146 = vmul.f32 1.0, %v1145
      %v1147 = vmul.f32 %v1126, %v907
      %v1148 = vmul.f32 %v1107, %v1127
      %v1149 = vadd.f32 %v1147, %v1148
      %v1150 = vtanh.pop %v1149
      %v1151 = vmul.f32 %v1146, %v1150
      %s1152 = sadd.s32 %s427, 3
      %v1153 = vstv %s1152
      %vm1154 = vcmp.lt.s32.totalorder %v1153, %v209
      %v1155 = vsel %vm1154, 1, 0
      %1156 = vset.pattern.permute.xlu0 0
      %1157 = vperm.xlu0 %1156, %v1155
      %v1158 = vpop.permute.xlu0 %1157
      %vm1159 = vcmp.eq.s32.totalorder %v1158, 1
      %v1160 = vsel %vm1159, %v1151, 0.0
      %s1161 = scalar_lea.vmem %s200, 24
      %1162 = vst [vmem:[%s1161] sm:$0xff] %v1160
      %v1163 = vrot.slane %v1160, 4
      %v1164 = vadd.f32 %v1160, %v1163
      %v1165 = vrot.slane %v1164, 2
      %v1166 = vadd.f32 %v1164, %v1165
      %v1167 = vrot.slane %v1166, 1
      %v1168 = vadd.f32 %v1166, %v1167
      %v1169 = vadd.f32 %v927, %v1168
      %v1170 = vmul.f32 %v1160, %v1160
      %v1171 = vrot.slane %v1170, 4
      %v1172 = vadd.f32 %v1170, %v1171
      %v1173 = vrot.slane %v1172, 2
      %v1174 = vadd.f32 %v1172, %v1173
      %v1175 = vrot.slane %v1174, 1
      %v1176 = vadd.f32 %v1174, %v1175
      %v1177 = vadd.f32 %v935, %v1176
      %1178 = vst [vmem:[#allocation2] sm:$0xff] %v1151
      %1179 = vst [vmem:[#allocation3] sm:$0xff] %v1149
      %v1180 = vld [vmem:[%s4] sm:$0x1]
      %v1181 = vadd.f32 %v1180, %v1169
      %1182 = vst [vmem:[%s4] sm:$0x1] %v1181
      %v1183 = vld [vmem:[%s4 + $0x1] sm:$0x1]
      %v1184 = vadd.f32 %v1183, %v1177
      %1185 = vst [vmem:[%s4 + $0x1] sm:$0x1] %v1184
      %s1186 = smul.u32 4, %s16
      %p1187 = scmp.lt.s32.totalorder %s1186, 11
      %s1188 = scalar_select %p1187, %s1186, 11
      %s1189 = smul.addr %s1188, 8
      %s1190 = scalar_lea.vmem %s3, %s1189
      // Predicated region
      $region37: #{deep_batch_rnn_forward.7} parent=31 // pred_check
        %p1191 = pneg %p102
      $region38: #{deep_batch_rnn_forward.7} parent=31 // pred_check_branch
        %1193 = sbr.rel (%p1191) target = $region40
      $region39: #{deep_batch_rnn_forward.7} parent=31 // pred_region
        %s1194 = smul.u32 4, %s16
      $region40: #{deep_batch_rnn_forward.7} parent=31 // pred_fallthru
        _
      // Predicated region
      $region41: #{deep_batch_rnn_forward.7} parent=31 // pred_check
        %p1195 = pneg %p123
      $region42: #{deep_batch_rnn_forward.7} parent=31 // pred_check_branch
        %1197 = sbr.rel (%p1195) target = $region44
      $region43: #{deep_batch_rnn_forward.7} parent=31 // pred_region
        _
      $region44: #{deep_batch_rnn_forward.7} parent=31 // pred_fallthru
        _
      // Predicated region
      $region45: #{deep_batch_rnn_forward.7} parent=31 // pred_check
        %p1198 = pneg %p123
      $region46: #{deep_batch_rnn_forward.7} parent=31 // pred_check_branch
        %1200 = sbr.rel (%p1198) target = $region48
      $region47: #{deep_batch_rnn_forward.7} parent=31 // pred_region
        _
      $region48: #{deep_batch_rnn_forward.7} parent=31 // pred_fallthru
        _
    $region32: #{deep_batch_rnn_forward.7} parent=5 // pred_fallthru
      _
    %p1201 = scmp.le.s32.totalorder 2, %s11
    // Predicated region
    $region49: #{deep_batch_rnn_forward.7} parent=5 // pred_check
      %p1202 = pneg %p1201
    $region50: #{deep_batch_rnn_forward.7} parent=5 // pred_check_branch
      %1204 = sbr.rel (%p1202) target = $region52
    $region51: #{deep_batch_rnn_forward.7} parent=5 // pred_region
      %s1205 = ssub.s32 %s11, 2
      // Predicated region
      $region53: #{deep_batch_rnn_forward.7} parent=51 // pred_check
        %p1206 = pneg %p108
      $region54: #{deep_batch_rnn_forward.7} parent=51 // pred_check_branch
        %1208 = sbr.rel (%p1206) target = $region56
      $region55: #{deep_batch_rnn_forward.7} parent=51 // pred_region
        %s1209 = smul.u32 4, %s17
        %p1210 = scmp.lt.s32.totalorder %s1209, 11
        %s1211 = scalar_select %p1210, %s1209, 11
        %s1212 = smul.addr %s1211, 8
        %s1213 = scalar_lea.vmem %s3, %s1212
      $region56: #{deep_batch_rnn_forward.7} parent=51 // pred_fallthru
        _
    $region52: #{deep_batch_rnn_forward.7} parent=5 // pred_fallthru
      _
  $region6: #{deep_batch_rnn_forward.7} parent=0 // loop_footer
    %s15 = sadd.s32 1, %s11
  $region7: #{deep_batch_rnn_forward.7} parent=0 // loop_footer_branch
    %10 = sbr.rel target = $region3
  $region8: #{deep_batch_rnn_forward.7} parent=0 // loop_exit
    _

// kernel: deep_batch_rnn_forward.11
$region0: #{deep_batch_rnn_forward.11}
  #allocation0 [shape = 'u32[]', space=smem, size = 0x4, offset = 0x4, fixed_abs, tag = 'smem constant byte address 0x4 - core index']
  #allocation1 [shape = 'u32[72,128]{1,0:T(1,128)}', space=vmem, size = 0x9000, scoped, tag = 'internal scratch']
  #allocation2 [shape = 'f32[8,128]{1,0:T(8,128)}', space=vmem, size = 0x1000, scoped, tag = 'scratch operand']
  #allocation3 [shape = 'f32[8,128]{1,0:T(8,128)}', space=vmem, size = 0x1000, scoped, tag = 'scratch operand']
  %s0 = inlined_call_operand.vmem [shape: f32[12,8,512], index: 0, kind: input, shape index: {}]
  %s1 = inlined_call_operand.vmem [shape: f32[128,512], index: 1, kind: input, shape index: {}]
  %s2 = inlined_call_operand.vmem [shape: s32[8,1], index: 2, kind: input, shape index: {}]
  %s3 = inlined_call_operand.vmem [shape: f32[12,8,128], index: 3, kind: output, shape index: {0}]
  %s4 = inlined_call_operand.hbm [shape: f32[2,128], index: 4, kind: output, shape index: {1}]
  %5 = xla_tuple %s3, %s4
  %s6 = sld [smem:[#allocation0]]
  $region57: #{deep_batch_rnn_forward.11} parent=0
    _
  %s8 = ssub.s32 1, %s6
  %s9 = scalar_select 0, %s8, %s6
  $region1: #{deep_batch_rnn_forward.11} parent=0
    #allocation4 [shape = 'u8[1024]{0}', space=vmem, size = 0x400, scoped, tag = 'output window, operand 1, single buffered']
    #allocation5 [shape = 's32[2]{0}', space=sflag, size = 0x8, scoped, tag = 'scoped memory for deep_batch_rnn_forward.11']
    %10 = vsyncpa [#allocation5], 0
    loop: start=0, step=1, limit=5
    $region2: #{deep_batch_rnn_forward.11} parent=1 // loop_pre_header
      _
    $region3: #{deep_batch_rnn_forward.11} parent=1 // loop_header
      %s12 = sphi 0, %s16
      %p13 = scmp.ge.s32.totalorder %s12, 5
      %s22 = sphi 0, %s24
      %s25 = sphi 0, %s22
      %s26 = sphi 0, %s25
      %s42 = sphi 0, %s26
      %s46 = sphi 0, %s46
      %s48 = sphi 0, %s46
      %s49 = sphi 0, %s48
      %s63 = sphi 0, %s49
      %s67 = sphi 0, %s67
      %s69 = sphi 0, %s67
      %s70 = sphi 0, %s69
      %s84 = sphi 0, %s70
      %s90 = sphi 0, %s92
      %s93 = sphi 0, %s90
      %s94 = sphi 0, %s93
      %s110 = sphi 0, %s94
      %s114 = sphi 0, %s114
      %s116 = sphi 0, %s114
      %s117 = sphi 0, %s116
      %s131 = sphi 0, %s117
    $region4: #{deep_batch_rnn_forward.11} parent=1 // loop_header_branch
      %15 = sbr.rel (%p13) target = $region8
    $region5: #{deep_batch_rnn_forward.11} parent=1 // loop_body
      %s17 = ssub.s32 %s12, 1
      %s18 = ssub.s32 %s12, 2
      %s19 = sadd.s32 %s12, 1
      %s20 = ssub.s32 %s12, %s19
      %p21 = scmp.eq.s32.totalorder %s20, 0
      %s23 = sadd.s32 %s22, 1
      %s24 = scalar_select %p21, %s22, %s23
      %p27 = pneg %p21
      %p28 = scmp.eq.s32.totalorder %s12, 2
      %p29 = por %p27, %p28
      %p30 = scmp.ne.s32.totalorder %s22, %s25
      %p31 = scmp.eq.s32.totalorder %s12, 0
      %p32 = por %p30, %p31
      %p33 = scmp.ne.s32.totalorder %s22, %s25
      %p34 = scmp.eq.s32.totalorder %s17, 2
      %p35 = por %p33, %p34
      %p36 = scmp.ne.s32.totalorder %s25, %s26
      %p37 = scmp.eq.s32.totalorder %s17, 0
      %p38 = por %p36, %p37
      %p39 = scmp.ne.s32.totalorder %s25, %s26
      %p40 = scmp.eq.s32.totalorder %s18, 2
      %p41 = por %p39, %p40
      %p43 = scmp.ne.s32.totalorder %s26, %s42
      %p44 = scmp.eq.s32.totalorder %s18, 0
      %p45 = por %p43, %p44
      %s47 = sadd.s32 %s46, 1
      %p50 = scmp.eq.s32.totalorder %s12, 2
      %p51 = scmp.ne.s32.totalorder %s46, %s48
      %p52 = scmp.eq.s32.totalorder %s12, 0
      %p53 = por %p51, %p52
      %p54 = scmp.ne.s32.totalorder %s46, %s48
      %p55 = scmp.eq.s32.totalorder %s17, 2
      %p56 = por %p54, %p55
      %p57 = scmp.ne.s32.totalorder %s48, %s49
      %p58 = scmp.eq.s32.totalorder %s17, 0
      %p59 = por %p57, %p58
      %p60 = scmp.ne.s32.totalorder %s48, %s49
      %p61 = scmp.eq.s32.totalorder %s18, 2
      %p62 = por %p60, %p61
      %p64 = scmp.ne.s32.totalorder %s49, %s63
      %p65 = scmp.eq.s32.totalorder %s18, 0
      %p66 = por %p64, %p65
      %s68 = sadd.s32 %s67, 1
      %p71 = scmp.eq.s32.totalorder %s12, 2
      %p72 = scmp.ne.s32.totalorder %s67, %s69
      %p73 = scmp.eq.s32.totalorder %s12, 0
      %p74 = por %p72, %p73
      %p75 = scmp.ne.s32.totalorder %s67, %s69
      %p76 = scmp.eq.s32.totalorder %s17, 2
      %p77 = por %p75, %p76
      %p78 = scmp.ne.s32.totalorder %s69, %s70
      %p79 = scmp.eq.s32.totalorder %s17, 0
      %p80 = por %p78, %p79
      %p81 = scmp.ne.s32.totalorder %s69, %s70
      %p82 = scmp.eq.s32.totalorder %s18, 2
      %p83 = por %p81, %p82
      %p85 = scmp.ne.s32.totalorder %s70, %s84
      %p86 = scmp.eq.s32.totalorder %s18, 0
      %p87 = por %p85, %p86
      %s88 = ssub.s32 %s12, %s19
      %p89 = scmp.eq.s32.totalorder %s88, 0
      %s91 = sadd.s32 %s90, 1
      %s92 = scalar_select %p89, %s90, %s91
      %p95 = pneg %p89
      %p96 = scmp.eq.s32.totalorder %s12, 2
      %p97 = por %p95, %p96
      %p98 = scmp.ne.s32.totalorder %s90, %s93
      %p99 = scmp.eq.s32.totalorder %s12, 0
      %p100 = por %p98, %p99
      %p101 = scmp.ne.s32.totalorder %s90, %s93
      %p102 = scmp.eq.s32.totalorder %s17, 2
      %p103 = por %p101, %p102
      %p104 = scmp.ne.s32.totalorder %s93, %s94
      %p105 = scmp.eq.s32.totalorder %s17, 0
      %p106 = por %p104, %p105
      %p107 = scmp.ne.s32.totalorder %s93, %s94
      %p108 = scmp.eq.s32.totalorder %s18, 2
      %p109 = por %p107, %p108
      %p111 = scmp.ne.s32.totalorder %s94, %s110
      %p112 = scmp.eq.s32.totalorder %s18, 0
      %p113 = por %p111, %p112
      %s115 = sadd.s32 %s114, 1
      %p118 = scmp.eq.s32.totalorder %s12, 2
      %p119 = scmp.ne.s32.totalorder %s114, %s116
      %p120 = scmp.eq.s32.totalorder %s12, 0
      %p121 = por %p119, %p120
      %p122 = scmp.ne.s32.totalorder %s114, %s116
      %p123 = scmp.eq.s32.totalorder %s17, 2
      %p124 = por %p122, %p123
      %p125 = scmp.ne.s32.totalorder %s116, %s117
      %p126 = scmp.eq.s32.totalorder %s17, 0
      %p127 = por %p125, %p126
      %p128 = scmp.ne.s32.totalorder %s116, %s117
      %p129 = scmp.eq.s32.totalorder %s18, 2
      %p130 = por %p128, %p129
      %p132 = scmp.ne.s32.totalorder %s117, %s131
      %p133 = scmp.eq.s32.totalorder %s18, 0
      %p134 = por %p132, %p133
      %p135 = scmp.le.s32.totalorder 1, %s12
      %p136 = scmp.lt.s32.totalorder %s12, 4
      %p137 = pnand %p135, %p136
      %p138 = pneg %p137
      // Predicated region
      $region9: #{deep_batch_rnn_forward.11} parent=5 // pred_check
        _
      $region10: #{deep_batch_rnn_forward.11} parent=5 // pred_check_branch
        %140 = sbr.rel (%p137) target = $region12
      $region11: #{deep_batch_rnn_forward.11} parent=5 // pred_region
        %s141 = ssub.s32 %s12, 1
        // Predicated region
        $region13: #{deep_batch_rnn_forward.11} parent=11 // pred_check
          %p142 = pneg %p59
        $region14: #{deep_batch_rnn_forward.11} parent=11 // pred_check_branch
          %144 = sbr.rel (%p142) target = $region16
        $region15: #{deep_batch_rnn_forward.11} parent=11 // pred_region
          _
        $region16: #{deep_batch_rnn_forward.11} parent=11 // pred_fallthru
          _
        // Predicated region
        $region17: #{deep_batch_rnn_forward.11} parent=11 // pred_check
          %p145 = pneg %p80
        $region18: #{deep_batch_rnn_forward.11} parent=11 // pred_check_branch
          %147 = sbr.rel (%p145) target = $region20
        $region19: #{deep_batch_rnn_forward.11} parent=11 // pred_region
          _
        $region20: #{deep_batch_rnn_forward.11} parent=11 // pred_fallthru
          _
      $region12: #{deep_batch_rnn_forward.11} parent=5 // pred_fallthru
        _
      %p148 = scmp.lt.s32.totalorder %s12, 3
      // Predicated region
      $region21: #{deep_batch_rnn_forward.11} parent=5 // pred_check
        %p149 = pneg %p148
      $region22: #{deep_batch_rnn_forward.11} parent=5 // pred_check_branch
        %151 = sbr.rel (%p149) target = $region24
      $region23: #{deep_batch_rnn_forward.11} parent=5 // pred_region
        // Predicated region
        $region25: #{deep_batch_rnn_forward.11} parent=23 // pred_check
          %p152 = pneg %p32
        $region26: #{deep_batch_rnn_forward.11} parent=23 // pred_check_branch
          %154 = sbr.rel (%p152) target = $region28
        $region27: #{deep_batch_rnn_forward.11} parent=23 // pred_region
          %s155 = smul.u32 4, %s12
          %p156 = scmp.lt.s32.totalorder %s155, 11
          %s157 = scalar_select %p156, %s155, 11
          %s158 = smul.addr %s157, 4
          %s159 = smul.addr %s158, 8
          %s160 = scalar_lea.vmem %s0, %s159
          %s161 = smul.u32 4, %s12
        $region28: #{deep_batch_rnn_forward.11} parent=23 // pred_fallthru
          _
      $region24: #{deep_batch_rnn_forward.11} parent=5 // pred_fallthru
        _
      %p162 = scmp.le.s32.totalorder 1, %s12
      %p163 = scmp.lt.s32.totalorder %s12, 4
      %p164 = pnand %p162, %p163
      %p165 = pneg %p164
      // Predicated region
      $region29: #{deep_batch_rnn_forward.11} parent=5 // pred_check
        _
      $region30: #{deep_batch_rnn_forward.11} parent=5 // pred_check_branch
        %167 = sbr.rel (%p164) target = $region32
      $region31: #{deep_batch_rnn_forward.11} parent=5 // pred_region
        %s168 = ssub.s32 %s12, 1
        %s169 = smul.u32 4, %s17
        %p170 = scmp.lt.s32.totalorder %s169, 11
        %s171 = scalar_select %p170, %s169, 11
        %s172 = smul.addr %s171, 4
        %s173 = smul.addr %s172, 8
        %s174 = scalar_lea.vmem %s0, %s173
        %p175 = pneg %p38
        %p176 = pneg %p35
        %p177 = pneg %p59
        %p178 = pneg %p56
        %p179 = pneg %p80
        %p180 = pneg %p77
        %p181 = pneg %p106
        %p182 = pneg %p103
        %s183 = smul.u32 4, %s17
        %p184 = scmp.lt.s32.totalorder %s183, 11
        %s185 = scalar_select %p184, %s183, 11
        %s186 = smul.addr %s185, 8
        %s187 = scalar_lea.vmem %s3, %s186
        %p188 = pneg %p127
        %p189 = pneg %p124
        %s190 = smul.u32 4, %s17
        %p191 = scmp.lt.s32.totalorder %s190, 11
        %s192 = scalar_select %p191, %s190, 11
        %s193 = smul.addr %s192, 4
        %s194 = smul.addr %s193, 8
        %s195 = scalar_lea.vmem %s0, %s194
        %s196 = smul.u32 4, %s17
        %s197 = smul.u32 4, %s17
        %p198 = scmp.lt.s32.totalorder %s197, 11
        %s199 = scalar_select %p198, %s197, 11
        %s200 = smul.addr %s199, 8
        %s201 = scalar_lea.vmem %s3, %s200
        %s202 = smul.u32 4, %s17
        %p203 = scmp.eq.s32.totalorder %s17, 0
        // Predicated region
        $region33: #{deep_batch_rnn_forward.11} parent=31 // pred_check
          %p204 = pneg %p203
        $region34: #{deep_batch_rnn_forward.11} parent=31 // pred_check_branch
          %206 = sbr.rel (%p204) target = $region36
        $region35: #{deep_batch_rnn_forward.11} parent=31 // pred_region
          %207 = vst [vmem:[#allocation2] sm:$0xff] 0.0
          %208 = vst [vmem:[#allocation3] sm:$0xff] 0.0
          %209 = vst [vmem:[#allocation4] sm:$0x3] 0.0
        $region36: #{deep_batch_rnn_forward.11} parent=31 // pred_fallthru
          _
        %v210 = vld [vmem:[%s2] sm:$0xff]
        %v211 = vld [vmem:[#allocation2] sm:$0xff]
        %v212 = vld [vmem:[#allocation3] sm:$0xff]
        %v213 = vld [vmem:[%s195] sm:$0xff]
        %v214 = vld [vmem:[%s195 + $0x8] sm:$0xff]
        %v215 = vld [vmem:[%s195 + $0x10] sm:$0xff]
        %v216 = vld [vmem:[%s195 + $0x18] sm:$0xff]
        %v217 = vld [vmem:[%s1] sm:$0xff]
        %v218 = vld [vmem:[%s1 + $0x8] sm:$0xff]
        %v219 = vld [vmem:[%s1 + $0x10] sm:$0xff]
        %v220 = vld [vmem:[%s1 + $0x18] sm:$0xff]
        %v221 = vld [vmem:[%s1 + $0x20] sm:$0xff]
        %v222 = vld [vmem:[%s1 + $0x28] sm:$0xff]
        %v223 = vld [vmem:[%s1 + $0x30] sm:$0xff]
        %v224 = vld [vmem:[%s1 + $0x38] sm:$0xff]
        %v225 = vld [vmem:[%s1 + $0x40] sm:$0xff]
        %v226 = vld [vmem:[%s1 + $0x48] sm:$0xff]
        %v227 = vld [vmem:[%s1 + $0x50] sm:$0xff]
        %v228 = vld [vmem:[%s1 + $0x58] sm:$0xff]
        %v229 = vld [vmem:[%s1 + $0x60] sm:$0xff]
        %v230 = vld [vmem:[%s1 + $0x68] sm:$0xff]
        %v231 = vld [vmem:[%s1 + $0x70] sm:$0xff]
        %v232 = vld [vmem:[%s1 + $0x78] sm:$0xff]
        %v233 = vld [vmem:[%s1 + $0x80] sm:$0xff]
        %v234 = vld [vmem:[%s1 + $0x88] sm:$0xff]
        %v235 = vld [vmem:[%s1 + $0x90] sm:$0xff]
        %v236 = vld [vmem:[%s1 + $0x98] sm:$0xff]
        %v237 = vld [vmem:[%s1 + $0xa0] sm:$0xff]
        %v238 = vld [vmem:[%s1 + $0xa8] sm:$0xff]
        %v239 = vld [vmem:[%s1 + $0xb0] sm:$0xff]
        %v240 = vld [vmem:[%s1 + $0xb8] sm:$0xff]
        %v241 = vld [vmem:[%s1 + $0xc0] sm:$0xff]
        %v242 = vld [vmem:[%s1 + $0xc8] sm:$0xff]
        %v243 = vld [vmem:[%s1 + $0xd0] sm:$0xff]
        %v244 = vld [vmem:[%s1 + $0xd8] sm:$0xff]
        %v245 = vld [vmem:[%s1 + $0xe0] sm:$0xff]
        %v246 = vld [vmem:[%s1 + $0xe8] sm:$0xff]
        %v247 = vld [vmem:[%s1 + $0xf0] sm:$0xff]
        %v248 = vld [vmem:[%s1 + $0xf8] sm:$0xff]
        %v249 = vld [vmem:[%s1 + $0x100] sm:$0xff]
        %v250 = vld [vmem:[%s1 + $0x108] sm:$0xff]
        %v251 = vld [vmem:[%s1 + $0x110] sm:$0xff]
        %v252 = vld [vmem:[%s1 + $0x118] sm:$0xff]
        %v253 = vld [vmem:[%s1 + $0x120] sm:$0xff]
        %v254 = vld [vmem:[%s1 + $0x128] sm:$0xff]
        %v255 = vld [vmem:[%s1 + $0x130] sm:$0xff]
        %v256 = vld [vmem:[%s1 + $0x138] sm:$0xff]
        %v257 = vld [vmem:[%s1 + $0x140] sm:$0xff]
        %v258 = vld [vmem:[%s1 + $0x148] sm:$0xff]
        %v259 = vld [vmem:[%s1 + $0x150] sm:$0xff]
        %v260 = vld [vmem:[%s1 + $0x158] sm:$0xff]
        %v261 = vld [vmem:[%s1 + $0x160] sm:$0xff]
        %v262 = vld [vmem:[%s1 + $0x168] sm:$0xff]
        %v263 = vld [vmem:[%s1 + $0x170] sm:$0xff]
        %v264 = vld [vmem:[%s1 + $0x178] sm:$0xff]
        %v265 = vld [vmem:[%s1 + $0x180] sm:$0xff]
        %v266 = vld [vmem:[%s1 + $0x188] sm:$0xff]
        %v267 = vld [vmem:[%s1 + $0x190] sm:$0xff]
        %v268 = vld [vmem:[%s1 + $0x198] sm:$0xff]
        %v269 = vld [vmem:[%s1 + $0x1a0] sm:$0xff]
        %v270 = vld [vmem:[%s1 + $0x1a8] sm:$0xff]
        %v271 = vld [vmem:[%s1 + $0x1b0] sm:$0xff]
        %v272 = vld [vmem:[%s1 + $0x1b8] sm:$0xff]
        %v273 = vld [vmem:[%s1 + $0x1c0] sm:$0xff]
        %v274 = vld [vmem:[%s1 + $0x1c8] sm:$0xff]
        %v275 = vld [vmem:[%s1 + $0x1d0] sm:$0xff]
        %v276 = vld [vmem:[%s1 + $0x1d8] sm:$0xff]
        %v277 = vld [vmem:[%s1 + $0x1e0] sm:$0xff]
        %v278 = vld [vmem:[%s1 + $0x1e8] sm:$0xff]
        %v279 = vld [vmem:[%s1 + $0x1f0] sm:$0xff]
        %v280 = vld [vmem:[%s1 + $0x1f8] sm:$0xff]
        %281 = vmatpush.msra.mxu0 %v277
        %282 = vmatpush.msra.mxu0 %v273
        %283 = vmatpush.msra.mxu0 %v269
        %284 = vmatpush.msra.mxu0 %v265
        %285 = vmatpush.msra.mxu0 %v261
        %286 = vmatpush.msra.mxu0 %v257
        %287 = vmatpush.msra.mxu0 %v253
        %288 = vmatpush.msra.mxu0 %v249
        %289 = vmatpush.msra.mxu0 %v245
        %290 = vmatpush.msra.mxu0 %v241
        %291 = vmatpush.msra.mxu0 %v237
        %292 = vmatpush.msra.mxu0 %v233
        %293 = vmatpush.msra.mxu0 %v229
        %294 = vmatpush.msra.mxu0 %v225
        %295 = vmatpush.msra.mxu0 %v221
        %296 = vmatpush.msra.mxu0 %v217
        %297 = vmatmul.f32.gmra.mxu0 %v211
        %v298 = vpop.f32.mrf.mxu0
        %v299 = vadd.f32 0.0, %v298
        %300 = vdwg.mxu0
        %301 = vmatpush.msra.mxu0 %v278
        %302 = vmatpush.msra.mxu0 %v274
        %303 = vmatpush.msra.mxu0 %v270
        %304 = vmatpush.msra.mxu0 %v266
        %305 = vmatpush.msra.mxu0 %v262
        %306 = vmatpush.msra.mxu0 %v258
        %307 = vmatpush.msra.mxu0 %v254
        %308 = vmatpush.msra.mxu0 %v250
        %309 = vmatpush.msra.mxu0 %v246
        %310 = vmatpush.msra.mxu0 %v242
        %311 = vmatpush.msra.mxu0 %v238
        %312 = vmatpush.msra.mxu0 %v234
        %313 = vmatpush.msra.mxu0 %v230
        %314 = vmatpush.msra.mxu0 %v226
        %315 = vmatpush.msra.mxu0 %v222
        %316 = vmatpush.msra.mxu0 %v218
        %317 = vmatmul.f32.gmra.mxu0 %v211
        %v318 = vpop.f32.mrf.mxu0
        %v319 = vadd.f32 0.0, %v318
        %320 = vdwg.mxu0
        %321 = vmatpush.msra.mxu0 %v279
        %322 = vmatpush.msra.mxu0 %v275
        %323 = vmatpush.msra.mxu0 %v271
        %324 = vmatpush.msra.mxu0 %v267
        %325 = vmatpush.msra.mxu0 %v263
        %326 = vmatpush.msra.mxu0 %v259
        %327 = vmatpush.msra.mxu0 %v255
        %328 = vmatpush.msra.mxu0 %v251
        %329 = vmatpush.msra.mxu0 %v247
        %330 = vmatpush.msra.mxu0 %v243
        %331 = vmatpush.msra.mxu0 %v239
        %332 = vmatpush.msra.mxu0 %v235
        %333 = vmatpush.msra.mxu0 %v231
        %334 = vmatpush.msra.mxu0 %v227
        %335 = vmatpush.msra.mxu0 %v223
        %336 = vmatpush.msra.mxu0 %v219
        %337 = vmatmul.f32.gmra.mxu0 %v211
        %v338 = vpop.f32.mrf.mxu0
        %v339 = vadd.f32 0.0, %v338
        %340 = vdwg.mxu0
        %341 = vmatpush.msra.mxu0 %v280
        %342 = vmatpush.msra.mxu0 %v276
        %343 = vmatpush.msra.mxu0 %v272
        %344 = vmatpush.msra.mxu0 %v268
        %345 = vmatpush.msra.mxu0 %v264
        %346 = vmatpush.msra.mxu0 %v260
        %347 = vmatpush.msra.mxu0 %v256
        %348 = vmatpush.msra.mxu0 %v252
        %349 = vmatpush.msra.mxu0 %v248
        %350 = vmatpush.msra.mxu0 %v244
        %351 = vmatpush.msra.mxu0 %v240
        %352 = vmatpush.msra.mxu0 %v236
        %353 = vmatpush.msra.mxu0 %v232
        %354 = vmatpush.msra.mxu0 %v228
        %355 = vmatpush.msra.mxu0 %v224
        %356 = vmatpush.msra.mxu0 %v220
        %357 = vmatmul.f32.gmra.mxu0 %v211
        %v358 = vpop.f32.mrf.mxu0
        %v359 = vadd.f32 0.0, %v358
        %360 = vdwg.mxu0
        %v361 = vadd.f32 %v213, %v299
        %v362 = vadd.f32 %v214, %v319
        %v363 = vadd.f32 %v215, %v339
        %v364 = vadd.f32 %v216, %v359
        %v365 = vxor.u32 %v361, 2147483648
        %v366 = vmul.f32 %v365, 1.442695
        %v367 = vpow.pop %v366
        %v368 = vadd.f32 %v367, 1.0
        %v369 = vrcp.pop %v368
        %v370 = vmul.f32 %v368, %v369
        %v371 = vsub.f32 1.0, %v370
        %v372 = vmul.f32 %v369, %v371
        %v373 = vadd.f32 %v369, %v372
        %vm374 = vweird.f32 %v368
        %vm375 = vweird.f32 %v369
        %vm376 = vmor %vm374, %vm375
        %v377 = vsel %vm376, %v369, %v373
        %v378 = vand.u32 2147483647, %v368
        %vm379 = vcmp.eq.f32.partialorder %v378, 8.507059e+37
        %v380 = vand.u32 %v368, 2147483648
        %v381 = vor.u32 1.1754944e-38, %v380
        %v382 = vsel %vm379, %v381, %v377
        %v383 = vmul.f32 1.0, %v382
        %v384 = vxor.u32 %v362, 2147483648
        %v385 = vmul.f32 %v384, 1.442695
        %v386 = vpow.pop %v385
        %v387 = vadd.f32 %v386, 1.0
        %v388 = vrcp.pop %v387
        %v389 = vmul.f32 %v387, %v388
        %v390 = vsub.f32 1.0, %v389
        %v391 = vmul.f32 %v388, %v390
        %v392 = vadd.f32 %v388, %v391
        %vm393 = vweird.f32 %v387
        %vm394 = vweird.f32 %v388
        %vm395 = vmor %vm393, %vm394
        %v396 = vsel %vm395, %v388, %v392
        %v397 = vand.u32 2147483647, %v387
        %vm398 = vcmp.eq.f32.partialorder %v397, 8.507059e+37
        %v399 = vand.u32 %v387, 2147483648
        %v400 = vor.u32 1.1754944e-38, %v399
        %v401 = vsel %vm398, %v400, %v396
        %v402 = vmul.f32 1.0, %v401
        %v403 = vtanh.pop %v363
        %v404 = vxor.u32 %v364, 2147483648
        %v405 = vmul.f32 %v404, 1.442695
        %v406 = vpow.pop %v405
        %v407 = vadd.f32 %v406, 1.0
        %v408 = vrcp.pop %v407
        %v409 = vmul.f32 %v407, %v408
        %v410 = vsub.f32 1.0, %v409
        %v411 = vmul.f32 %v408, %v410
        %v412 = vadd.f32 %v408, %v411
        %vm413 = vweird.f32 %v407
        %vm414 = vweird.f32 %v408
        %vm415 = vmor %vm413, %vm414
        %v416 = vsel %vm415, %v408, %v412
        %v417 = vand.u32 2147483647, %v407
        %vm418 = vcmp.eq.f32.partialorder %v417, 8.507059e+37
        %v419 = vand.u32 %v407, 2147483648
        %v420 = vor.u32 1.1754944e-38, %v419
        %v421 = vsel %vm418, %v420, %v416
        %v422 = vmul.f32 1.0, %v421
        %v423 = vmul.f32 %v402, %v212
        %v424 = vmul.f32 %v383, %v403
        %v425 = vadd.f32 %v423, %v424
        %v426 = vtanh.pop %v425
        %v427 = vmul.f32 %v422, %v426
        %s428 = smul.u32 %s17, 4
        %v429 = vstv %s428
        %vm430 = vcmp.lt.s32.totalorder %v429, %v210
        %v431 = vsel %vm430, 1, 0
        %432 = vset.pattern.permute.xlu0 0
        %433 = vperm.xlu0 %432, %v431
        %v434 = vpop.permute.xlu0 %433
        %vm435 = vcmp.eq.s32.totalorder %v434, 1
        %v436 = vsel %vm435, %v427, 0.0
        %437 = vst [vmem:[%s201] sm:$0xff] %v436
        %v438 = vrot.slane %v436, 4
        %v439 = vadd.f32 %v436, %v438
        %v440 = vrot.slane %v439, 2
        %v441 = vadd.f32 %v439, %v440
        %v442 = vrot.slane %v441, 1
        %v443 = vadd.f32 %v441, %v442
        %v444 = vadd.f32 %v443, 0.0
        %v445 = vmul.f32 %v436, %v436
        %v446 = vrot.slane %v445, 4
        %v447 = vadd.f32 %v445, %v446
        %v448 = vrot.slane %v447, 2
        %v449 = vadd.f32 %v447, %v448
        %v450 = vrot.slane %v449, 1
        %v451 = vadd.f32 %v449, %v450
        %v452 = vadd.f32 %v451, 0.0
        %s453 = scalar_lea.vmem %s195, 32
        %v454 = vld [vmem:[%s453] sm:$0xff]
        %v455 = vld [vmem:[%s453 + $0x8] sm:$0xff]
        %v456 = vld [vmem:[%s453 + $0x10] sm:$0xff]
        %v457 = vld [vmem:[%s453 + $0x18] sm:$0xff]
        %v458 = vld [vmem:[%s1] sm:$0xff]
        %v459 = vld [vmem:[%s1 + $0x8] sm:$0xff]
        %v460 = vld [vmem:[%s1 + $0x10] sm:$0xff]
        %v461 = vld [vmem:[%s1 + $0x18] sm:$0xff]
        %v462 = vld [vmem:[%s1 + $0x20] sm:$0xff]
        %v463 = vld [vmem:[%s1 + $0x28] sm:$0xff]
        %v464 = vld [vmem:[%s1 + $0x30] sm:$0xff]
        %v465 = vld [vmem:[%s1 + $0x38] sm:$0xff]
        %v466 = vld [vmem:[%s1 + $0x40] sm:$0xff]
        %v467 = vld [vmem:[%s1 + $0x48] sm:$0xff]
        %v468 = vld [vmem:[%s1 + $0x50] sm:$0xff]
        %v469 = vld [vmem:[%s1 + $0x58] sm:$0xff]
        %v470 = vld [vmem:[%s1 + $0x60] sm:$0xff]
        %v471 = vld [vmem:[%s1 + $0x68] sm:$0xff]
        %v472 = vld [vmem:[%s1 + $0x70] sm:$0xff]
        %v473 = vld [vmem:[%s1 + $0x78] sm:$0xff]
        %v474 = vld [vmem:[%s1 + $0x80] sm:$0xff]
        %v475 = vld [vmem:[%s1 + $0x88] sm:$0xff]
        %v476 = vld [vmem:[%s1 + $0x90] sm:$0xff]
        %v477 = vld [vmem:[%s1 + $0x98] sm:$0xff]
        %v478 = vld [vmem:[%s1 + $0xa0] sm:$0xff]
        %v479 = vld [vmem:[%s1 + $0xa8] sm:$0xff]
        %v480 = vld [vmem:[%s1 + $0xb0] sm:$0xff]
        %v481 = vld [vmem:[%s1 + $0xb8] sm:$0xff]
        %v482 = vld [vmem:[%s1 + $0xc0] sm:$0xff]
        %v483 = vld [vmem:[%s1 + $0xc8] sm:$0xff]
        %v484 = vld [vmem:[%s1 + $0xd0] sm:$0xff]
        %v485 = vld [vmem:[%s1 + $0xd8] sm:$0xff]
        %v486 = vld [vmem:[%s1 + $0xe0] sm:$0xff]
        %v487 = vld [vmem:[%s1 + $0xe8] sm:$0xff]
        %v488 = vld [vmem:[%s1 + $0xf0] sm:$0xff]
        %v489 = vld [vmem:[%s1 + $0xf8] sm:$0xff]
        %v490 = vld [vmem:[%s1 + $0x100] sm:$0xff]
        %v491 = vld [vmem:[%s1 + $0x108] sm:$0xff]
        %v492 = vld [vmem:[%s1 + $0x110] sm:$0xff]
        %v493 = vld [vmem:[%s1 + $0x118] sm:$0xff]
        %v494 = vld [vmem:[%s1 + $0x120] sm:$0xff]
        %v495 = vld [vmem:[%s1 + $0x128] sm:$0xff]
        %v496 = vld [vmem:[%s1 + $0x130] sm:$0xff]
        %v497 = vld [vmem:[%s1 + $0x138] sm:$0xff]
        %v498 = vld [vmem:[%s1 + $0x140] sm:$0xff]
        %v499 = vld [vmem:[%s1 + $0x148] sm:$0xff]
        %v500 = vld [vmem:[%s1 + $0x150] sm:$0xff]
        %v501 = vld [vmem:[%s1 + $0x158] sm:$0xff]
        %v502 = vld [vmem:[%s1 + $0x160] sm:$0xff]
        %v503 = vld [vmem:[%s1 + $0x168] sm:$0xff]
        %v504 = vld [vmem:[%s1 + $0x170] sm:$0xff]
        %v505 = vld [vmem:[%s1 + $0x178] sm:$0xff]
        %v506 = vld [vmem:[%s1 + $0x180] sm:$0xff]
        %v507 = vld [vmem:[%s1 + $0x188] sm:$0xff]
        %v508 = vld [vmem:[%s1 + $0x190] sm:$0xff]
        %v509 = vld [vmem:[%s1 + $0x198] sm:$0xff]
        %v510 = vld [vmem:[%s1 + $0x1a0] sm:$0xff]
        %v511 = vld [vmem:[%s1 + $0x1a8] sm:$0xff]
        %v512 = vld [vmem:[%s1 + $0x1b0] sm:$0xff]
        %v513 = vld [vmem:[%s1 + $0x1b8] sm:$0xff]
        %v514 = vld [vmem:[%s1 + $0x1c0] sm:$0xff]
        %v515 = vld [vmem:[%s1 + $0x1c8] sm:$0xff]
        %v516 = vld [vmem:[%s1 + $0x1d0] sm:$0xff]
        %v517 = vld [vmem:[%s1 + $0x1d8] sm:$0xff]
        %v518 = vld [vmem:[%s1 + $0x1e0] sm:$0xff]
        %v519 = vld [vmem:[%s1 + $0x1e8] sm:$0xff]
        %v520 = vld [vmem:[%s1 + $0x1f0] sm:$0xff]
        %v521 = vld [vmem:[%s1 + $0x1f8] sm:$0xff]
        %522 = vmatpush.msra.mxu0 %v518
        %523 = vmatpush.msra.mxu0 %v514
        %524 = vmatpush.msra.mxu0 %v510
        %525 = vmatpush.msra.mxu0 %v506
        %526 = vmatpush.msra.mxu0 %v502
        %527 = vmatpush.msra.mxu0 %v498
        %528 = vmatpush.msra.mxu0 %v494
        %529 = vmatpush.msra.mxu0 %v490
        %530 = vmatpush.msra.mxu0 %v486
        %531 = vmatpush.msra.mxu0 %v482
        %532 = vmatpush.msra.mxu0 %v478
        %533 = vmatpush.msra.mxu0 %v474
        %534 = vmatpush.msra.mxu0 %v470
        %535 = vmatpush.msra.mxu0 %v466
        %536 = vmatpush.msra.mxu0 %v462
        %537 = vmatpush.msra.mxu0 %v458
        %538 = vmatmul.f32.gmra.mxu0 %v427
        %v539 = vpop.f32.mrf.mxu0
        %v540 = vadd.f32 0.0, %v539
        %541 = vdwg.mxu0
        %542 = vmatpush.msra.mxu0 %v519
        %543 = vmatpush.msra.mxu0 %v515
        %544 = vmatpush.msra.mxu0 %v511
        %545 = vmatpush.msra.mxu0 %v507
        %546 = vmatpush.msra.mxu0 %v503
        %547 = vmatpush.msra.mxu0 %v499
        %548 = vmatpush.msra.mxu0 %v495
        %549 = vmatpush.msra.mxu0 %v491
        %550 = vmatpush.msra.mxu0 %v487
        %551 = vmatpush.msra.mxu0 %v483
        %552 = vmatpush.msra.mxu0 %v479
        %553 = vmatpush.msra.mxu0 %v475
        %554 = vmatpush.msra.mxu0 %v471
        %555 = vmatpush.msra.mxu0 %v467
        %556 = vmatpush.msra.mxu0 %v463
        %557 = vmatpush.msra.mxu0 %v459
        %558 = vmatmul.f32.gmra.mxu0 %v427
        %v559 = vpop.f32.mrf.mxu0
        %v560 = vadd.f32 0.0, %v559
        %561 = vdwg.mxu0
        %562 = vmatpush.msra.mxu0 %v520
        %563 = vmatpush.msra.mxu0 %v516
        %564 = vmatpush.msra.mxu0 %v512
        %565 = vmatpush.msra.mxu0 %v508
        %566 = vmatpush.msra.mxu0 %v504
        %567 = vmatpush.msra.mxu0 %v500
        %568 = vmatpush.msra.mxu0 %v496
        %569 = vmatpush.msra.mxu0 %v492
        %570 = vmatpush.msra.mxu0 %v488
        %571 = vmatpush.msra.mxu0 %v484
        %572 = vmatpush.msra.mxu0 %v480
        %573 = vmatpush.msra.mxu0 %v476
        %574 = vmatpush.msra.mxu0 %v472
        %575 = vmatpush.msra.mxu0 %v468
        %576 = vmatpush.msra.mxu0 %v464
        %577 = vmatpush.msra.mxu0 %v460
        %578 = vmatmul.f32.gmra.mxu0 %v427
        %v579 = vpop.f32.mrf.mxu0
        %v580 = vadd.f32 0.0, %v579
        %581 = vdwg.mxu0
        %582 = vmatpush.msra.mxu0 %v521
        %583 = vmatpush.msra.mxu0 %v517
        %584 = vmatpush.msra.mxu0 %v513
        %585 = vmatpush.msra.mxu0 %v509
        %586 = vmatpush.msra.mxu0 %v505
        %587 = vmatpush.msra.mxu0 %v501
        %588 = vmatpush.msra.mxu0 %v497
        %589 = vmatpush.msra.mxu0 %v493
        %590 = vmatpush.msra.mxu0 %v489
        %591 = vmatpush.msra.mxu0 %v485
        %592 = vmatpush.msra.mxu0 %v481
        %593 = vmatpush.msra.mxu0 %v477
        %594 = vmatpush.msra.mxu0 %v473
        %595 = vmatpush.msra.mxu0 %v469
        %596 = vmatpush.msra.mxu0 %v465
        %597 = vmatpush.msra.mxu0 %v461
        %598 = vmatmul.f32.gmra.mxu0 %v427
        %v599 = vpop.f32.mrf.mxu0
        %v600 = vadd.f32 0.0, %v599
        %601 = vdwg.mxu0
        %v602 = vadd.f32 %v454, %v540
        %v603 = vadd.f32 %v455, %v560
        %v604 = vadd.f32 %v456, %v580
        %v605 = vadd.f32 %v457, %v600
        %v606 = vxor.u32 %v602, 2147483648
        %v607 = vmul.f32 %v606, 1.442695
        %v608 = vpow.pop %v607
        %v609 = vadd.f32 %v608, 1.0
        %v610 = vrcp.pop %v609
        %v611 = vmul.f32 %v609, %v610
        %v612 = vsub.f32 1.0, %v611
        %v613 = vmul.f32 %v610, %v612
        %v614 = vadd.f32 %v610, %v613
        %vm615 = vweird.f32 %v609
        %vm616 = vweird.f32 %v610
        %vm617 = vmor %vm615, %vm616
        %v618 = vsel %vm617, %v610, %v614
        %v619 = vand.u32 2147483647, %v609
        %vm620 = vcmp.eq.f32.partialorder %v619, 8.507059e+37
        %v621 = vand.u32 %v609, 2147483648
        %v622 = vor.u32 1.1754944e-38, %v621
        %v623 = vsel %vm620, %v622, %v618
        %v624 = vmul.f32 1.0, %v623
        %v625 = vxor.u32 %v603, 2147483648
        %v626 = vmul.f32 %v625, 1.442695
        %v627 = vpow.pop %v626
        %v628 = vadd.f32 %v627, 1.0
        %v629 = vrcp.pop %v628
        %v630 = vmul.f32 %v628, %v629
        %v631 = vsub.f32 1.0, %v630
        %v632 = vmul.f32 %v629, %v631
        %v633 = vadd.f32 %v629, %v632
        %vm634 = vweird.f32 %v628
        %vm635 = vweird.f32 %v629
        %vm636 = vmor %vm634, %vm635
        %v637 = vsel %vm636, %v629, %v633
        %v638 = vand.u32 2147483647, %v628
        %vm639 = vcmp.eq.f32.partialorder %v638, 8.507059e+37
        %v640 = vand.u32 %v628, 2147483648
        %v641 = vor.u32 1.1754944e-38, %v640
        %v642 = vsel %vm639, %v641, %v637
        %v643 = vmul.f32 1.0, %v642
        %v644 = vtanh.pop %v604
        %v645 = vxor.u32 %v605, 2147483648
        %v646 = vmul.f32 %v645, 1.442695
        %v647 = vpow.pop %v646
        %v648 = vadd.f32 %v647, 1.0
        %v649 = vrcp.pop %v648
        %v650 = vmul.f32 %v648, %v649
        %v651 = vsub.f32 1.0, %v650
        %v652 = vmul.f32 %v649, %v651
        %v653 = vadd.f32 %v649, %v652
        %vm654 = vweird.f32 %v648
        %vm655 = vweird.f32 %v649
        %vm656 = vmor %vm654, %vm655
        %v657 = vsel %vm656, %v649, %v653
        %v658 = vand.u32 2147483647, %v648
        %vm659 = vcmp.eq.f32.partialorder %v658, 8.507059e+37
        %v660 = vand.u32 %v648, 2147483648
        %v661 = vor.u32 1.1754944e-38, %v660
        %v662 = vsel %vm659, %v661, %v657
        %v663 = vmul.f32 1.0, %v662
        %v664 = vmul.f32 %v643, %v425
        %v665 = vmul.f32 %v624, %v644
        %v666 = vadd.f32 %v664, %v665
        %v667 = vtanh.pop %v666
        %v668 = vmul.f32 %v663, %v667
        %s669 = sadd.s32 %s428, 1
        %v670 = vstv %s669
        %vm671 = vcmp.lt.s32.totalorder %v670, %v210
        %v672 = vsel %vm671, 1, 0
        %673 = vset.pattern.permute.xlu0 0
        %674 = vperm.xlu0 %673, %v672
        %v675 = vpop.permute.xlu0 %674
        %vm676 = vcmp.eq.s32.totalorder %v675, 1
        %v677 = vsel %vm676, %v668, 0.0
        %s678 = scalar_lea.vmem %s201, 8
        %679 = vst [vmem:[%s678] sm:$0xff] %v677
        %v680 = vrot.slane %v677, 4
        %v681 = vadd.f32 %v677, %v680
        %v682 = vrot.slane %v681, 2
        %v683 = vadd.f32 %v681, %v682
        %v684 = vrot.slane %v683, 1
        %v685 = vadd.f32 %v683, %v684
        %v686 = vadd.f32 %v444, %v685
        %v687 = vmul.f32 %v677, %v677
        %v688 = vrot.slane %v687, 4
        %v689 = vadd.f32 %v687, %v688
        %v690 = vrot.slane %v689, 2
        %v691 = vadd.f32 %v689, %v690
        %v692 = vrot.slane %v691, 1
        %v693 = vadd.f32 %v691, %v692
        %v694 = vadd.f32 %v452, %v693
        %s695 = scalar_lea.vmem %s195, 64
        %v696 = vld [vmem:[%s695] sm:$0xff]
        %v697 = vld [vmem:[%s695 + $0x8] sm:$0xff]
        %v698 = vld [vmem:[%s695 + $0x10] sm:$0xff]
        %v699 = vld [vmem:[%s695 + $0x18] sm:$0xff]
        %v700 = vld [vmem:[%s1] sm:$0xff]
        %v701 = vld [vmem:[%s1 + $0x8] sm:$0xff]
        %v702 = vld [vmem:[%s1 + $0x10] sm:$0xff]
        %v703 = vld [vmem:[%s1 + $0x18] sm:$0xff]
        %v704 = vld [vmem:[%s1 + $0x20] sm:$0xff]
        %v705 = vld [vmem:[%s1 + $0x28] sm:$0xff]
        %v706 = vld [vmem:[%s1 + $0x30] sm:$0xff]
        %v707 = vld [vmem:[%s1 + $0x38] sm:$0xff]
        %v708 = vld [vmem:[%s1 + $0x40] sm:$0xff]
        %v709 = vld [vmem:[%s1 + $0x48] sm:$0xff]
        %v710 = vld [vmem:[%s1 + $0x50] sm:$0xff]
        %v711 = vld [vmem:[%s1 + $0x58] sm:$0xff]
        %v712 = vld [vmem:[%s1 + $0x60] sm:$0xff]
        %v713 = vld [vmem:[%s1 + $0x68] sm:$0xff]
        %v714 = vld [vmem:[%s1 + $0x70] sm:$0xff]
        %v715 = vld [vmem:[%s1 + $0x78] sm:$0xff]
        %v716 = vld [vmem:[%s1 + $0x80] sm:$0xff]
        %v717 = vld [vmem:[%s1 + $0x88] sm:$0xff]
        %v718 = vld [vmem:[%s1 + $0x90] sm:$0xff]
        %v719 = vld [vmem:[%s1 + $0x98] sm:$0xff]
        %v720 = vld [vmem:[%s1 + $0xa0] sm:$0xff]
        %v721 = vld [vmem:[%s1 + $0xa8] sm:$0xff]
        %v722 = vld [vmem:[%s1 + $0xb0] sm:$0xff]
        %v723 = vld [vmem:[%s1 + $0xb8] sm:$0xff]
        %v724 = vld [vmem:[%s1 + $0xc0] sm:$0xff]
        %v725 = vld [vmem:[%s1 + $0xc8] sm:$0xff]
        %v726 = vld [vmem:[%s1 + $0xd0] sm:$0xff]
        %v727 = vld [vmem:[%s1 + $0xd8] sm:$0xff]
        %v728 = vld [vmem:[%s1 + $0xe0] sm:$0xff]
        %v729 = vld [vmem:[%s1 + $0xe8] sm:$0xff]
        %v730 = vld [vmem:[%s1 + $0xf0] sm:$0xff]
        %v731 = vld [vmem:[%s1 + $0xf8] sm:$0xff]
        %v732 = vld [vmem:[%s1 + $0x100] sm:$0xff]
        %v733 = vld [vmem:[%s1 + $0x108] sm:$0xff]
        %v734 = vld [vmem:[%s1 + $0x110] sm:$0xff]
        %v735 = vld [vmem:[%s1 + $0x118] sm:$0xff]
        %v736 = vld [vmem:[%s1 + $0x120] sm:$0xff]
        %v737 = vld [vmem:[%s1 + $0x128] sm:$0xff]
        %v738 = vld [vmem:[%s1 + $0x130] sm:$0xff]
        %v739 = vld [vmem:[%s1 + $0x138] sm:$0xff]
        %v740 = vld [vmem:[%s1 + $0x140] sm:$0xff]
        %v741 = vld [vmem:[%s1 + $0x148] sm:$0xff]
        %v742 = vld [vmem:[%s1 + $0x150] sm:$0xff]
        %v743 = vld [vmem:[%s1 + $0x158] sm:$0xff]
        %v744 = vld [vmem:[%s1 + $0x160] sm:$0xff]
        %v745 = vld [vmem:[%s1 + $0x168] sm:$0xff]
        %v746 = vld [vmem:[%s1 + $0x170] sm:$0xff]
        %v747 = vld [vmem:[%s1 + $0x178] sm:$0xff]
        %v748 = vld [vmem:[%s1 + $0x180] sm:$0xff]
        %v749 = vld [vmem:[%s1 + $0x188] sm:$0xff]
        %v750 = vld [vmem:[%s1 + $0x190] sm:$0xff]
        %v751 = vld [vmem:[%s1 + $0x198] sm:$0xff]
        %v752 = vld [vmem:[%s1 + $0x1a0] sm:$0xff]
        %v753 = vld [vmem:[%s1 + $0x1a8] sm:$0xff]
        %v754 = vld [vmem:[%s1 + $0x1b0] sm:$0xff]
        %v755 = vld [vmem:[%s1 + $0x1b8] sm:$0xff]
        %v756 = vld [vmem:[%s1 + $0x1c0] sm:$0xff]
        %v757 = vld [vmem:[%s1 + $0x1c8] sm:$0xff]
        %v758 = vld [vmem:[%s1 + $0x1d0] sm:$0xff]
        %v759 = vld [vmem:[%s1 + $0x1d8] sm:$0xff]
        %v760 = vld [vmem:[%s1 + $0x1e0] sm:$0xff]
        %v761 = vld [vmem:[%s1 + $0x1e8] sm:$0xff]
        %v762 = vld [vmem:[%s1 + $0x1f0] sm:$0xff]
        %v763 = vld [vmem:[%s1 + $0x1f8] sm:$0xff]
        %764 = vmatpush.msra.mxu0 %v760
        %765 = vmatpush.msra.mxu0 %v756
        %766 = vmatpush.msra.mxu0 %v752
        %767 = vmatpush.msra.mxu0 %v748
        %768 = vmatpush.msra.mxu0 %v744
        %769 = vmatpush.msra.mxu0 %v740
        %770 = vmatpush.msra.mxu0 %v736
        %771 = vmatpush.msra.mxu0 %v732
        %772 = vmatpush.msra.mxu0 %v728
        %773 = vmatpush.msra.mxu0 %v724
        %774 = vmatpush.msra.mxu0 %v720
        %775 = vmatpush.msra.mxu0 %v716
        %776 = vmatpush.msra.mxu0 %v712
        %777 = vmatpush.msra.mxu0 %v708
        %778 = vmatpush.msra.mxu0 %v704
        %779 = vmatpush.msra.mxu0 %v700
        %780 = vmatmul.f32.gmra.mxu0 %v668
        %v781 = vpop.f32.mrf.mxu0
        %v782 = vadd.f32 0.0, %v781
        %783 = vdwg.mxu0
        %784 = vmatpush.msra.mxu0 %v761
        %785 = vmatpush.msra.mxu0 %v757
        %786 = vmatpush.msra.mxu0 %v753
        %787 = vmatpush.msra.mxu0 %v749
        %788 = vmatpush.msra.mxu0 %v745
        %789 = vmatpush.msra.mxu0 %v741
        %790 = vmatpush.msra.mxu0 %v737
        %791 = vmatpush.msra.mxu0 %v733
        %792 = vmatpush.msra.mxu0 %v729
        %793 = vmatpush.msra.mxu0 %v725
        %794 = vmatpush.msra.mxu0 %v721
        %795 = vmatpush.msra.mxu0 %v717
        %796 = vmatpush.msra.mxu0 %v713
        %797 = vmatpush.msra.mxu0 %v709
        %798 = vmatpush.msra.mxu0 %v705
        %799 = vmatpush.msra.mxu0 %v701
        %800 = vmatmul.f32.gmra.mxu0 %v668
        %v801 = vpop.f32.mrf.mxu0
        %v802 = vadd.f32 0.0, %v801
        %803 = vdwg.mxu0
        %804 = vmatpush.msra.mxu0 %v762
        %805 = vmatpush.msra.mxu0 %v758
        %806 = vmatpush.msra.mxu0 %v754
        %807 = vmatpush.msra.mxu0 %v750
        %808 = vmatpush.msra.mxu0 %v746
        %809 = vmatpush.msra.mxu0 %v742
        %810 = vmatpush.msra.mxu0 %v738
        %811 = vmatpush.msra.mxu0 %v734
        %812 = vmatpush.msra.mxu0 %v730
        %813 = vmatpush.msra.mxu0 %v726
        %814 = vmatpush.msra.mxu0 %v722
        %815 = vmatpush.msra.mxu0 %v718
        %816 = vmatpush.msra.mxu0 %v714
        %817 = vmatpush.msra.mxu0 %v710
        %818 = vmatpush.msra.mxu0 %v706
        %819 = vmatpush.msra.mxu0 %v702
        %820 = vmatmul.f32.gmra.mxu0 %v668
        %v821 = vpop.f32.mrf.mxu0
        %v822 = vadd.f32 0.0, %v821
        %823 = vdwg.mxu0
        %824 = vmatpush.msra.mxu0 %v763
        %825 = vmatpush.msra.mxu0 %v759
        %826 = vmatpush.msra.mxu0 %v755
        %827 = vmatpush.msra.mxu0 %v751
        %828 = vmatpush.msra.mxu0 %v747
        %829 = vmatpush.msra.mxu0 %v743
        %830 = vmatpush.msra.mxu0 %v739
        %831 = vmatpush.msra.mxu0 %v735
        %832 = vmatpush.msra.mxu0 %v731
        %833 = vmatpush.msra.mxu0 %v727
        %834 = vmatpush.msra.mxu0 %v723
        %835 = vmatpush.msra.mxu0 %v719
        %836 = vmatpush.msra.mxu0 %v715
        %837 = vmatpush.msra.mxu0 %v711
        %838 = vmatpush.msra.mxu0 %v707
        %839 = vmatpush.msra.mxu0 %v703
        %840 = vmatmul.f32.gmra.mxu0 %v668
        %v841 = vpop.f32.mrf.mxu0
        %v842 = vadd.f32 0.0, %v841
        %843 = vdwg.mxu0
        %v844 = vadd.f32 %v696, %v782
        %v845 = vadd.f32 %v697, %v802
        %v846 = vadd.f32 %v698, %v822
        %v847 = vadd.f32 %v699, %v842
        %v848 = vxor.u32 %v844, 2147483648
        %v849 = vmul.f32 %v848, 1.442695
        %v850 = vpow.pop %v849
        %v851 = vadd.f32 %v850, 1.0
        %v852 = vrcp.pop %v851
        %v853 = vmul.f32 %v851, %v852
        %v854 = vsub.f32 1.0, %v853
        %v855 = vmul.f32 %v852, %v854
        %v856 = vadd.f32 %v852, %v855
        %vm857 = vweird.f32 %v851
        %vm858 = vweird.f32 %v852
        %vm859 = vmor %vm857, %vm858
        %v860 = vsel %vm859, %v852, %v856
        %v861 = vand.u32 2147483647, %v851
        %vm862 = vcmp.eq.f32.partialorder %v861, 8.507059e+37
        %v863 = vand.u32 %v851, 2147483648
        %v864 = vor.u32 1.1754944e-38, %v863
        %v865 = vsel %vm862, %v864, %v860
        %v866 = vmul.f32 1.0, %v865
        %v867 = vxor.u32 %v845, 2147483648
        %v868 = vmul.f32 %v867, 1.442695
        %v869 = vpow.pop %v868
        %v870 = vadd.f32 %v869, 1.0
        %v871 = vrcp.pop %v870
        %v872 = vmul.f32 %v870, %v871
        %v873 = vsub.f32 1.0, %v872
        %v874 = vmul.f32 %v871, %v873
        %v875 = vadd.f32 %v871, %v874
        %vm876 = vweird.f32 %v870
        %vm877 = vweird.f32 %v871
        %vm878 = vmor %vm876, %vm877
        %v879 = vsel %vm878, %v871, %v875
        %v880 = vand.u32 2147483647, %v870
        %vm881 = vcmp.eq.f32.partialorder %v880, 8.507059e+37
        %v882 = vand.u32 %v870, 2147483648
        %v883 = vor.u32 1.1754944e-38, %v882
        %v884 = vsel %vm881, %v883, %v879
        %v885 = vmul.f32 1.0, %v884
        %v886 = vtanh.pop %v846
        %v887 = vxor.u32 %v847, 2147483648
        %v888 = vmul.f32 %v887, 1.442695
        %v889 = vpow.pop %v888
        %v890 = vadd.f32 %v889, 1.0
        %v891 = vrcp.pop %v890
        %v892 = vmul.f32 %v890, %v891
        %v893 = vsub.f32 1.0, %v892
        %v894 = vmul.f32 %v891, %v893
        %v895 = vadd.f32 %v891, %v894
        %vm896 = vweird.f32 %v890
        %vm897 = vweird.f32 %v891
        %vm898 = vmor %vm896, %vm897
        %v899 = vsel %vm898, %v891, %v895
        %v900 = vand.u32 2147483647, %v890
        %vm901 = vcmp.eq.f32.partialorder %v900, 8.507059e+37
        %v902 = vand.u32 %v890, 2147483648
        %v903 = vor.u32 1.1754944e-38, %v902
        %v904 = vsel %vm901, %v903, %v899
        %v905 = vmul.f32 1.0, %v904
        %v906 = vmul.f32 %v885, %v666
        %v907 = vmul.f32 %v866, %v886
        %v908 = vadd.f32 %v906, %v907
        %v909 = vtanh.pop %v908
        %v910 = vmul.f32 %v905, %v909
        %s911 = sadd.s32 %s428, 2
        %v912 = vstv %s911
        %vm913 = vcmp.lt.s32.totalorder %v912, %v210
        %v914 = vsel %vm913, 1, 0
        %915 = vset.pattern.permute.xlu0 0
        %916 = vperm.xlu0 %915, %v914
        %v917 = vpop.permute.xlu0 %916
        %vm918 = vcmp.eq.s32.totalorder %v917, 1
        %v919 = vsel %vm918, %v910, 0.0
        %s920 = scalar_lea.vmem %s201, 16
        %921 = vst [vmem:[%s920] sm:$0xff] %v919
        %v922 = vrot.slane %v919, 4
        %v923 = vadd.f32 %v919, %v922
        %v924 = vrot.slane %v923, 2
        %v925 = vadd.f32 %v923, %v924
        %v926 = vrot.slane %v925, 1
        %v927 = vadd.f32 %v925, %v926
        %v928 = vadd.f32 %v686, %v927
        %v929 = vmul.f32 %v919, %v919
        %v930 = vrot.slane %v929, 4
        %v931 = vadd.f32 %v929, %v930
        %v932 = vrot.slane %v931, 2
        %v933 = vadd.f32 %v931, %v932
        %v934 = vrot.slane %v933, 1
        %v935 = vadd.f32 %v933, %v934
        %v936 = vadd.f32 %v694, %v935
        %s937 = scalar_lea.vmem %s195, 96
        %v938 = vld [vmem:[%s937] sm:$0xff]
        %v939 = vld [vmem:[%s937 + $0x8] sm:$0xff]
        %v940 = vld [vmem:[%s937 + $0x10] sm:$0xff]
        %v941 = vld [vmem:[%s937 + $0x18] sm:$0xff]
        %v942 = vld [vmem:[%s1] sm:$0xff]
        %v943 = vld [vmem:[%s1 + $0x8] sm:$0xff]
        %v944 = vld [vmem:[%s1 + $0x10] sm:$0xff]
        %v945 = vld [vmem:[%s1 + $0x18] sm:$0xff]
        %v946 = vld [vmem:[%s1 + $0x20] sm:$0xff]
        %v947 = vld [vmem:[%s1 + $0x28] sm:$0xff]
        %v948 = vld [vmem:[%s1 + $0x30] sm:$0xff]
        %v949 = vld [vmem:[%s1 + $0x38] sm:$0xff]
        %v950 = vld [vmem:[%s1 + $0x40] sm:$0xff]
        %v951 = vld [vmem:[%s1 + $0x48] sm:$0xff]
        %v952 = vld [vmem:[%s1 + $0x50] sm:$0xff]
        %v953 = vld [vmem:[%s1 + $0x58] sm:$0xff]
        %v954 = vld [vmem:[%s1 + $0x60] sm:$0xff]
        %v955 = vld [vmem:[%s1 + $0x68] sm:$0xff]
        %v956 = vld [vmem:[%s1 + $0x70] sm:$0xff]
        %v957 = vld [vmem:[%s1 + $0x78] sm:$0xff]
        %v958 = vld [vmem:[%s1 + $0x80] sm:$0xff]
        %v959 = vld [vmem:[%s1 + $0x88] sm:$0xff]
        %v960 = vld [vmem:[%s1 + $0x90] sm:$0xff]
        %v961 = vld [vmem:[%s1 + $0x98] sm:$0xff]
        %v962 = vld [vmem:[%s1 + $0xa0] sm:$0xff]
        %v963 = vld [vmem:[%s1 + $0xa8] sm:$0xff]
        %v964 = vld [vmem:[%s1 + $0xb0] sm:$0xff]
        %v965 = vld [vmem:[%s1 + $0xb8] sm:$0xff]
        %v966 = vld [vmem:[%s1 + $0xc0] sm:$0xff]
        %v967 = vld [vmem:[%s1 + $0xc8] sm:$0xff]
        %v968 = vld [vmem:[%s1 + $0xd0] sm:$0xff]
        %v969 = vld [vmem:[%s1 + $0xd8] sm:$0xff]
        %v970 = vld [vmem:[%s1 + $0xe0] sm:$0xff]
        %v971 = vld [vmem:[%s1 + $0xe8] sm:$0xff]
        %v972 = vld [vmem:[%s1 + $0xf0] sm:$0xff]
        %v973 = vld [vmem:[%s1 + $0xf8] sm:$0xff]
        %v974 = vld [vmem:[%s1 + $0x100] sm:$0xff]
        %v975 = vld [vmem:[%s1 + $0x108] sm:$0xff]
        %v976 = vld [vmem:[%s1 + $0x110] sm:$0xff]
        %v977 = vld [vmem:[%s1 + $0x118] sm:$0xff]
        %v978 = vld [vmem:[%s1 + $0x120] sm:$0xff]
        %v979 = vld [vmem:[%s1 + $0x128] sm:$0xff]
        %v980 = vld [vmem:[%s1 + $0x130] sm:$0xff]
        %v981 = vld [vmem:[%s1 + $0x138] sm:$0xff]
        %v982 = vld [vmem:[%s1 + $0x140] sm:$0xff]
        %v983 = vld [vmem:[%s1 + $0x148] sm:$0xff]
        %v984 = vld [vmem:[%s1 + $0x150] sm:$0xff]
        %v985 = vld [vmem:[%s1 + $0x158] sm:$0xff]
        %v986 = vld [vmem:[%s1 + $0x160] sm:$0xff]
        %v987 = vld [vmem:[%s1 + $0x168] sm:$0xff]
        %v988 = vld [vmem:[%s1 + $0x170] sm:$0xff]
        %v989 = vld [vmem:[%s1 + $0x178] sm:$0xff]
        %v990 = vld [vmem:[%s1 + $0x180] sm:$0xff]
        %v991 = vld [vmem:[%s1 + $0x188] sm:$0xff]
        %v992 = vld [vmem:[%s1 + $0x190] sm:$0xff]
        %v993 = vld [vmem:[%s1 + $0x198] sm:$0xff]
        %v994 = vld [vmem:[%s1 + $0x1a0] sm:$0xff]
        %v995 = vld [vmem:[%s1 + $0x1a8] sm:$0xff]
        %v996 = vld [vmem:[%s1 + $0x1b0] sm:$0xff]
        %v997 = vld [vmem:[%s1 + $0x1b8] sm:$0xff]
        %v998 = vld [vmem:[%s1 + $0x1c0] sm:$0xff]
        %v999 = vld [vmem:[%s1 + $0x1c8] sm:$0xff]
        %v1000 = vld [vmem:[%s1 + $0x1d0] sm:$0xff]
        %v1001 = vld [vmem:[%s1 + $0x1d8] sm:$0xff]
        %v1002 = vld [vmem:[%s1 + $0x1e0] sm:$0xff]
        %v1003 = vld [vmem:[%s1 + $0x1e8] sm:$0xff]
        %v1004 = vld [vmem:[%s1 + $0x1f0] sm:$0xff]
        %v1005 = vld [vmem:[%s1 + $0x1f8] sm:$0xff]
        %1006 = vmatpush.msra.mxu0 %v1002
        %1007 = vmatpush.msra.mxu0 %v998
        %1008 = vmatpush.msra.mxu0 %v994
        %1009 = vmatpush.msra.mxu0 %v990
        %1010 = vmatpush.msra.mxu0 %v986
        %1011 = vmatpush.msra.mxu0 %v982
        %1012 = vmatpush.msra.mxu0 %v978
        %1013 = vmatpush.msra.mxu0 %v974
        %1014 = vmatpush.msra.mxu0 %v970
        %1015 = vmatpush.msra.mxu0 %v966
        %1016 = vmatpush.msra.mxu0 %v962
        %1017 = vmatpush.msra.mxu0 %v958
        %1018 = vmatpush.msra.mxu0 %v954
        %1019 = vmatpush.msra.mxu0 %v950
        %1020 = vmatpush.msra.mxu0 %v946
        %1021 = vmatpush.msra.mxu0 %v942
        %1022 = vmatmul.f32.gmra.mxu0 %v910
        %v1023 = vpop.f32.mrf.mxu0
        %v1024 = vadd.f32 0.0, %v1023
        %1025 = vdwg.mxu0
        %1026 = vmatpush.msra.mxu0 %v1003
        %1027 = vmatpush.msra.mxu0 %v999
        %1028 = vmatpush.msra.mxu0 %v995
        %1029 = vmatpush.msra.mxu0 %v991
        %1030 = vmatpush.msra.mxu0 %v987
        %1031 = vmatpush.msra.mxu0 %v983
        %1032 = vmatpush.msra.mxu0 %v979
        %1033 = vmatpush.msra.mxu0 %v975
        %1034 = vmatpush.msra.mxu0 %v971
        %1035 = vmatpush.msra.mxu0 %v967
        %1036 = vmatpush.msra.mxu0 %v963
        %1037 = vmatpush.msra.mxu0 %v959
        %1038 = vmatpush.msra.mxu0 %v955
        %1039 = vmatpush.msra.mxu0 %v951
        %1040 = vmatpush.msra.mxu0 %v947
        %1041 = vmatpush.msra.mxu0 %v943
        %1042 = vmatmul.f32.gmra.mxu0 %v910
        %v1043 = vpop.f32.mrf.mxu0
        %v1044 = vadd.f32 0.0, %v1043
        %1045 = vdwg.mxu0
        %1046 = vmatpush.msra.mxu0 %v1004
        %1047 = vmatpush.msra.mxu0 %v1000
        %1048 = vmatpush.msra.mxu0 %v996
        %1049 = vmatpush.msra.mxu0 %v992
        %1050 = vmatpush.msra.mxu0 %v988
        %1051 = vmatpush.msra.mxu0 %v984
        %1052 = vmatpush.msra.mxu0 %v980
        %1053 = vmatpush.msra.mxu0 %v976
        %1054 = vmatpush.msra.mxu0 %v972
        %1055 = vmatpush.msra.mxu0 %v968
        %1056 = vmatpush.msra.mxu0 %v964
        %1057 = vmatpush.msra.mxu0 %v960
        %1058 = vmatpush.msra.mxu0 %v956
        %1059 = vmatpush.msra.mxu0 %v952
        %1060 = vmatpush.msra.mxu0 %v948
        %1061 = vmatpush.msra.mxu0 %v944
        %1062 = vmatmul.f32.gmra.mxu0 %v910
        %v1063 = vpop.f32.mrf.mxu0
        %v1064 = vadd.f32 0.0, %v1063
        %1065 = vdwg.mxu0
        %1066 = vmatpush.msra.mxu0 %v1005
        %1067 = vmatpush.msra.mxu0 %v1001
        %1068 = vmatpush.msra.mxu0 %v997
        %1069 = vmatpush.msra.mxu0 %v993
        %1070 = vmatpush.msra.mxu0 %v989
        %1071 = vmatpush.msra.mxu0 %v985
        %1072 = vmatpush.msra.mxu0 %v981
        %1073 = vmatpush.msra.mxu0 %v977
        %1074 = vmatpush.msra.mxu0 %v973
        %1075 = vmatpush.msra.mxu0 %v969
        %1076 = vmatpush.msra.mxu0 %v965
        %1077 = vmatpush.msra.mxu0 %v961
        %1078 = vmatpush.msra.mxu0 %v957
        %1079 = vmatpush.msra.mxu0 %v953
        %1080 = vmatpush.msra.mxu0 %v949
        %1081 = vmatpush.msra.mxu0 %v945
        %1082 = vmatmul.f32.gmra.mxu0 %v910
        %v1083 = vpop.f32.mrf.mxu0
        %v1084 = vadd.f32 0.0, %v1083
        %1085 = vdwg.mxu0
        %v1086 = vadd.f32 %v938, %v1024
        %v1087 = vadd.f32 %v939, %v1044
        %v1088 = vadd.f32 %v940, %v1064
        %v1089 = vadd.f32 %v941, %v1084
        %v1090 = vxor.u32 %v1086, 2147483648
        %v1091 = vmul.f32 %v1090, 1.442695
        %v1092 = vpow.pop %v1091
        %v1093 = vadd.f32 %v1092, 1.0
        %v1094 = vrcp.pop %v1093
        %v1095 = vmul.f32 %v1093, %v1094
        %v1096 = vsub.f32 1.0, %v1095
        %v1097 = vmul.f32 %v1094, %v1096
        %v1098 = vadd.f32 %v1094, %v1097
        %vm1099 = vweird.f32 %v1093
        %vm1100 = vweird.f32 %v1094
        %vm1101 = vmor %vm1099, %vm1100
        %v1102 = vsel %vm1101, %v1094, %v1098
        %v1103 = vand.u32 2147483647, %v1093
        %vm1104 = vcmp.eq.f32.partialorder %v1103, 8.507059e+37
        %v1105 = vand.u32 %v1093, 2147483648
        %v1106 = vor.u32 1.1754944e-38, %v1105
        %v1107 = vsel %vm1104, %v1106, %v1102
        %v1108 = vmul.f32 1.0, %v1107
        %v1109 = vxor.u32 %v1087, 2147483648
        %v1110 = vmul.f32 %v1109, 1.442695
        %v1111 = vpow.pop %v1110
        %v1112 = vadd.f32 %v1111, 1.0
        %v1113 = vrcp.pop %v1112
        %v1114 = vmul.f32 %v1112, %v1113
        %v1115 = vsub.f32 1.0, %v1114
        %v1116 = vmul.f32 %v1113, %v1115
        %v1117 = vadd.f32 %v1113, %v1116
        %vm1118 = vweird.f32 %v1112
        %vm1119 = vweird.f32 %v1113
        %vm1120 = vmor %vm1118, %vm1119
        %v1121 = vsel %vm1120, %v1113, %v1117
        %v1122 = vand.u32 2147483647, %v1112
        %vm1123 = vcmp.eq.f32.partialorder %v1122, 8.507059e+37
        %v1124 = vand.u32 %v1112, 2147483648
        %v1125 = vor.u32 1.1754944e-38, %v1124
        %v1126 = vsel %vm1123, %v1125, %v1121
        %v1127 = vmul.f32 1.0, %v1126
        %v1128 = vtanh.pop %v1088
        %v1129 = vxor.u32 %v1089, 2147483648
        %v1130 = vmul.f32 %v1129, 1.442695
        %v1131 = vpow.pop %v1130
        %v1132 = vadd.f32 %v1131, 1.0
        %v1133 = vrcp.pop %v1132
        %v1134 = vmul.f32 %v1132, %v1133
        %v1135 = vsub.f32 1.0, %v1134
        %v1136 = vmul.f32 %v1133, %v1135
        %v1137 = vadd.f32 %v1133, %v1136
        %vm1138 = vweird.f32 %v1132
        %vm1139 = vweird.f32 %v1133
        %vm1140 = vmor %vm1138, %vm1139
        %v1141 = vsel %vm1140, %v1133, %v1137
        %v1142 = vand.u32 2147483647, %v1132
        %vm1143 = vcmp.eq.f32.partialorder %v1142, 8.507059e+37
        %v1144 = vand.u32 %v1132, 2147483648
        %v1145 = vor.u32 1.1754944e-38, %v1144
        %v1146 = vsel %vm1143, %v1145, %v1141
        %v1147 = vmul.f32 1.0, %v1146
        %v1148 = vmul.f32 %v1127, %v908
        %v1149 = vmul.f32 %v1108, %v1128
        %v1150 = vadd.f32 %v1148, %v1149
        %v1151 = vtanh.pop %v1150
        %v1152 = vmul.f32 %v1147, %v1151
        %s1153 = sadd.s32 %s428, 3
        %v1154 = vstv %s1153
        %vm1155 = vcmp.lt.s32.totalorder %v1154, %v210
        %v1156 = vsel %vm1155, 1, 0
        %1157 = vset.pattern.permute.xlu0 0
        %1158 = vperm.xlu0 %1157, %v1156
        %v1159 = vpop.permute.xlu0 %1158
        %vm1160 = vcmp.eq.s32.totalorder %v1159, 1
        %v1161 = vsel %vm1160, %v1152, 0.0
        %s1162 = scalar_lea.vmem %s201, 24
        %1163 = vst [vmem:[%s1162] sm:$0xff] %v1161
        %v1164 = vrot.slane %v1161, 4
        %v1165 = vadd.f32 %v1161, %v1164
        %v1166 = vrot.slane %v1165, 2
        %v1167 = vadd.f32 %v1165, %v1166
        %v1168 = vrot.slane %v1167, 1
        %v1169 = vadd.f32 %v1167, %v1168
        %v1170 = vadd.f32 %v928, %v1169
        %v1171 = vmul.f32 %v1161, %v1161
        %v1172 = vrot.slane %v1171, 4
        %v1173 = vadd.f32 %v1171, %v1172
        %v1174 = vrot.slane %v1173, 2
        %v1175 = vadd.f32 %v1173, %v1174
        %v1176 = vrot.slane %v1175, 1
        %v1177 = vadd.f32 %v1175, %v1176
        %v1178 = vadd.f32 %v936, %v1177
        %1179 = vst [vmem:[#allocation2] sm:$0xff] %v1152
        %1180 = vst [vmem:[#allocation3] sm:$0xff] %v1150
        %v1181 = vld [vmem:[#allocation4] sm:$0x1]
        %v1182 = vadd.f32 %v1181, %v1170
        %1183 = vst [vmem:[#allocation4] sm:$0x1] %v1182
        %v1184 = vld [vmem:[#allocation4 + $0x1] sm:$0x1]
        %v1185 = vadd.f32 %v1184, %v1178
        %1186 = vst [vmem:[#allocation4 + $0x1] sm:$0x1] %v1185
        %s1187 = smul.u32 4, %s17
        %p1188 = scmp.lt.s32.totalorder %s1187, 11
        %s1189 = scalar_select %p1188, %s1187, 11
        %s1190 = smul.addr %s1189, 8
        %s1191 = scalar_lea.vmem %s3, %s1190
        // Predicated region
        $region37: #{deep_batch_rnn_forward.11} parent=31 // pred_check
          %p1192 = pneg %p103
        $region38: #{deep_batch_rnn_forward.11} parent=31 // pred_check_branch
          %1194 = sbr.rel (%p1192) target = $region40
        $region39: #{deep_batch_rnn_forward.11} parent=31 // pred_region
          %s1195 = smul.u32 4, %s17
        $region40: #{deep_batch_rnn_forward.11} parent=31 // pred_fallthru
          _
        // Predicated region
        $region41: #{deep_batch_rnn_forward.11} parent=31 // pred_check
          %p1196 = pneg %p124
        $region42: #{deep_batch_rnn_forward.11} parent=31 // pred_check_branch
          %1198 = sbr.rel (%p1196) target = $region44
        $region43: #{deep_batch_rnn_forward.11} parent=31 // pred_region
          %1200 = vsyncadd [#allocation5], 0
          %s1202 = sshll.u32 [#allocation4], 4
          %s1203 = int_to_ptr.vmem [resolvable:$true] %s1202
          %s1204 = sshll.u32 %s4, 4
          %s1205 = int_to_ptr.hbm [resolvable:$true] %s1204
          %1207 = dma.vmem_to_hbm [thread:$0]  %s1203, 32, %s1205, [#allocation5]
        $region44: #{deep_batch_rnn_forward.11} parent=31 // pred_fallthru
          _
        // Predicated region
        $region45: #{deep_batch_rnn_forward.11} parent=31 // pred_check
          %p1208 = pneg %p124
        $region46: #{deep_batch_rnn_forward.11} parent=31 // pred_check_branch
          %1210 = sbr.rel (%p1208) target = $region48
        $region47: #{deep_batch_rnn_forward.11} parent=31 // pred_region
          %1212 = dma.done [#allocation5], 32
        $region48: #{deep_batch_rnn_forward.11} parent=31 // pred_fallthru
          _
      $region32: #{deep_batch_rnn_forward.11} parent=5 // pred_fallthru
        _
      %p1213 = scmp.le.s32.totalorder 2, %s12
      // Predicated region
      $region49: #{deep_batch_rnn_forward.11} parent=5 // pred_check
        %p1214 = pneg %p1213
      $region50: #{deep_batch_rnn_forward.11} parent=5 // pred_check_branch
        %1216 = sbr.rel (%p1214) target = $region52
      $region51: #{deep_batch_rnn_forward.11} parent=5 // pred_region
        %s1217 = ssub.s32 %s12, 2
        // Predicated region
        $region53: #{deep_batch_rnn_forward.11} parent=51 // pred_check
          %p1218 = pneg %p109
        $region54: #{deep_batch_rnn_forward.11} parent=51 // pred_check_branch
          %1220 = sbr.rel (%p1218) target = $region56
        $region55: #{deep_batch_rnn_forward.11} parent=51 // pred_region
          %s1221 = smul.u32 4, %s18
          %p1222 = scmp.lt.s32.totalorder %s1221, 11
          %s1223 = scalar_select %p1222, %s1221, 11
          %s1224 = smul.addr %s1223, 8
          %s1225 = scalar_lea.vmem %s3, %s1224
        $region56: #{deep_batch_rnn_forward.11} parent=51 // pred_fallthru
          _
      $region52: #{deep_batch_rnn_forward.11} parent=5 // pred_fallthru
        _
    $region6: #{deep_batch_rnn_forward.11} parent=1 // loop_footer
      %s16 = sadd.s32 1, %s12
    $region7: #{deep_batch_rnn_forward.11} parent=1 // loop_footer_branch
      %11 = sbr.rel target = $region3
    $region8: #{deep_batch_rnn_forward.11} parent=1 // loop_exit
      _
    %1226 = vsyncpa [#allocation5], 1
    %s1227 = scalar_lea.sflag [#allocation5], 1
    %1228 = vsyncpa %s1227, 1

</llo_original>
